<compile_context>
chip_gen: v7x
topology: tpu7x:2x2x1
jax: 0.10.0
libtpu: 0.0.40
codegen_flags: <defaults>
</compile_context>

<pallas_src>
import math

import jax
import jax.numpy as jnp
from jax import lax
from jax.experimental import pallas as pl
from jax.experimental.pallas import tpu as pltpu

# ----- hyperparameters matching ValueModel(vocab_size, d_model=64) -----
VOCAB = 32
D_MODEL = 64
N_HEAD = 8
HEAD_DIM = D_MODEL // N_HEAD
D_FF = 2048                 # nn.TransformerEncoderLayer default dim_feedforward
LN_EPS = 1e-5
B = 2                       # batch size (== attention length, see layout note)
S = 8                       # sequence length (== independent "batch" of the attention)
NT = B * S

assert B == 2, "partner-roll attention formulation assumes exactly 2 rows per group"
assert VOCAB % 8 == 0 and D_MODEL % 8 == 0 and NT % 8 == 0

# ----- row layout of the single packed small-operand block (all offsets % 8 == 0) -----
_R_EMB = 0                          # (VOCAB, D)  embedding table
_R_WQ = _R_EMB + VOCAB              # (D, D)      Wq^T * scale
_R_WK = _R_WQ + D_MODEL             # (D, D)      Wk^T
_R_WV = _R_WK + D_MODEL             # (D, D)      Wv^T
_R_WO = _R_WV + D_MODEL             # (D, D)      Wo^T
_R_MH = _R_WO + D_MODEL             # (D, D)      block-diag head sum/broadcast matrix
_R_VEC = _R_MH + D_MODEL            # (16, D)     packed bias / LN / fc vectors
_N_VEC = 16
BIG_ROWS = _R_VEC + _N_VEC          # 368

(_V_BQ, _V_BK, _V_BV, _V_BO, _V_LN1W, _V_LN1B, _V_B2,
 _V_LN2W, _V_LN2B, _V_WFC, _V_BFC) = range(11)


def _value_model_kernel(tok_ref, big_ref, b1_ref, w1_hbm, w2_hbm, out_ref,
                        w1_buf, w2_buf, dma_sem):
    # ---- kick off the big FFN weight copies first so they overlap the attention work ----
    w1_cp = pltpu.make_async_copy(w1_hbm, w1_buf, dma_sem.at[0])
    w2_cp = pltpu.make_async_copy(w2_hbm, w2_buf, dma_sem.at[1])
    w1_cp.start()
    w2_cp.start()

    def vec(i):                                           # (1, D) static row view
        r = _R_VEC + i
        return big_ref[r:r + 1, :]

    # ---- fused embedding gather: one-hot(tokens) @ table on the MXU ----
    tok = tok_ref[...]                                    # (NT, 1) int32
    iota = lax.broadcasted_iota(jnp.int32, (NT, VOCAB), 1)
    onehot = (tok == iota).astype(jnp.float32)            # (NT, VOCAB)
    x = jnp.dot(onehot, big_ref[_R_EMB:_R_EMB + VOCAB, :],
                preferred_element_type=jnp.float32)       # (NT, D)

    # ---- Q/K/V projections (1/sqrt(head_dim) pre-folded into Wq/bq) ----
    q = jnp.dot(x, big_ref[_R_WQ:_R_WQ + D_MODEL, :],
                preferred_element_type=jnp.float32) + vec(_V_BQ)
    k = jnp.dot(x, big_ref[_R_WK:_R_WK + D_MODEL, :],
                preferred_element_type=jnp.float32) + vec(_V_BK)
    v = jnp.dot(x, big_ref[_R_WV:_R_WV + D_MODEL, :],
                preferred_element_type=jnp.float32) + vec(_V_BV)

    # ---- partner rows: the only other key of each group is S rows away ----
    kp = pltpu.roll(k, shift=S, axis=0)
    vp = pltpu.roll(v, shift=S, axis=0)

    # ---- per-head scores: ONE (2*NT, D)@(D, D) MXU pass against the head-sum matrix ----
    # mhead[d,e] = 1 iff d,e belong to the same head, so (q*k)@mhead is the per-head dot
    # product replicated over that head's lanes; heads never leave their lanes.
    mhead = big_ref[_R_MH:_R_MH + D_MODEL, :]
    s_both = jnp.dot(jnp.concatenate([q * k, q * kp], axis=0), mhead,
                     preferred_element_type=jnp.float32)  # (2*NT, D)
    s_self = s_both[:NT]                                  # tile-aligned sublane splits
    s_other = s_both[NT:]

    # ---- 2-way softmax (pure VPU + EUP) ----
    mx = jnp.maximum(s_self, s_other)
    e1 = jnp.exp(s_self - mx)
    e2 = jnp.exp(s_other - mx)
    inv = pl.reciprocal(e1 + e2, approx=False)
    ctx = (e1 * v + e2 * vp) * inv                        # already head-concatenated

    attn = jnp.dot(ctx, big_ref[_R_WO:_R_WO + D_MODEL, :],
                   preferred_element_type=jnp.float32) + vec(_V_BO)

    # ---- residual + LayerNorm1 ----
    y = x + attn
    mu = jnp.mean(y, axis=-1, keepdims=True)
    var = jnp.mean((y - mu) ** 2, axis=-1, keepdims=True)
    y = (y - mu) * lax.rsqrt(var + LN_EPS) * vec(_V_LN1W) + vec(_V_LN1B)

    # ---- feed-forward; wait on the overlapped weight copies right before use ----
    w1_cp.wait()
    h1 = jnp.maximum(
        jnp.dot(y, w1_buf[...], preferred_element_type=jnp.float32) + b1_ref[...], 0.0)
    w2_cp.wait()
    ff = jnp.dot(h1, w2_buf[...], preferred_element_type=jnp.float32) + vec(_V_B2)

    # ---- residual + LayerNorm2 ----
    z = y + ff
    mu2 = jnp.mean(z, axis=-1, keepdims=True)
    var2 = jnp.mean((z - mu2) ** 2, axis=-1, keepdims=True)
    z = (z - mu2) * lax.rsqrt(var2 + LN_EPS) * vec(_V_LN2W) + vec(_V_LN2B)

    # ---- mean over dim=1 (each S=8-row sublane group) + Linear(64,1), VPU/XLU only ----
    pooled = jnp.concatenate(
        [jnp.sum(z[b * S:(b + 1) * S, :], axis=0, keepdims=True) for b in range(B)],
        axis=0) * (1.0 / S)                               # (B, D)
    wfc = vec(_V_WFC)
    bfc = big_ref[_R_VEC + _V_BFC:_R_VEC + _V_BFC + 1, 0:1]     # (1, 1)
    out_ref[...] = jnp.sum(pooled * wfc, axis=-1, keepdims=True) + bfc


def pack_params(p):
    """One-time packing: split/transpose weights, fold the attention scale, build the
    head-sum matrix, and concatenate every small operand into a single (368,64) block."""
    scale = 1.0 / math.sqrt(HEAD_DIM)
    wq, wk, wv = jnp.split(p["w_qkv"], 3, axis=0)         # PyTorch in_proj layout
    bq, bk, bv = jnp.split(p["b_qkv"], 3)
    head = jnp.arange(D_MODEL) // HEAD_DIM
    mhead = (head[:, None] == head[None, :]).astype(jnp.float32)       # (D, D)

    vecs = jnp.zeros((_N_VEC, D_MODEL), jnp.float32)
    vecs = vecs.at[_V_BQ].set(bq * scale)
    vecs = vecs.at[_V_BK].set(bk)
    vecs = vecs.at[_V_BV].set(bv)
    vecs = vecs.at[_V_BO].set(p["b_o"])
    vecs = vecs.at[_V_LN1W].set(p["ln1_w"])
    vecs = vecs.at[_V_LN1B].set(p["ln1_b"])
    vecs = vecs.at[_V_B2].set(p["b2"])
    vecs = vecs.at[_V_LN2W].set(p["ln2_w"])
    vecs = vecs.at[_V_LN2B].set(p["ln2_b"])
    vecs = vecs.at[_V_WFC].set(p["w_fc"][0])
    vecs = vecs.at[_V_BFC].set(jnp.full((D_MODEL,), p["b_fc"][0], jnp.float32))

    big = jnp.concatenate(
        [p["embedding"].astype(jnp.float32),
         wq.T * scale, wk.T, wv.T, p["w_o"].T, mhead, vecs], axis=0)
    assert big.shape == (BIG_ROWS, D_MODEL)

    return dict(
        big=big,
        b1=p["b1"][None, :],                              # (1, D_FF)
        w1_t=p["w1"].T,                                   # (D, D_FF)  stays in HBM
        w2_t=p["w2"].T,                                   # (D_FF, D)  stays in HBM
    )


def value_model_forward(tokens, pp):
    tok = tokens.reshape(NT, 1)                           # metadata-only flatten
    vmem = pl.BlockSpec(memory_space=pltpu.MemorySpace.VMEM)
    hbm = pl.BlockSpec(memory_space=pl.ANY)               # manual overlapped DMA in-kernel
    return pl.pallas_call(
        _value_model_kernel,
        out_shape=jax.ShapeDtypeStruct((B, 1), jnp.float32),
        in_specs=[vmem, vmem, vmem, hbm, hbm],
        out_specs=vmem,
        scratch_shapes=[
            pltpu.VMEM((D_MODEL, D_FF), jnp.float32),     # w1 staging buffer
            pltpu.VMEM((D_FF, D_MODEL), jnp.float32),     # w2 staging buffer
            pltpu.SemaphoreType.DMA((2,)),
        ],
    )(tok, pp["big"], pp["b1"], pp["w1_t"], pp["w2_t"])


def init_params(key):
    ks = jax.random.split(key, 11)

    def nrm(k, shape, scale=0.05):
        return scale * jax.random.normal(k, shape, dtype=jnp.float32)

    return dict(
        embedding=nrm(ks[0], (VOCAB, D_MODEL), 1.0),
        w_qkv=nrm(ks[1], (3 * D_MODEL, D_MODEL)),
        b_qkv=nrm(ks[2], (3 * D_MODEL,)),
        w_o=nrm(ks[3], (D_MODEL, D_MODEL)),
        b_o=nrm(ks[4], (D_MODEL,)),
        ln1_w=jnp.ones((D_MODEL,), jnp.float32),
        ln1_b=jnp.zeros((D_MODEL,), jnp.float32),
        w1=nrm(ks[5], (D_FF, D_MODEL)),
        b1=nrm(ks[6], (D_FF,)),
        w2=nrm(ks[7], (D_MODEL, D_FF)),
        b2=nrm(ks[8], (D_MODEL,)),
        ln2_w=jnp.ones((D_MODEL,), jnp.float32),
        ln2_b=jnp.zeros((D_MODEL,), jnp.float32),
        w_fc=nrm(ks[9], (1, D_MODEL)),
        b_fc=nrm(ks[10], (1,)),
    )


def reference_forward(tokens, p):
    """Pure-JAX replica of the PyTorch forward (eval mode) for validation."""
    x = p["embedding"][tokens]                            # (B, S, D)
    qkv = x @ p["w_qkv"].T + p["b_qkv"]
    q, k, v = jnp.split(qkv, 3, axis=-1)
    h = lambda t: t.reshape(B, S, N_HEAD, HEAD_DIM)
    qh, kh, vh = h(q), h(k), h(v)
    # attention over dim 0 (batch_first=False semantics)
    scores = jnp.einsum("inhd,jnhd->nhij", qh, kh) / math.sqrt(HEAD_DIM)
    pa = jax.nn.softmax(scores, axis=-1)
    o = jnp.einsum("nhij,jnhd->inhd", pa, vh).reshape(B, S, D_MODEL)
    attn = o @ p["w_o"].T + p["b_o"]

    def ln(t, w, b):
        mu = t.mean(-1, keepdims=True)
        var = ((t - mu) ** 2).mean(-1, keepdims=True)
        return (t - mu) / jnp.sqrt(var + LN_EPS) * w + b

    y = ln(x + attn, p["ln1_w"], p["ln1_b"])
    ff = jnp.maximum(y @ p["w1"].T + p["b1"], 0.0) @ p["w2"].T + p["b2"]
    z = ln(y + ff, p["ln2_w"], p["ln2_b"])
    pooled = z.mean(axis=1)                               # (B, D)
    return pooled @ p["w_fc"].T + p["b_fc"]               # (B, 1)


if __name__ == "__main__":
    key = jax.random.PRNGKey(0)
    kp, kt = jax.random.split(key)
    params = init_params(kp)
    packed = pack_params(params)                          # one-time packing
    tokens = jax.random.randint(kt, (B, S), 0, VOCAB, dtype=jnp.int32)

    fwd = jax.jit(value_model_forward)
    out = jax.block_until_ready(fwd(tokens, packed))
    ref = jax.block_until_ready(reference_forward(tokens, params))

    assert out.shape == (B, 1), out.shape
    assert jnp.allclose(out, ref, atol=1e-4, rtol=1e-4), (out, ref)
    print("KERNEL_OK")
</pallas_src>

<mosaic_0001>
module attributes {stable_mosaic.version = 11 : i64} {
  func.func @_value_model_kernel(%arg0: memref<16x1xi32, #tpu.memory_space<vmem>>, %arg1: memref<368x64xf32, #tpu.memory_space<vmem>>, %arg2: memref<1x2048xf32, #tpu.memory_space<vmem>>, %arg3: memref<64x2048xf32, #tpu.memory_space<any>>, %arg4: memref<2048x64xf32, #tpu.memory_space<any>>, %arg5: memref<2x1xf32, #tpu.memory_space<vmem>>, %arg6: memref<64x2048xf32, #tpu.memory_space<vmem>>, %arg7: memref<2048x64xf32, #tpu.memory_space<vmem>>, %arg8: memref<2x!tpu.dma_semaphore, #tpu.memory_space<semaphore_mem>>) attributes {dimension_semantics = [], scalar_prefetch = 0 : i64, scratch_operands = 3 : i64, tpu.core_type = #tpu.core_type<tc>} {
    %c0_i32 = arith.constant 0 : i32
    %0 = tpu.memref_slice %arg8[%c0_i32] : memref<2x!tpu.dma_semaphore, #tpu.memory_space<semaphore_mem>> -> memref<1x!tpu.dma_semaphore, #tpu.memory_space<semaphore_mem>>
    %1 = tpu.memref_squeeze %0 : memref<1x!tpu.dma_semaphore, #tpu.memory_space<semaphore_mem>> -> memref<!tpu.dma_semaphore, #tpu.memory_space<semaphore_mem>>
    tpu.enqueue_dma source(%arg3 : memref<64x2048xf32, #tpu.memory_space<any>>) target(%arg6 : memref<64x2048xf32, #tpu.memory_space<vmem>>) target_semaphore(%1 : memref<!tpu.dma_semaphore, #tpu.memory_space<semaphore_mem>>)
    %c1_i32 = arith.constant 1 : i32
    %2 = tpu.memref_slice %arg8[%c1_i32] : memref<2x!tpu.dma_semaphore, #tpu.memory_space<semaphore_mem>> -> memref<1x!tpu.dma_semaphore, #tpu.memory_space<semaphore_mem>>
    %3 = tpu.memref_squeeze %2 : memref<1x!tpu.dma_semaphore, #tpu.memory_space<semaphore_mem>> -> memref<!tpu.dma_semaphore, #tpu.memory_space<semaphore_mem>>
    tpu.enqueue_dma source(%arg4 : memref<2048x64xf32, #tpu.memory_space<any>>) target(%arg7 : memref<2048x64xf32, #tpu.memory_space<vmem>>) target_semaphore(%3 : memref<!tpu.dma_semaphore, #tpu.memory_space<semaphore_mem>>)
    %c0 = arith.constant 0 : index
    %c0_0 = arith.constant 0 : index
    %4 = vector.load %arg0[%c0, %c0_0] : memref<16x1xi32, #tpu.memory_space<vmem>>, vector<16x1xi32>
    %5 = tpu.iota {dimensions = array<i32: 1>} : vector<16x32xi32>
    %6 = vector.broadcast %4 : vector<16x1xi32> to vector<16x32xi32>
    %7 = arith.cmpi eq, %6, %5 : vector<16x32xi32>
    %8 = arith.extui %7 : vector<16x32xi1> to vector<16x32xi32>
    %9 = arith.sitofp %8 : vector<16x32xi32> to vector<16x32xf32>
    %c0_1 = arith.constant 0 : index
    %c0_2 = arith.constant 0 : index
    %10 = vector.load %arg1[%c0_1, %c0_2] : memref<368x64xf32, #tpu.memory_space<vmem>>, vector<32x64xf32>
    %cst = arith.constant dense<0.000000e+00> : vector<16x64xf32>
    %11 = tpu.matmul %9, %10, %cst {dimension_numbers = #tpu.dot_dimension_numbers<[1], [0], [0], [1], [0, 0, 1, 1], [], []>} : vector<16x32xf32>, vector<32x64xf32>, vector<16x64xf32> -> vector<16x64xf32>
    %c32 = arith.constant 32 : index
    %c0_3 = arith.constant 0 : index
    %12 = vector.load %arg1[%c32, %c0_3] : memref<368x64xf32, #tpu.memory_space<vmem>>, vector<64x64xf32>
    %cst_4 = arith.constant dense<0.000000e+00> : vector<16x64xf32>
    %13 = tpu.matmul %11, %12, %cst_4 {dimension_numbers = #tpu.dot_dimension_numbers<[1], [0], [0], [1], [0, 0, 1, 1], [], []>} : vector<16x64xf32>, vector<64x64xf32>, vector<16x64xf32> -> vector<16x64xf32>
    %c352 = arith.constant 352 : index
    %c0_5 = arith.constant 0 : index
    %14 = vector.load %arg1[%c352, %c0_5] : memref<368x64xf32, #tpu.memory_space<vmem>>, vector<1x64xf32>
    %15 = vector.broadcast %14 : vector<1x64xf32> to vector<16x64xf32>
    %16 = arith.addf %13, %15 : vector<16x64xf32>
    %c96 = arith.constant 96 : index
    %c0_6 = arith.constant 0 : index
    %17 = vector.load %arg1[%c96, %c0_6] : memref<368x64xf32, #tpu.memory_space<vmem>>, vector<64x64xf32>
    %cst_7 = arith.constant dense<0.000000e+00> : vector<16x64xf32>
    %18 = tpu.matmul %11, %17, %cst_7 {dimension_numbers = #tpu.dot_dimension_numbers<[1], [0], [0], [1], [0, 0, 1, 1], [], []>} : vector<16x64xf32>, vector<64x64xf32>, vector<16x64xf32> -> vector<16x64xf32>
    %c353 = arith.constant 353 : index
    %c0_8 = arith.constant 0 : index
    %19 = vector.load %arg1[%c353, %c0_8] : memref<368x64xf32, #tpu.memory_space<vmem>>, vector<1x64xf32>
    %20 = vector.broadcast %19 : vector<1x64xf32> to vector<16x64xf32>
    %21 = arith.addf %18, %20 : vector<16x64xf32>
    %c160 = arith.constant 160 : index
    %c0_9 = arith.constant 0 : index
    %22 = vector.load %arg1[%c160, %c0_9] : memref<368x64xf32, #tpu.memory_space<vmem>>, vector<64x64xf32>
    %cst_10 = arith.constant dense<0.000000e+00> : vector<16x64xf32>
    %23 = tpu.matmul %11, %22, %cst_10 {dimension_numbers = #tpu.dot_dimension_numbers<[1], [0], [0], [1], [0, 0, 1, 1], [], []>} : vector<16x64xf32>, vector<64x64xf32>, vector<16x64xf32> -> vector<16x64xf32>
    %c354 = arith.constant 354 : index
    %c0_11 = arith.constant 0 : index
    %24 = vector.load %arg1[%c354, %c0_11] : memref<368x64xf32, #tpu.memory_space<vmem>>, vector<1x64xf32>
    %25 = vector.broadcast %24 : vector<1x64xf32> to vector<16x64xf32>
    %26 = arith.addf %23, %25 : vector<16x64xf32>
    %c8_i32 = arith.constant 8 : i32
    %27 = tpu.dynamic_rotate %21 by %c8_i32 dim 0 : vector<16x64xf32>, i32 -> vector<16x64xf32>
    %c8_i32_12 = arith.constant 8 : i32
    %28 = tpu.dynamic_rotate %26 by %c8_i32_12 dim 0 : vector<16x64xf32>, i32 -> vector<16x64xf32>
    %c288 = arith.constant 288 : index
    %c0_13 = arith.constant 0 : index
    %29 = vector.load %arg1[%c288, %c0_13] : memref<368x64xf32, #tpu.memory_space<vmem>>, vector<64x64xf32>
    %30 = arith.mulf %16, %21 : vector<16x64xf32>
    %31 = arith.mulf %16, %27 : vector<16x64xf32>
    %32 = tpu.concatenate %30, %31 in 0 : vector<16x64xf32>, vector<16x64xf32> -> vector<32x64xf32>
    %cst_14 = arith.constant dense<0.000000e+00> : vector<32x64xf32>
    %33 = tpu.matmul %32, %29, %cst_14 {dimension_numbers = #tpu.dot_dimension_numbers<[1], [0], [0], [1], [0, 0, 1, 1], [], []>} : vector<32x64xf32>, vector<64x64xf32>, vector<32x64xf32> -> vector<32x64xf32>
    %34 = vector.extract_strided_slice %33 {offsets = [0, 0], sizes = [16, 64], strides = [1, 1]} : vector<32x64xf32> to vector<16x64xf32>
    %35 = vector.extract_strided_slice %33 {offsets = [16, 0], sizes = [16, 64], strides = [1, 1]} : vector<32x64xf32> to vector<16x64xf32>
    %36 = arith.maximumf %34, %35 : vector<16x64xf32>
    %37 = arith.subf %34, %36 : vector<16x64xf32>
    %38 = math.exp %37 : vector<16x64xf32>
    %39 = arith.subf %35, %36 : vector<16x64xf32>
    %40 = math.exp %39 : vector<16x64xf32>
    %41 = arith.addf %38, %40 : vector<16x64xf32>
    %42 = tpu.reciprocal %41 : vector<16x64xf32> -> vector<16x64xf32>
    %43 = arith.mulf %38, %26 : vector<16x64xf32>
    %44 = arith.mulf %40, %28 : vector<16x64xf32>
    %45 = arith.addf %43, %44 : vector<16x64xf32>
    %46 = arith.mulf %45, %42 : vector<16x64xf32>
    %c224 = arith.constant 224 : index
    %c0_15 = arith.constant 0 : index
    %47 = vector.load %arg1[%c224, %c0_15] : memref<368x64xf32, #tpu.memory_space<vmem>>, vector<64x64xf32>
    %cst_16 = arith.constant dense<0.000000e+00> : vector<16x64xf32>
    %48 = tpu.matmul %46, %47, %cst_16 {dimension_numbers = #tpu.dot_dimension_numbers<[1], [0], [0], [1], [0, 0, 1, 1], [], []>} : vector<16x64xf32>, vector<64x64xf32>, vector<16x64xf32> -> vector<16x64xf32>
    %c355 = arith.constant 355 : index
    %c0_17 = arith.constant 0 : index
    %49 = vector.load %arg1[%c355, %c0_17] : memref<368x64xf32, #tpu.memory_space<vmem>>, vector<1x64xf32>
    %50 = vector.broadcast %49 : vector<1x64xf32> to vector<16x64xf32>
    %51 = arith.addf %48, %50 : vector<16x64xf32>
    %52 = arith.addf %11, %51 : vector<16x64xf32>
    %cst_18 = arith.constant dense<0.000000e+00> : vector<16xf32>
    %53 = vector.multi_reduction <add>, %52, %cst_18 [1] : vector<16x64xf32> to vector<16xf32>
    %54 = vector.shape_cast %53 : vector<16xf32> to vector<16x1xf32>
    %cst_19 = arith.constant 6.400000e+01 : f32
    %55 = vector.broadcast %cst_19 : f32 to vector<16x1xf32>
    %56 = arith.divf %54, %55 : vector<16x1xf32>
    %57 = vector.broadcast %56 : vector<16x1xf32> to vector<16x64xf32>
    %58 = arith.subf %52, %57 : vector<16x64xf32>
    %59 = arith.mulf %58, %58 : vector<16x64xf32>
    %cst_20 = arith.constant dense<0.000000e+00> : vector<16xf32>
    %60 = vector.multi_reduction <add>, %59, %cst_20 [1] : vector<16x64xf32> to vector<16xf32>
    %61 = vector.shape_cast %60 : vector<16xf32> to vector<16x1xf32>
    %cst_21 = arith.constant 6.400000e+01 : f32
    %62 = vector.broadcast %cst_21 : f32 to vector<16x1xf32>
    %63 = arith.divf %61, %62 : vector<16x1xf32>
    %64 = vector.broadcast %56 : vector<16x1xf32> to vector<16x64xf32>
    %65 = arith.subf %52, %64 : vector<16x64xf32>
    %cst_22 = arith.constant 9.99999974E-6 : f32
    %66 = vector.broadcast %cst_22 : f32 to vector<16x1xf32>
    %67 = arith.addf %63, %66 : vector<16x1xf32>
    %68 = math.rsqrt %67 : vector<16x1xf32>
    %69 = vector.broadcast %68 : vector<16x1xf32> to vector<16x64xf32>
    %70 = arith.mulf %65, %69 : vector<16x64xf32>
    %c356 = arith.constant 356 : index
    %c0_23 = arith.constant 0 : index
    %71 = vector.load %arg1[%c356, %c0_23] : memref<368x64xf32, #tpu.memory_space<vmem>>, vector<1x64xf32>
    %72 = vector.broadcast %71 : vector<1x64xf32> to vector<16x64xf32>
    %73 = arith.mulf %70, %72 : vector<16x64xf32>
    %c357 = arith.constant 357 : index
    %c0_24 = arith.constant 0 : index
    %74 = vector.load %arg1[%c357, %c0_24] : memref<368x64xf32, #tpu.memory_space<vmem>>, vector<1x64xf32>
    %75 = vector.broadcast %74 : vector<1x64xf32> to vector<16x64xf32>
    %76 = arith.addf %73, %75 : vector<16x64xf32>
    %c0_i32_25 = arith.constant 0 : i32
    %77 = tpu.memref_slice %arg8[%c0_i32_25] : memref<2x!tpu.dma_semaphore, #tpu.memory_space<semaphore_mem>> -> memref<1x!tpu.dma_semaphore, #tpu.memory_space<semaphore_mem>>
    %78 = tpu.memref_squeeze %77 : memref<1x!tpu.dma_semaphore, #tpu.memory_space<semaphore_mem>> -> memref<!tpu.dma_semaphore, #tpu.memory_space<semaphore_mem>>
    tpu.wait_dma2 semaphore(%78 : memref<!tpu.dma_semaphore, #tpu.memory_space<semaphore_mem>>) src(%arg3 : memref<64x2048xf32, #tpu.memory_space<any>>) dst(%arg6 : memref<64x2048xf32, #tpu.memory_space<vmem>>)
    %c0_26 = arith.constant 0 : index
    %c0_27 = arith.constant 0 : index
    %79 = vector.load %arg6[%c0_26, %c0_27] : memref<64x2048xf32, #tpu.memory_space<vmem>>, vector<64x2048xf32>
    %cst_28 = arith.constant dense<0.000000e+00> : vector<16x2048xf32>
    %80 = tpu.matmul %76, %79, %cst_28 {dimension_numbers = #tpu.dot_dimension_numbers<[1], [0], [0], [1], [0, 0, 1, 1], [], []>} : vector<16x64xf32>, vector<64x2048xf32>, vector<16x2048xf32> -> vector<16x2048xf32>
    %c0_29 = arith.constant 0 : index
    %c0_30 = arith.constant 0 : index
    %81 = vector.load %arg2[%c0_29, %c0_30] : memref<1x2048xf32, #tpu.memory_space<vmem>>, vector<1x2048xf32>
    %82 = vector.broadcast %81 : vector<1x2048xf32> to vector<16x2048xf32>
    %83 = arith.addf %80, %82 : vector<16x2048xf32>
    %cst_31 = arith.constant 0.000000e+00 : f32
    %84 = vector.broadcast %cst_31 : f32 to vector<16x2048xf32>
    %85 = arith.maximumf %83, %84 : vector<16x2048xf32>
    %c1_i32_32 = arith.constant 1 : i32
    %86 = tpu.memref_slice %arg8[%c1_i32_32] : memref<2x!tpu.dma_semaphore, #tpu.memory_space<semaphore_mem>> -> memref<1x!tpu.dma_semaphore, #tpu.memory_space<semaphore_mem>>
    %87 = tpu.memref_squeeze %86 : memref<1x!tpu.dma_semaphore, #tpu.memory_space<semaphore_mem>> -> memref<!tpu.dma_semaphore, #tpu.memory_space<semaphore_mem>>
    tpu.wait_dma2 semaphore(%87 : memref<!tpu.dma_semaphore, #tpu.memory_space<semaphore_mem>>) src(%arg4 : memref<2048x64xf32, #tpu.memory_space<any>>) dst(%arg7 : memref<2048x64xf32, #tpu.memory_space<vmem>>)
    %c0_33 = arith.constant 0 : index
    %c0_34 = arith.constant 0 : index
    %88 = vector.load %arg7[%c0_33, %c0_34] : memref<2048x64xf32, #tpu.memory_space<vmem>>, vector<2048x64xf32>
    %cst_35 = arith.constant dense<0.000000e+00> : vector<16x64xf32>
    %89 = tpu.matmul %85, %88, %cst_35 {dimension_numbers = #tpu.dot_dimension_numbers<[1], [0], [0], [1], [0, 0, 1, 1], [], []>} : vector<16x2048xf32>, vector<2048x64xf32>, vector<16x64xf32> -> vector<16x64xf32>
    %c358 = arith.constant 358 : index
    %c0_36 = arith.constant 0 : index
    %90 = vector.load %arg1[%c358, %c0_36] : memref<368x64xf32, #tpu.memory_space<vmem>>, vector<1x64xf32>
    %91 = vector.broadcast %90 : vector<1x64xf32> to vector<16x64xf32>
    %92 = arith.addf %89, %91 : vector<16x64xf32>
    %93 = arith.addf %76, %92 : vector<16x64xf32>
    %cst_37 = arith.constant dense<0.000000e+00> : vector<16xf32>
    %94 = vector.multi_reduction <add>, %93, %cst_37 [1] : vector<16x64xf32> to vector<16xf32>
    %95 = vector.shape_cast %94 : vector<16xf32> to vector<16x1xf32>
    %cst_38 = arith.constant 6.400000e+01 : f32
    %96 = vector.broadcast %cst_38 : f32 to vector<16x1xf32>
    %97 = arith.divf %95, %96 : vector<16x1xf32>
    %98 = vector.broadcast %97 : vector<16x1xf32> to vector<16x64xf32>
    %99 = arith.subf %93, %98 : vector<16x64xf32>
    %100 = arith.mulf %99, %99 : vector<16x64xf32>
    %cst_39 = arith.constant dense<0.000000e+00> : vector<16xf32>
    %101 = vector.multi_reduction <add>, %100, %cst_39 [1] : vector<16x64xf32> to vector<16xf32>
    %102 = vector.shape_cast %101 : vector<16xf32> to vector<16x1xf32>
    %cst_40 = arith.constant 6.400000e+01 : f32
    %103 = vector.broadcast %cst_40 : f32 to vector<16x1xf32>
    %104 = arith.divf %102, %103 : vector<16x1xf32>
    %105 = vector.broadcast %97 : vector<16x1xf32> to vector<16x64xf32>
    %106 = arith.subf %93, %105 : vector<16x64xf32>
    %cst_41 = arith.constant 9.99999974E-6 : f32
    %107 = vector.broadcast %cst_41 : f32 to vector<16x1xf32>
    %108 = arith.addf %104, %107 : vector<16x1xf32>
    %109 = math.rsqrt %108 : vector<16x1xf32>
    %110 = vector.broadcast %109 : vector<16x1xf32> to vector<16x64xf32>
    %111 = arith.mulf %106, %110 : vector<16x64xf32>
    %c359 = arith.constant 359 : index
    %c0_42 = arith.constant 0 : index
    %112 = vector.load %arg1[%c359, %c0_42] : memref<368x64xf32, #tpu.memory_space<vmem>>, vector<1x64xf32>
    %113 = vector.broadcast %112 : vector<1x64xf32> to vector<16x64xf32>
    %114 = arith.mulf %111, %113 : vector<16x64xf32>
    %c360 = arith.constant 360 : index
    %c0_43 = arith.constant 0 : index
    %115 = vector.load %arg1[%c360, %c0_43] : memref<368x64xf32, #tpu.memory_space<vmem>>, vector<1x64xf32>
    %116 = vector.broadcast %115 : vector<1x64xf32> to vector<16x64xf32>
    %117 = arith.addf %114, %116 : vector<16x64xf32>
    %118 = vector.extract_strided_slice %117 {offsets = [0, 0], sizes = [8, 64], strides = [1, 1]} : vector<16x64xf32> to vector<8x64xf32>
    %cst_44 = arith.constant dense<0.000000e+00> : vector<64xf32>
    %119 = vector.multi_reduction <add>, %118, %cst_44 [0] : vector<8x64xf32> to vector<64xf32>
    %120 = vector.shape_cast %119 : vector<64xf32> to vector<1x64xf32>
    %121 = vector.extract_strided_slice %117 {offsets = [8, 0], sizes = [8, 64], strides = [1, 1]} : vector<16x64xf32> to vector<8x64xf32>
    %cst_45 = arith.constant dense<0.000000e+00> : vector<64xf32>
    %122 = vector.multi_reduction <add>, %121, %cst_45 [0] : vector<8x64xf32> to vector<64xf32>
    %123 = vector.shape_cast %122 : vector<64xf32> to vector<1x64xf32>
    %124 = tpu.concatenate %120, %123 in 0 : vector<1x64xf32>, vector<1x64xf32> -> vector<2x64xf32>
    %cst_46 = arith.constant 1.250000e-01 : f32
    %125 = vector.broadcast %cst_46 : f32 to vector<2x64xf32>
    %126 = arith.mulf %124, %125 : vector<2x64xf32>
    %c361 = arith.constant 361 : index
    %c0_47 = arith.constant 0 : index
    %127 = vector.load %arg1[%c361, %c0_47] : memref<368x64xf32, #tpu.memory_space<vmem>>, vector<1x64xf32>
    %c362 = arith.constant 362 : index
    %c0_48 = arith.constant 0 : index
    %128 = vector.load %arg1[%c362, %c0_48] : memref<368x64xf32, #tpu.memory_space<vmem>>, vector<1x1xf32>
    %129 = vector.broadcast %127 : vector<1x64xf32> to vector<2x64xf32>
    %130 = arith.mulf %126, %129 : vector<2x64xf32>
    %cst_49 = arith.constant dense<0.000000e+00> : vector<2xf32>
    %131 = vector.multi_reduction <add>, %130, %cst_49 [1] : vector<2x64xf32> to vector<2xf32>
    %132 = vector.shape_cast %131 : vector<2xf32> to vector<2x1xf32>
    %133 = vector.broadcast %128 : vector<1x1xf32> to vector<2x1xf32>
    %134 = arith.addf %132, %133 : vector<2x1xf32>
    %c0_50 = arith.constant 0 : index
    %c0_51 = arith.constant 0 : index
    %135 = vector.load %arg5[%c0_50, %c0_51] : memref<2x1xf32, #tpu.memory_space<vmem>>, vector<2x1xf32>
    tpu.vector_store %arg5[%c0_50, %c0_51], %134 {strides = array<i32>} : memref<2x1xf32, #tpu.memory_space<vmem>>, vector<2x1xf32>,
    return
  }
}

</mosaic_0001>

<llo_original>
// kernel: value_model_forward.1
$region0: #{value_model_forward.1}
  #allocation0 [shape = 'u32[]', space=smem, size = 0x4, offset = 0x4, fixed_abs, tag = 'smem constant byte address 0x4 - core index']
  #allocation1 [shape = 'u32[144,128]{1,0:T(1,128)}', space=vmem, size = 0x12000, scoped, tag = 'internal scratch']
  #allocation2 [shape = 'f32[64,2048]{1,0:T(8,128)}', space=vmem, size = 0x80000, scoped, tag = 'scratch operand']
  #allocation3 [shape = 'f32[2048,64]{1,0:T(8,128)}', space=vmem, size = 0x100000, scoped, tag = 'scratch operand']
  #allocation4 [shape = 's32[2]{0}', space=sflag, size = 0x8, scoped, tag = 'scratch operand']
  #allocation5 [shape = 's32[]', space=sflag, size = 0x4, offset = 0, fixed_abs, tag = 'sflag constant byte address 0x0 - dummy sync flag']
  #allocation6 [shape = 's32[]', space=sflag, size = 0x4, offset = 0, fixed_abs, tag = 'sflag constant byte address 0x0 - dummy sync flag']
  %s0 = inlined_call_operand.vmem [shape: s32[16,1], index: 0, kind: input, shape index: {}]
  %s1 = inlined_call_operand.vmem [shape: f32[368,64], index: 1, kind: input, shape index: {}]
  %s2 = inlined_call_operand.vmem [shape: f32[1,2048], index: 2, kind: input, shape index: {}]
  %s3 = inlined_call_operand.vmem [shape: f32[64,2048], index: 3, kind: input, shape index: {}]
  %s4 = inlined_call_operand.vmem [shape: f32[2048,64], index: 4, kind: input, shape index: {}]
  %s5 = inlined_call_operand.vmem [shape: f32[2,1], index: 5, kind: output, shape index: {}]
  %s6 = sld [smem:[#allocation0]]
  $region90: #{value_model_forward.1} parent=0
    _
  %s8 = ssub.s32 1, %s6
  %s9 = scalar_select 0, %s8, %s6
  // Predicated region
  $region2: #{value_model_forward.1} parent=0 // pred_check
    _
  $region3: #{value_model_forward.1} parent=0 // pred_check_branch
    %11 = sbr.rel (0) target = $region5
  $region4: #{value_model_forward.1} parent=0 // pred_region
    _
  $region5: #{value_model_forward.1} parent=0 // pred_fallthru
    _
  // Predicated region
  $region6: #{value_model_forward.1} parent=0 // pred_check
    _
  $region7: #{value_model_forward.1} parent=0 // pred_check_branch
    %13 = sbr.rel (0) target = $region9
  $region8: #{value_model_forward.1} parent=0 // pred_region
    _
  $region9: #{value_model_forward.1} parent=0 // pred_fallthru
    _
  // Predicated region
  $region10: #{value_model_forward.1} parent=0 // pred_check
    _
  $region11: #{value_model_forward.1} parent=0 // pred_check_branch
    %15 = sbr.rel (0) target = $region13
  $region12: #{value_model_forward.1} parent=0 // pred_region
    _
  $region13: #{value_model_forward.1} parent=0 // pred_fallthru
    _
  %p17 = scmp.lt.u32.totalorder 1024, 8
  %p18 = pneg %p17
  // Predicated region
  $region14: #{value_model_forward.1} parent=0 // pred_check
    _
  $region15: #{value_model_forward.1} parent=0 // pred_check_branch
    %20 = sbr.rel (%p17) target = $region17
  $region16: #{value_model_forward.1} parent=0 // pred_region
    %s35 = sand.u32 1024, 7
    %p36 = scmp.eq.s32.totalorder %s35, 0
    // Predicated region
    $region29: #{value_model_forward.1} parent=16 // pred_check
      %p37 = pneg %p36
    $region30: #{value_model_forward.1} parent=16 // pred_check_branch
      %39 = sbr.rel (%p37) target = $region32
    $region31: #{value_model_forward.1} parent=16 // pred_region
      loop: start=0, step=1, limit=1
      $region33: #{value_model_forward.1} parent=31 // loop_pre_header
        _
      $region34: #{value_model_forward.1} parent=31 // loop_header
        %s41 = sphi 0, %s45
        %p42 = scmp.ge.s32.totalorder %s41, 1
        %s46 = sphi %s3, %s3
        %s47 = sphi [#allocation2], [#allocation2]
      $region35: #{value_model_forward.1} parent=31 // loop_header_branch
        %44 = sbr.rel (%p42) target = $region39
      $region36: #{value_model_forward.1} parent=31 // loop_body
        %v48 = vld [vmem:[%s46] sm:$0xff]
        %49 = vst [vmem:[%s47] sm:$0xff] %v48
        %v50 = vld [vmem:[%s46 + $0x8] sm:$0xff]
        %51 = vst [vmem:[%s47 + $0x8] sm:$0xff] %v50
        %v52 = vld [vmem:[%s46 + $0x10] sm:$0xff]
        %53 = vst [vmem:[%s47 + $0x10] sm:$0xff] %v52
        %v54 = vld [vmem:[%s46 + $0x18] sm:$0xff]
        %55 = vst [vmem:[%s47 + $0x18] sm:$0xff] %v54
        %v56 = vld [vmem:[%s46 + $0x20] sm:$0xff]
        %57 = vst [vmem:[%s47 + $0x20] sm:$0xff] %v56
        %v58 = vld [vmem:[%s46 + $0x28] sm:$0xff]
        %59 = vst [vmem:[%s47 + $0x28] sm:$0xff] %v58
        %v60 = vld [vmem:[%s46 + $0x30] sm:$0xff]
        %61 = vst [vmem:[%s47 + $0x30] sm:$0xff] %v60
        %v62 = vld [vmem:[%s46 + $0x38] sm:$0xff]
        %63 = vst [vmem:[%s47 + $0x38] sm:$0xff] %v62
        %v64 = vld [vmem:[%s46 + $0x40] sm:$0xff]
        %65 = vst [vmem:[%s47 + $0x40] sm:$0xff] %v64
        %v66 = vld [vmem:[%s46 + $0x48] sm:$0xff]
        %67 = vst [vmem:[%s47 + $0x48] sm:$0xff] %v66
        %v68 = vld [vmem:[%s46 + $0x50] sm:$0xff]
        %69 = vst [vmem:[%s47 + $0x50] sm:$0xff] %v68
        %v70 = vld [vmem:[%s46 + $0x58] sm:$0xff]
        %71 = vst [vmem:[%s47 + $0x58] sm:$0xff] %v70
        %v72 = vld [vmem:[%s46 + $0x60] sm:$0xff]
        %73 = vst [vmem:[%s47 + $0x60] sm:$0xff] %v72
        %v74 = vld [vmem:[%s46 + $0x68] sm:$0xff]
        %75 = vst [vmem:[%s47 + $0x68] sm:$0xff] %v74
        %v76 = vld [vmem:[%s46 + $0x70] sm:$0xff]
        %77 = vst [vmem:[%s47 + $0x70] sm:$0xff] %v76
        %v78 = vld [vmem:[%s46 + $0x78] sm:$0xff]
        %79 = vst [vmem:[%s47 + $0x78] sm:$0xff] %v78
        %v80 = vld [vmem:[%s46 + $0x80] sm:$0xff]
        %81 = vst [vmem:[%s47 + $0x80] sm:$0xff] %v80
        %v82 = vld [vmem:[%s46 + $0x88] sm:$0xff]
        %83 = vst [vmem:[%s47 + $0x88] sm:$0xff] %v82
        %v84 = vld [vmem:[%s46 + $0x90] sm:$0xff]
        %85 = vst [vmem:[%s47 + $0x90] sm:$0xff] %v84
        %v86 = vld [vmem:[%s46 + $0x98] sm:$0xff]
        %87 = vst [vmem:[%s47 + $0x98] sm:$0xff] %v86
        %v88 = vld [vmem:[%s46 + $0xa0] sm:$0xff]
        %89 = vst [vmem:[%s47 + $0xa0] sm:$0xff] %v88
        %v90 = vld [vmem:[%s46 + $0xa8] sm:$0xff]
        %91 = vst [vmem:[%s47 + $0xa8] sm:$0xff] %v90
        %v92 = vld [vmem:[%s46 + $0xb0] sm:$0xff]
        %93 = vst [vmem:[%s47 + $0xb0] sm:$0xff] %v92
        %v94 = vld [vmem:[%s46 + $0xb8] sm:$0xff]
        %95 = vst [vmem:[%s47 + $0xb8] sm:$0xff] %v94
        %v96 = vld [vmem:[%s46 + $0xc0] sm:$0xff]
        %97 = vst [vmem:[%s47 + $0xc0] sm:$0xff] %v96
        %v98 = vld [vmem:[%s46 + $0xc8] sm:$0xff]
        %99 = vst [vmem:[%s47 + $0xc8] sm:$0xff] %v98
        %v100 = vld [vmem:[%s46 + $0xd0] sm:$0xff]
        %101 = vst [vmem:[%s47 + $0xd0] sm:$0xff] %v100
        %v102 = vld [vmem:[%s46 + $0xd8] sm:$0xff]
        %103 = vst [vmem:[%s47 + $0xd8] sm:$0xff] %v102
        %v104 = vld [vmem:[%s46 + $0xe0] sm:$0xff]
        %105 = vst [vmem:[%s47 + $0xe0] sm:$0xff] %v104
        %v106 = vld [vmem:[%s46 + $0xe8] sm:$0xff]
        %107 = vst [vmem:[%s47 + $0xe8] sm:$0xff] %v106
        %v108 = vld [vmem:[%s46 + $0xf0] sm:$0xff]
        %109 = vst [vmem:[%s47 + $0xf0] sm:$0xff] %v108
        %v110 = vld [vmem:[%s46 + $0xf8] sm:$0xff]
        %111 = vst [vmem:[%s47 + $0xf8] sm:$0xff] %v110
        %v112 = vld [vmem:[%s46 + $0x100] sm:$0xff]
        %113 = vst [vmem:[%s47 + $0x100] sm:$0xff] %v112
        %v114 = vld [vmem:[%s46 + $0x108] sm:$0xff]
        %115 = vst [vmem:[%s47 + $0x108] sm:$0xff] %v114
        %v116 = vld [vmem:[%s46 + $0x110] sm:$0xff]
        %117 = vst [vmem:[%s47 + $0x110] sm:$0xff] %v116
        %v118 = vld [vmem:[%s46 + $0x118] sm:$0xff]
        %119 = vst [vmem:[%s47 + $0x118] sm:$0xff] %v118
        %v120 = vld [vmem:[%s46 + $0x120] sm:$0xff]
        %121 = vst [vmem:[%s47 + $0x120] sm:$0xff] %v120
        %v122 = vld [vmem:[%s46 + $0x128] sm:$0xff]
        %123 = vst [vmem:[%s47 + $0x128] sm:$0xff] %v122
        %v124 = vld [vmem:[%s46 + $0x130] sm:$0xff]
        %125 = vst [vmem:[%s47 + $0x130] sm:$0xff] %v124
        %v126 = vld [vmem:[%s46 + $0x138] sm:$0xff]
        %127 = vst [vmem:[%s47 + $0x138] sm:$0xff] %v126
        %v128 = vld [vmem:[%s46 + $0x140] sm:$0xff]
        %129 = vst [vmem:[%s47 + $0x140] sm:$0xff] %v128
        %v130 = vld [vmem:[%s46 + $0x148] sm:$0xff]
        %131 = vst [vmem:[%s47 + $0x148] sm:$0xff] %v130
        %v132 = vld [vmem:[%s46 + $0x150] sm:$0xff]
        %133 = vst [vmem:[%s47 + $0x150] sm:$0xff] %v132
        %v134 = vld [vmem:[%s46 + $0x158] sm:$0xff]
        %135 = vst [vmem:[%s47 + $0x158] sm:$0xff] %v134
        %v136 = vld [vmem:[%s46 + $0x160] sm:$0xff]
        %137 = vst [vmem:[%s47 + $0x160] sm:$0xff] %v136
        %v138 = vld [vmem:[%s46 + $0x168] sm:$0xff]
        %139 = vst [vmem:[%s47 + $0x168] sm:$0xff] %v138
        %v140 = vld [vmem:[%s46 + $0x170] sm:$0xff]
        %141 = vst [vmem:[%s47 + $0x170] sm:$0xff] %v140
        %v142 = vld [vmem:[%s46 + $0x178] sm:$0xff]
        %143 = vst [vmem:[%s47 + $0x178] sm:$0xff] %v142
        %v144 = vld [vmem:[%s46 + $0x180] sm:$0xff]
        %145 = vst [vmem:[%s47 + $0x180] sm:$0xff] %v144
        %v146 = vld [vmem:[%s46 + $0x188] sm:$0xff]
        %147 = vst [vmem:[%s47 + $0x188] sm:$0xff] %v146
        %v148 = vld [vmem:[%s46 + $0x190] sm:$0xff]
        %149 = vst [vmem:[%s47 + $0x190] sm:$0xff] %v148
        %v150 = vld [vmem:[%s46 + $0x198] sm:$0xff]
        %151 = vst [vmem:[%s47 + $0x198] sm:$0xff] %v150
        %v152 = vld [vmem:[%s46 + $0x1a0] sm:$0xff]
        %153 = vst [vmem:[%s47 + $0x1a0] sm:$0xff] %v152
        %v154 = vld [vmem:[%s46 + $0x1a8] sm:$0xff]
        %155 = vst [vmem:[%s47 + $0x1a8] sm:$0xff] %v154
        %v156 = vld [vmem:[%s46 + $0x1b0] sm:$0xff]
        %157 = vst [vmem:[%s47 + $0x1b0] sm:$0xff] %v156
        %v158 = vld [vmem:[%s46 + $0x1b8] sm:$0xff]
        %159 = vst [vmem:[%s47 + $0x1b8] sm:$0xff] %v158
        %v160 = vld [vmem:[%s46 + $0x1c0] sm:$0xff]
        %161 = vst [vmem:[%s47 + $0x1c0] sm:$0xff] %v160
        %v162 = vld [vmem:[%s46 + $0x1c8] sm:$0xff]
        %163 = vst [vmem:[%s47 + $0x1c8] sm:$0xff] %v162
        %v164 = vld [vmem:[%s46 + $0x1d0] sm:$0xff]
        %165 = vst [vmem:[%s47 + $0x1d0] sm:$0xff] %v164
        %v166 = vld [vmem:[%s46 + $0x1d8] sm:$0xff]
        %167 = vst [vmem:[%s47 + $0x1d8] sm:$0xff] %v166
        %v168 = vld [vmem:[%s46 + $0x1e0] sm:$0xff]
        %169 = vst [vmem:[%s47 + $0x1e0] sm:$0xff] %v168
        %v170 = vld [vmem:[%s46 + $0x1e8] sm:$0xff]
        %171 = vst [vmem:[%s47 + $0x1e8] sm:$0xff] %v170
        %v172 = vld [vmem:[%s46 + $0x1f0] sm:$0xff]
        %173 = vst [vmem:[%s47 + $0x1f0] sm:$0xff] %v172
        %v174 = vld [vmem:[%s46 + $0x1f8] sm:$0xff]
        %175 = vst [vmem:[%s47 + $0x1f8] sm:$0xff] %v174
        %v176 = vld [vmem:[%s46 + $0x200] sm:$0xff]
        %177 = vst [vmem:[%s47 + $0x200] sm:$0xff] %v176
        %v178 = vld [vmem:[%s46 + $0x208] sm:$0xff]
        %179 = vst [vmem:[%s47 + $0x208] sm:$0xff] %v178
        %v180 = vld [vmem:[%s46 + $0x210] sm:$0xff]
        %181 = vst [vmem:[%s47 + $0x210] sm:$0xff] %v180
        %v182 = vld [vmem:[%s46 + $0x218] sm:$0xff]
        %183 = vst [vmem:[%s47 + $0x218] sm:$0xff] %v182
        %v184 = vld [vmem:[%s46 + $0x220] sm:$0xff]
        %185 = vst [vmem:[%s47 + $0x220] sm:$0xff] %v184
        %v186 = vld [vmem:[%s46 + $0x228] sm:$0xff]
        %187 = vst [vmem:[%s47 + $0x228] sm:$0xff] %v186
        %v188 = vld [vmem:[%s46 + $0x230] sm:$0xff]
        %189 = vst [vmem:[%s47 + $0x230] sm:$0xff] %v188
        %v190 = vld [vmem:[%s46 + $0x238] sm:$0xff]
        %191 = vst [vmem:[%s47 + $0x238] sm:$0xff] %v190
        %v192 = vld [vmem:[%s46 + $0x240] sm:$0xff]
        %193 = vst [vmem:[%s47 + $0x240] sm:$0xff] %v192
        %v194 = vld [vmem:[%s46 + $0x248] sm:$0xff]
        %195 = vst [vmem:[%s47 + $0x248] sm:$0xff] %v194
        %v196 = vld [vmem:[%s46 + $0x250] sm:$0xff]
        %197 = vst [vmem:[%s47 + $0x250] sm:$0xff] %v196
        %v198 = vld [vmem:[%s46 + $0x258] sm:$0xff]
        %199 = vst [vmem:[%s47 + $0x258] sm:$0xff] %v198
        %v200 = vld [vmem:[%s46 + $0x260] sm:$0xff]
        %201 = vst [vmem:[%s47 + $0x260] sm:$0xff] %v200
        %v202 = vld [vmem:[%s46 + $0x268] sm:$0xff]
        %203 = vst [vmem:[%s47 + $0x268] sm:$0xff] %v202
        %v204 = vld [vmem:[%s46 + $0x270] sm:$0xff]
        %205 = vst [vmem:[%s47 + $0x270] sm:$0xff] %v204
        %v206 = vld [vmem:[%s46 + $0x278] sm:$0xff]
        %207 = vst [vmem:[%s47 + $0x278] sm:$0xff] %v206
        %v208 = vld [vmem:[%s46 + $0x280] sm:$0xff]
        %209 = vst [vmem:[%s47 + $0x280] sm:$0xff] %v208
        %v210 = vld [vmem:[%s46 + $0x288] sm:$0xff]
        %211 = vst [vmem:[%s47 + $0x288] sm:$0xff] %v210
        %v212 = vld [vmem:[%s46 + $0x290] sm:$0xff]
        %213 = vst [vmem:[%s47 + $0x290] sm:$0xff] %v212
        %v214 = vld [vmem:[%s46 + $0x298] sm:$0xff]
        %215 = vst [vmem:[%s47 + $0x298] sm:$0xff] %v214
        %v216 = vld [vmem:[%s46 + $0x2a0] sm:$0xff]
        %217 = vst [vmem:[%s47 + $0x2a0] sm:$0xff] %v216
        %v218 = vld [vmem:[%s46 + $0x2a8] sm:$0xff]
        %219 = vst [vmem:[%s47 + $0x2a8] sm:$0xff] %v218
        %v220 = vld [vmem:[%s46 + $0x2b0] sm:$0xff]
        %221 = vst [vmem:[%s47 + $0x2b0] sm:$0xff] %v220
        %v222 = vld [vmem:[%s46 + $0x2b8] sm:$0xff]
        %223 = vst [vmem:[%s47 + $0x2b8] sm:$0xff] %v222
        %v224 = vld [vmem:[%s46 + $0x2c0] sm:$0xff]
        %225 = vst [vmem:[%s47 + $0x2c0] sm:$0xff] %v224
        %v226 = vld [vmem:[%s46 + $0x2c8] sm:$0xff]
        %227 = vst [vmem:[%s47 + $0x2c8] sm:$0xff] %v226
        %v228 = vld [vmem:[%s46 + $0x2d0] sm:$0xff]
        %229 = vst [vmem:[%s47 + $0x2d0] sm:$0xff] %v228
        %v230 = vld [vmem:[%s46 + $0x2d8] sm:$0xff]
        %231 = vst [vmem:[%s47 + $0x2d8] sm:$0xff] %v230
        %v232 = vld [vmem:[%s46 + $0x2e0] sm:$0xff]
        %233 = vst [vmem:[%s47 + $0x2e0] sm:$0xff] %v232
        %v234 = vld [vmem:[%s46 + $0x2e8] sm:$0xff]
        %235 = vst [vmem:[%s47 + $0x2e8] sm:$0xff] %v234
        %v236 = vld [vmem:[%s46 + $0x2f0] sm:$0xff]
        %237 = vst [vmem:[%s47 + $0x2f0] sm:$0xff] %v236
        %v238 = vld [vmem:[%s46 + $0x2f8] sm:$0xff]
        %239 = vst [vmem:[%s47 + $0x2f8] sm:$0xff] %v238
        %v240 = vld [vmem:[%s46 + $0x300] sm:$0xff]
        %241 = vst [vmem:[%s47 + $0x300] sm:$0xff] %v240
        %v242 = vld [vmem:[%s46 + $0x308] sm:$0xff]
        %243 = vst [vmem:[%s47 + $0x308] sm:$0xff] %v242
        %v244 = vld [vmem:[%s46 + $0x310] sm:$0xff]
        %245 = vst [vmem:[%s47 + $0x310] sm:$0xff] %v244
        %v246 = vld [vmem:[%s46 + $0x318] sm:$0xff]
        %247 = vst [vmem:[%s47 + $0x318] sm:$0xff] %v246
        %v248 = vld [vmem:[%s46 + $0x320] sm:$0xff]
        %249 = vst [vmem:[%s47 + $0x320] sm:$0xff] %v248
        %v250 = vld [vmem:[%s46 + $0x328] sm:$0xff]
        %251 = vst [vmem:[%s47 + $0x328] sm:$0xff] %v250
        %v252 = vld [vmem:[%s46 + $0x330] sm:$0xff]
        %253 = vst [vmem:[%s47 + $0x330] sm:$0xff] %v252
        %v254 = vld [vmem:[%s46 + $0x338] sm:$0xff]
        %255 = vst [vmem:[%s47 + $0x338] sm:$0xff] %v254
        %v256 = vld [vmem:[%s46 + $0x340] sm:$0xff]
        %257 = vst [vmem:[%s47 + $0x340] sm:$0xff] %v256
        %v258 = vld [vmem:[%s46 + $0x348] sm:$0xff]
        %259 = vst [vmem:[%s47 + $0x348] sm:$0xff] %v258
        %v260 = vld [vmem:[%s46 + $0x350] sm:$0xff]
        %261 = vst [vmem:[%s47 + $0x350] sm:$0xff] %v260
        %v262 = vld [vmem:[%s46 + $0x358] sm:$0xff]
        %263 = vst [vmem:[%s47 + $0x358] sm:$0xff] %v262
        %v264 = vld [vmem:[%s46 + $0x360] sm:$0xff]
        %265 = vst [vmem:[%s47 + $0x360] sm:$0xff] %v264
        %v266 = vld [vmem:[%s46 + $0x368] sm:$0xff]
        %267 = vst [vmem:[%s47 + $0x368] sm:$0xff] %v266
        %v268 = vld [vmem:[%s46 + $0x370] sm:$0xff]
        %269 = vst [vmem:[%s47 + $0x370] sm:$0xff] %v268
        %v270 = vld [vmem:[%s46 + $0x378] sm:$0xff]
        %271 = vst [vmem:[%s47 + $0x378] sm:$0xff] %v270
        %v272 = vld [vmem:[%s46 + $0x380] sm:$0xff]
        %273 = vst [vmem:[%s47 + $0x380] sm:$0xff] %v272
        %v274 = vld [vmem:[%s46 + $0x388] sm:$0xff]
        %275 = vst [vmem:[%s47 + $0x388] sm:$0xff] %v274
        %v276 = vld [vmem:[%s46 + $0x390] sm:$0xff]
        %277 = vst [vmem:[%s47 + $0x390] sm:$0xff] %v276
        %v278 = vld [vmem:[%s46 + $0x398] sm:$0xff]
        %279 = vst [vmem:[%s47 + $0x398] sm:$0xff] %v278
        %v280 = vld [vmem:[%s46 + $0x3a0] sm:$0xff]
        %281 = vst [vmem:[%s47 + $0x3a0] sm:$0xff] %v280
        %v282 = vld [vmem:[%s46 + $0x3a8] sm:$0xff]
        %283 = vst [vmem:[%s47 + $0x3a8] sm:$0xff] %v282
        %v284 = vld [vmem:[%s46 + $0x3b0] sm:$0xff]
        %285 = vst [vmem:[%s47 + $0x3b0] sm:$0xff] %v284
        %v286 = vld [vmem:[%s46 + $0x3b8] sm:$0xff]
        %287 = vst [vmem:[%s47 + $0x3b8] sm:$0xff] %v286
        %v288 = vld [vmem:[%s46 + $0x3c0] sm:$0xff]
        %289 = vst [vmem:[%s47 + $0x3c0] sm:$0xff] %v288
        %v290 = vld [vmem:[%s46 + $0x3c8] sm:$0xff]
        %291 = vst [vmem:[%s47 + $0x3c8] sm:$0xff] %v290
        %v292 = vld [vmem:[%s46 + $0x3d0] sm:$0xff]
        %293 = vst [vmem:[%s47 + $0x3d0] sm:$0xff] %v292
        %v294 = vld [vmem:[%s46 + $0x3d8] sm:$0xff]
        %295 = vst [vmem:[%s47 + $0x3d8] sm:$0xff] %v294
        %v296 = vld [vmem:[%s46 + $0x3e0] sm:$0xff]
        %297 = vst [vmem:[%s47 + $0x3e0] sm:$0xff] %v296
        %v298 = vld [vmem:[%s46 + $0x3e8] sm:$0xff]
        %299 = vst [vmem:[%s47 + $0x3e8] sm:$0xff] %v298
        %v300 = vld [vmem:[%s46 + $0x3f0] sm:$0xff]
        %301 = vst [vmem:[%s47 + $0x3f0] sm:$0xff] %v300
        %v302 = vld [vmem:[%s46 + $0x3f8] sm:$0xff]
        %303 = vst [vmem:[%s47 + $0x3f8] sm:$0xff] %v302
      $region37: #{value_model_forward.1} parent=31 // loop_footer
        %s45 = sadd.s32 1, %s41
      $region38: #{value_model_forward.1} parent=31 // loop_footer_branch
        %40 = sbr.rel target = $region34
      $region39: #{value_model_forward.1} parent=31 // loop_exit
        _
    $region32: #{value_model_forward.1} parent=16 // pred_fallthru
      _
    %p304 = pneg %p36
    // Predicated region
    $region40: #{value_model_forward.1} parent=16 // pred_check
      _
    $region41: #{value_model_forward.1} parent=16 // pred_check_branch
      %306 = sbr.rel (%p36) target = $region43
    $region42: #{value_model_forward.1} parent=16 // pred_region
      %s307 = sand.u32 1024, 7
    $region43: #{value_model_forward.1} parent=16 // pred_fallthru
      _
  $region17: #{value_model_forward.1} parent=0 // pred_fallthru
    _
  // Predicated region
  $region18: #{value_model_forward.1} parent=0 // pred_check
    %p21 = pneg %p17
  $region19: #{value_model_forward.1} parent=0 // pred_check_branch
    %23 = sbr.rel (%p21) target = $region21
  $region20: #{value_model_forward.1} parent=0 // pred_region
    %s24 = sshllo.u32 0, 1024
    loop: start=0, step=1, limit=1
    $region22: #{value_model_forward.1} parent=20 // loop_pre_header
      _
    $region23: #{value_model_forward.1} parent=20 // loop_header
      %s26 = sphi 0, %s30
      %p27 = scmp.ge.s32.totalorder %s26, 1
      %s31 = sphi %s3, %s3
      %s32 = sphi [#allocation2], [#allocation2]
    $region24: #{value_model_forward.1} parent=20 // loop_header_branch
      %29 = sbr.rel (%p27) target = $region28
    $region25: #{value_model_forward.1} parent=20 // loop_body
      %v33 = vld [vmem:[%s31] sm:%s24]
      %34 = vst [vmem:[%s32] sm:%s24] %v33
    $region26: #{value_model_forward.1} parent=20 // loop_footer
      %s30 = sadd.s32 1, %s26
    $region27: #{value_model_forward.1} parent=20 // loop_footer_branch
      %25 = sbr.rel target = $region23
    $region28: #{value_model_forward.1} parent=20 // loop_exit
      _
  $region21: #{value_model_forward.1} parent=0 // pred_fallthru
    _
  // Predicated region
  $region44: #{value_model_forward.1} parent=0 // pred_check
    _
  $region45: #{value_model_forward.1} parent=0 // pred_check_branch
    %310 = sbr.rel (0) target = $region47
  $region46: #{value_model_forward.1} parent=0 // pred_region
    %311 = vsyncadd [#allocation4], 16384
  $region47: #{value_model_forward.1} parent=0 // pred_fallthru
    _
  %s312 = scalar_lea.sflag [#allocation4], 1
  %p314 = scmp.lt.u32.totalorder 2048, 8
  %p315 = pneg %p314
  // Predicated region
  $region48: #{value_model_forward.1} parent=0 // pred_check
    _
  $region49: #{value_model_forward.1} parent=0 // pred_check_branch
    %317 = sbr.rel (%p314) target = $region51
  $region50: #{value_model_forward.1} parent=0 // pred_region
    %s332 = sand.u32 2048, 7
    %p333 = scmp.eq.s32.totalorder %s332, 0
    // Predicated region
    $region63: #{value_model_forward.1} parent=50 // pred_check
      %p334 = pneg %p333
    $region64: #{value_model_forward.1} parent=50 // pred_check_branch
      %336 = sbr.rel (%p334) target = $region66
    $region65: #{value_model_forward.1} parent=50 // pred_region
      loop: start=0, step=1, limit=1
      $region67: #{value_model_forward.1} parent=65 // loop_pre_header
        _
      $region68: #{value_model_forward.1} parent=65 // loop_header
        %s338 = sphi 0, %s342
        %p339 = scmp.ge.s32.totalorder %s338, 1
        %s343 = sphi %s4, %s4
        %s344 = sphi [#allocation3], [#allocation3]
      $region69: #{value_model_forward.1} parent=65 // loop_header_branch
        %341 = sbr.rel (%p339) target = $region73
      $region70: #{value_model_forward.1} parent=65 // loop_body
        %v345 = vld [vmem:[%s343] sm:$0xff]
        %346 = vst [vmem:[%s344] sm:$0xff] %v345
        %v347 = vld [vmem:[%s343 + $0x8] sm:$0xff]
        %348 = vst [vmem:[%s344 + $0x8] sm:$0xff] %v347
        %v349 = vld [vmem:[%s343 + $0x10] sm:$0xff]
        %350 = vst [vmem:[%s344 + $0x10] sm:$0xff] %v349
        %v351 = vld [vmem:[%s343 + $0x18] sm:$0xff]
        %352 = vst [vmem:[%s344 + $0x18] sm:$0xff] %v351
        %v353 = vld [vmem:[%s343 + $0x20] sm:$0xff]
        %354 = vst [vmem:[%s344 + $0x20] sm:$0xff] %v353
        %v355 = vld [vmem:[%s343 + $0x28] sm:$0xff]
        %356 = vst [vmem:[%s344 + $0x28] sm:$0xff] %v355
        %v357 = vld [vmem:[%s343 + $0x30] sm:$0xff]
        %358 = vst [vmem:[%s344 + $0x30] sm:$0xff] %v357
        %v359 = vld [vmem:[%s343 + $0x38] sm:$0xff]
        %360 = vst [vmem:[%s344 + $0x38] sm:$0xff] %v359
        %v361 = vld [vmem:[%s343 + $0x40] sm:$0xff]
        %362 = vst [vmem:[%s344 + $0x40] sm:$0xff] %v361
        %v363 = vld [vmem:[%s343 + $0x48] sm:$0xff]
        %364 = vst [vmem:[%s344 + $0x48] sm:$0xff] %v363
        %v365 = vld [vmem:[%s343 + $0x50] sm:$0xff]
        %366 = vst [vmem:[%s344 + $0x50] sm:$0xff] %v365
        %v367 = vld [vmem:[%s343 + $0x58] sm:$0xff]
        %368 = vst [vmem:[%s344 + $0x58] sm:$0xff] %v367
        %v369 = vld [vmem:[%s343 + $0x60] sm:$0xff]
        %370 = vst [vmem:[%s344 + $0x60] sm:$0xff] %v369
        %v371 = vld [vmem:[%s343 + $0x68] sm:$0xff]
        %372 = vst [vmem:[%s344 + $0x68] sm:$0xff] %v371
        %v373 = vld [vmem:[%s343 + $0x70] sm:$0xff]
        %374 = vst [vmem:[%s344 + $0x70] sm:$0xff] %v373
        %v375 = vld [vmem:[%s343 + $0x78] sm:$0xff]
        %376 = vst [vmem:[%s344 + $0x78] sm:$0xff] %v375
        %v377 = vld [vmem:[%s343 + $0x80] sm:$0xff]
        %378 = vst [vmem:[%s344 + $0x80] sm:$0xff] %v377
        %v379 = vld [vmem:[%s343 + $0x88] sm:$0xff]
        %380 = vst [vmem:[%s344 + $0x88] sm:$0xff] %v379
        %v381 = vld [vmem:[%s343 + $0x90] sm:$0xff]
        %382 = vst [vmem:[%s344 + $0x90] sm:$0xff] %v381
        %v383 = vld [vmem:[%s343 + $0x98] sm:$0xff]
        %384 = vst [vmem:[%s344 + $0x98] sm:$0xff] %v383
        %v385 = vld [vmem:[%s343 + $0xa0] sm:$0xff]
        %386 = vst [vmem:[%s344 + $0xa0] sm:$0xff] %v385
        %v387 = vld [vmem:[%s343 + $0xa8] sm:$0xff]
        %388 = vst [vmem:[%s344 + $0xa8] sm:$0xff] %v387
        %v389 = vld [vmem:[%s343 + $0xb0] sm:$0xff]
        %390 = vst [vmem:[%s344 + $0xb0] sm:$0xff] %v389
        %v391 = vld [vmem:[%s343 + $0xb8] sm:$0xff]
        %392 = vst [vmem:[%s344 + $0xb8] sm:$0xff] %v391
        %v393 = vld [vmem:[%s343 + $0xc0] sm:$0xff]
        %394 = vst [vmem:[%s344 + $0xc0] sm:$0xff] %v393
        %v395 = vld [vmem:[%s343 + $0xc8] sm:$0xff]
        %396 = vst [vmem:[%s344 + $0xc8] sm:$0xff] %v395
        %v397 = vld [vmem:[%s343 + $0xd0] sm:$0xff]
        %398 = vst [vmem:[%s344 + $0xd0] sm:$0xff] %v397
        %v399 = vld [vmem:[%s343 + $0xd8] sm:$0xff]
        %400 = vst [vmem:[%s344 + $0xd8] sm:$0xff] %v399
        %v401 = vld [vmem:[%s343 + $0xe0] sm:$0xff]
        %402 = vst [vmem:[%s344 + $0xe0] sm:$0xff] %v401
        %v403 = vld [vmem:[%s343 + $0xe8] sm:$0xff]
        %404 = vst [vmem:[%s344 + $0xe8] sm:$0xff] %v403
        %v405 = vld [vmem:[%s343 + $0xf0] sm:$0xff]
        %406 = vst [vmem:[%s344 + $0xf0] sm:$0xff] %v405
        %v407 = vld [vmem:[%s343 + $0xf8] sm:$0xff]
        %408 = vst [vmem:[%s344 + $0xf8] sm:$0xff] %v407
        %v409 = vld [vmem:[%s343 + $0x100] sm:$0xff]
        %410 = vst [vmem:[%s344 + $0x100] sm:$0xff] %v409
        %v411 = vld [vmem:[%s343 + $0x108] sm:$0xff]
        %412 = vst [vmem:[%s344 + $0x108] sm:$0xff] %v411
        %v413 = vld [vmem:[%s343 + $0x110] sm:$0xff]
        %414 = vst [vmem:[%s344 + $0x110] sm:$0xff] %v413
        %v415 = vld [vmem:[%s343 + $0x118] sm:$0xff]
        %416 = vst [vmem:[%s344 + $0x118] sm:$0xff] %v415
        %v417 = vld [vmem:[%s343 + $0x120] sm:$0xff]
        %418 = vst [vmem:[%s344 + $0x120] sm:$0xff] %v417
        %v419 = vld [vmem:[%s343 + $0x128] sm:$0xff]
        %420 = vst [vmem:[%s344 + $0x128] sm:$0xff] %v419
        %v421 = vld [vmem:[%s343 + $0x130] sm:$0xff]
        %422 = vst [vmem:[%s344 + $0x130] sm:$0xff] %v421
        %v423 = vld [vmem:[%s343 + $0x138] sm:$0xff]
        %424 = vst [vmem:[%s344 + $0x138] sm:$0xff] %v423
        %v425 = vld [vmem:[%s343 + $0x140] sm:$0xff]
        %426 = vst [vmem:[%s344 + $0x140] sm:$0xff] %v425
        %v427 = vld [vmem:[%s343 + $0x148] sm:$0xff]
        %428 = vst [vmem:[%s344 + $0x148] sm:$0xff] %v427
        %v429 = vld [vmem:[%s343 + $0x150] sm:$0xff]
        %430 = vst [vmem:[%s344 + $0x150] sm:$0xff] %v429
        %v431 = vld [vmem:[%s343 + $0x158] sm:$0xff]
        %432 = vst [vmem:[%s344 + $0x158] sm:$0xff] %v431
        %v433 = vld [vmem:[%s343 + $0x160] sm:$0xff]
        %434 = vst [vmem:[%s344 + $0x160] sm:$0xff] %v433
        %v435 = vld [vmem:[%s343 + $0x168] sm:$0xff]
        %436 = vst [vmem:[%s344 + $0x168] sm:$0xff] %v435
        %v437 = vld [vmem:[%s343 + $0x170] sm:$0xff]
        %438 = vst [vmem:[%s344 + $0x170] sm:$0xff] %v437
        %v439 = vld [vmem:[%s343 + $0x178] sm:$0xff]
        %440 = vst [vmem:[%s344 + $0x178] sm:$0xff] %v439
        %v441 = vld [vmem:[%s343 + $0x180] sm:$0xff]
        %442 = vst [vmem:[%s344 + $0x180] sm:$0xff] %v441
        %v443 = vld [vmem:[%s343 + $0x188] sm:$0xff]
        %444 = vst [vmem:[%s344 + $0x188] sm:$0xff] %v443
        %v445 = vld [vmem:[%s343 + $0x190] sm:$0xff]
        %446 = vst [vmem:[%s344 + $0x190] sm:$0xff] %v445
        %v447 = vld [vmem:[%s343 + $0x198] sm:$0xff]
        %448 = vst [vmem:[%s344 + $0x198] sm:$0xff] %v447
        %v449 = vld [vmem:[%s343 + $0x1a0] sm:$0xff]
        %450 = vst [vmem:[%s344 + $0x1a0] sm:$0xff] %v449
        %v451 = vld [vmem:[%s343 + $0x1a8] sm:$0xff]
        %452 = vst [vmem:[%s344 + $0x1a8] sm:$0xff] %v451
        %v453 = vld [vmem:[%s343 + $0x1b0] sm:$0xff]
        %454 = vst [vmem:[%s344 + $0x1b0] sm:$0xff] %v453
        %v455 = vld [vmem:[%s343 + $0x1b8] sm:$0xff]
        %456 = vst [vmem:[%s344 + $0x1b8] sm:$0xff] %v455
        %v457 = vld [vmem:[%s343 + $0x1c0] sm:$0xff]
        %458 = vst [vmem:[%s344 + $0x1c0] sm:$0xff] %v457
        %v459 = vld [vmem:[%s343 + $0x1c8] sm:$0xff]
        %460 = vst [vmem:[%s344 + $0x1c8] sm:$0xff] %v459
        %v461 = vld [vmem:[%s343 + $0x1d0] sm:$0xff]
        %462 = vst [vmem:[%s344 + $0x1d0] sm:$0xff] %v461
        %v463 = vld [vmem:[%s343 + $0x1d8] sm:$0xff]
        %464 = vst [vmem:[%s344 + $0x1d8] sm:$0xff] %v463
        %v465 = vld [vmem:[%s343 + $0x1e0] sm:$0xff]
        %466 = vst [vmem:[%s344 + $0x1e0] sm:$0xff] %v465
        %v467 = vld [vmem:[%s343 + $0x1e8] sm:$0xff]
        %468 = vst [vmem:[%s344 + $0x1e8] sm:$0xff] %v467
        %v469 = vld [vmem:[%s343 + $0x1f0] sm:$0xff]
        %470 = vst [vmem:[%s344 + $0x1f0] sm:$0xff] %v469
        %v471 = vld [vmem:[%s343 + $0x1f8] sm:$0xff]
        %472 = vst [vmem:[%s344 + $0x1f8] sm:$0xff] %v471
        %v473 = vld [vmem:[%s343 + $0x200] sm:$0xff]
        %474 = vst [vmem:[%s344 + $0x200] sm:$0xff] %v473
        %v475 = vld [vmem:[%s343 + $0x208] sm:$0xff]
        %476 = vst [vmem:[%s344 + $0x208] sm:$0xff] %v475
        %v477 = vld [vmem:[%s343 + $0x210] sm:$0xff]
        %478 = vst [vmem:[%s344 + $0x210] sm:$0xff] %v477
        %v479 = vld [vmem:[%s343 + $0x218] sm:$0xff]
        %480 = vst [vmem:[%s344 + $0x218] sm:$0xff] %v479
        %v481 = vld [vmem:[%s343 + $0x220] sm:$0xff]
        %482 = vst [vmem:[%s344 + $0x220] sm:$0xff] %v481
        %v483 = vld [vmem:[%s343 + $0x228] sm:$0xff]
        %484 = vst [vmem:[%s344 + $0x228] sm:$0xff] %v483
        %v485 = vld [vmem:[%s343 + $0x230] sm:$0xff]
        %486 = vst [vmem:[%s344 + $0x230] sm:$0xff] %v485
        %v487 = vld [vmem:[%s343 + $0x238] sm:$0xff]
        %488 = vst [vmem:[%s344 + $0x238] sm:$0xff] %v487
        %v489 = vld [vmem:[%s343 + $0x240] sm:$0xff]
        %490 = vst [vmem:[%s344 + $0x240] sm:$0xff] %v489
        %v491 = vld [vmem:[%s343 + $0x248] sm:$0xff]
        %492 = vst [vmem:[%s344 + $0x248] sm:$0xff] %v491
        %v493 = vld [vmem:[%s343 + $0x250] sm:$0xff]
        %494 = vst [vmem:[%s344 + $0x250] sm:$0xff] %v493
        %v495 = vld [vmem:[%s343 + $0x258] sm:$0xff]
        %496 = vst [vmem:[%s344 + $0x258] sm:$0xff] %v495
        %v497 = vld [vmem:[%s343 + $0x260] sm:$0xff]
        %498 = vst [vmem:[%s344 + $0x260] sm:$0xff] %v497
        %v499 = vld [vmem:[%s343 + $0x268] sm:$0xff]
        %500 = vst [vmem:[%s344 + $0x268] sm:$0xff] %v499
        %v501 = vld [vmem:[%s343 + $0x270] sm:$0xff]
        %502 = vst [vmem:[%s344 + $0x270] sm:$0xff] %v501
        %v503 = vld [vmem:[%s343 + $0x278] sm:$0xff]
        %504 = vst [vmem:[%s344 + $0x278] sm:$0xff] %v503
        %v505 = vld [vmem:[%s343 + $0x280] sm:$0xff]
        %506 = vst [vmem:[%s344 + $0x280] sm:$0xff] %v505
        %v507 = vld [vmem:[%s343 + $0x288] sm:$0xff]
        %508 = vst [vmem:[%s344 + $0x288] sm:$0xff] %v507
        %v509 = vld [vmem:[%s343 + $0x290] sm:$0xff]
        %510 = vst [vmem:[%s344 + $0x290] sm:$0xff] %v509
        %v511 = vld [vmem:[%s343 + $0x298] sm:$0xff]
        %512 = vst [vmem:[%s344 + $0x298] sm:$0xff] %v511
        %v513 = vld [vmem:[%s343 + $0x2a0] sm:$0xff]
        %514 = vst [vmem:[%s344 + $0x2a0] sm:$0xff] %v513
        %v515 = vld [vmem:[%s343 + $0x2a8] sm:$0xff]
        %516 = vst [vmem:[%s344 + $0x2a8] sm:$0xff] %v515
        %v517 = vld [vmem:[%s343 + $0x2b0] sm:$0xff]
        %518 = vst [vmem:[%s344 + $0x2b0] sm:$0xff] %v517
        %v519 = vld [vmem:[%s343 + $0x2b8] sm:$0xff]
        %520 = vst [vmem:[%s344 + $0x2b8] sm:$0xff] %v519
        %v521 = vld [vmem:[%s343 + $0x2c0] sm:$0xff]
        %522 = vst [vmem:[%s344 + $0x2c0] sm:$0xff] %v521
        %v523 = vld [vmem:[%s343 + $0x2c8] sm:$0xff]
        %524 = vst [vmem:[%s344 + $0x2c8] sm:$0xff] %v523
        %v525 = vld [vmem:[%s343 + $0x2d0] sm:$0xff]
        %526 = vst [vmem:[%s344 + $0x2d0] sm:$0xff] %v525
        %v527 = vld [vmem:[%s343 + $0x2d8] sm:$0xff]
        %528 = vst [vmem:[%s344 + $0x2d8] sm:$0xff] %v527
        %v529 = vld [vmem:[%s343 + $0x2e0] sm:$0xff]
        %530 = vst [vmem:[%s344 + $0x2e0] sm:$0xff] %v529
        %v531 = vld [vmem:[%s343 + $0x2e8] sm:$0xff]
        %532 = vst [vmem:[%s344 + $0x2e8] sm:$0xff] %v531
        %v533 = vld [vmem:[%s343 + $0x2f0] sm:$0xff]
        %534 = vst [vmem:[%s344 + $0x2f0] sm:$0xff] %v533
        %v535 = vld [vmem:[%s343 + $0x2f8] sm:$0xff]
        %536 = vst [vmem:[%s344 + $0x2f8] sm:$0xff] %v535
        %v537 = vld [vmem:[%s343 + $0x300] sm:$0xff]
        %538 = vst [vmem:[%s344 + $0x300] sm:$0xff] %v537
        %v539 = vld [vmem:[%s343 + $0x308] sm:$0xff]
        %540 = vst [vmem:[%s344 + $0x308] sm:$0xff] %v539
        %v541 = vld [vmem:[%s343 + $0x310] sm:$0xff]
        %542 = vst [vmem:[%s344 + $0x310] sm:$0xff] %v541
        %v543 = vld [vmem:[%s343 + $0x318] sm:$0xff]
        %544 = vst [vmem:[%s344 + $0x318] sm:$0xff] %v543
        %v545 = vld [vmem:[%s343 + $0x320] sm:$0xff]
        %546 = vst [vmem:[%s344 + $0x320] sm:$0xff] %v545
        %v547 = vld [vmem:[%s343 + $0x328] sm:$0xff]
        %548 = vst [vmem:[%s344 + $0x328] sm:$0xff] %v547
        %v549 = vld [vmem:[%s343 + $0x330] sm:$0xff]
        %550 = vst [vmem:[%s344 + $0x330] sm:$0xff] %v549
        %v551 = vld [vmem:[%s343 + $0x338] sm:$0xff]
        %552 = vst [vmem:[%s344 + $0x338] sm:$0xff] %v551
        %v553 = vld [vmem:[%s343 + $0x340] sm:$0xff]
        %554 = vst [vmem:[%s344 + $0x340] sm:$0xff] %v553
        %v555 = vld [vmem:[%s343 + $0x348] sm:$0xff]
        %556 = vst [vmem:[%s344 + $0x348] sm:$0xff] %v555
        %v557 = vld [vmem:[%s343 + $0x350] sm:$0xff]
        %558 = vst [vmem:[%s344 + $0x350] sm:$0xff] %v557
        %v559 = vld [vmem:[%s343 + $0x358] sm:$0xff]
        %560 = vst [vmem:[%s344 + $0x358] sm:$0xff] %v559
        %v561 = vld [vmem:[%s343 + $0x360] sm:$0xff]
        %562 = vst [vmem:[%s344 + $0x360] sm:$0xff] %v561
        %v563 = vld [vmem:[%s343 + $0x368] sm:$0xff]
        %564 = vst [vmem:[%s344 + $0x368] sm:$0xff] %v563
        %v565 = vld [vmem:[%s343 + $0x370] sm:$0xff]
        %566 = vst [vmem:[%s344 + $0x370] sm:$0xff] %v565
        %v567 = vld [vmem:[%s343 + $0x378] sm:$0xff]
        %568 = vst [vmem:[%s344 + $0x378] sm:$0xff] %v567
        %v569 = vld [vmem:[%s343 + $0x380] sm:$0xff]
        %570 = vst [vmem:[%s344 + $0x380] sm:$0xff] %v569
        %v571 = vld [vmem:[%s343 + $0x388] sm:$0xff]
        %572 = vst [vmem:[%s344 + $0x388] sm:$0xff] %v571
        %v573 = vld [vmem:[%s343 + $0x390] sm:$0xff]
        %574 = vst [vmem:[%s344 + $0x390] sm:$0xff] %v573
        %v575 = vld [vmem:[%s343 + $0x398] sm:$0xff]
        %576 = vst [vmem:[%s344 + $0x398] sm:$0xff] %v575
        %v577 = vld [vmem:[%s343 + $0x3a0] sm:$0xff]
        %578 = vst [vmem:[%s344 + $0x3a0] sm:$0xff] %v577
        %v579 = vld [vmem:[%s343 + $0x3a8] sm:$0xff]
        %580 = vst [vmem:[%s344 + $0x3a8] sm:$0xff] %v579
        %v581 = vld [vmem:[%s343 + $0x3b0] sm:$0xff]
        %582 = vst [vmem:[%s344 + $0x3b0] sm:$0xff] %v581
        %v583 = vld [vmem:[%s343 + $0x3b8] sm:$0xff]
        %584 = vst [vmem:[%s344 + $0x3b8] sm:$0xff] %v583
        %v585 = vld [vmem:[%s343 + $0x3c0] sm:$0xff]
        %586 = vst [vmem:[%s344 + $0x3c0] sm:$0xff] %v585
        %v587 = vld [vmem:[%s343 + $0x3c8] sm:$0xff]
        %588 = vst [vmem:[%s344 + $0x3c8] sm:$0xff] %v587
        %v589 = vld [vmem:[%s343 + $0x3d0] sm:$0xff]
        %590 = vst [vmem:[%s344 + $0x3d0] sm:$0xff] %v589
        %v591 = vld [vmem:[%s343 + $0x3d8] sm:$0xff]
        %592 = vst [vmem:[%s344 + $0x3d8] sm:$0xff] %v591
        %v593 = vld [vmem:[%s343 + $0x3e0] sm:$0xff]
        %594 = vst [vmem:[%s344 + $0x3e0] sm:$0xff] %v593
        %v595 = vld [vmem:[%s343 + $0x3e8] sm:$0xff]
        %596 = vst [vmem:[%s344 + $0x3e8] sm:$0xff] %v595
        %v597 = vld [vmem:[%s343 + $0x3f0] sm:$0xff]
        %598 = vst [vmem:[%s344 + $0x3f0] sm:$0xff] %v597
        %v599 = vld [vmem:[%s343 + $0x3f8] sm:$0xff]
        %600 = vst [vmem:[%s344 + $0x3f8] sm:$0xff] %v599
        %v601 = vld [vmem:[%s343 + $0x400] sm:$0xff]
        %602 = vst [vmem:[%s344 + $0x400] sm:$0xff] %v601
        %v603 = vld [vmem:[%s343 + $0x408] sm:$0xff]
        %604 = vst [vmem:[%s344 + $0x408] sm:$0xff] %v603
        %v605 = vld [vmem:[%s343 + $0x410] sm:$0xff]
        %606 = vst [vmem:[%s344 + $0x410] sm:$0xff] %v605
        %v607 = vld [vmem:[%s343 + $0x418] sm:$0xff]
        %608 = vst [vmem:[%s344 + $0x418] sm:$0xff] %v607
        %v609 = vld [vmem:[%s343 + $0x420] sm:$0xff]
        %610 = vst [vmem:[%s344 + $0x420] sm:$0xff] %v609
        %v611 = vld [vmem:[%s343 + $0x428] sm:$0xff]
        %612 = vst [vmem:[%s344 + $0x428] sm:$0xff] %v611
        %v613 = vld [vmem:[%s343 + $0x430] sm:$0xff]
        %614 = vst [vmem:[%s344 + $0x430] sm:$0xff] %v613
        %v615 = vld [vmem:[%s343 + $0x438] sm:$0xff]
        %616 = vst [vmem:[%s344 + $0x438] sm:$0xff] %v615
        %v617 = vld [vmem:[%s343 + $0x440] sm:$0xff]
        %618 = vst [vmem:[%s344 + $0x440] sm:$0xff] %v617
        %v619 = vld [vmem:[%s343 + $0x448] sm:$0xff]
        %620 = vst [vmem:[%s344 + $0x448] sm:$0xff] %v619
        %v621 = vld [vmem:[%s343 + $0x450] sm:$0xff]
        %622 = vst [vmem:[%s344 + $0x450] sm:$0xff] %v621
        %v623 = vld [vmem:[%s343 + $0x458] sm:$0xff]
        %624 = vst [vmem:[%s344 + $0x458] sm:$0xff] %v623
        %v625 = vld [vmem:[%s343 + $0x460] sm:$0xff]
        %626 = vst [vmem:[%s344 + $0x460] sm:$0xff] %v625
        %v627 = vld [vmem:[%s343 + $0x468] sm:$0xff]
        %628 = vst [vmem:[%s344 + $0x468] sm:$0xff] %v627
        %v629 = vld [vmem:[%s343 + $0x470] sm:$0xff]
        %630 = vst [vmem:[%s344 + $0x470] sm:$0xff] %v629
        %v631 = vld [vmem:[%s343 + $0x478] sm:$0xff]
        %632 = vst [vmem:[%s344 + $0x478] sm:$0xff] %v631
        %v633 = vld [vmem:[%s343 + $0x480] sm:$0xff]
        %634 = vst [vmem:[%s344 + $0x480] sm:$0xff] %v633
        %v635 = vld [vmem:[%s343 + $0x488] sm:$0xff]
        %636 = vst [vmem:[%s344 + $0x488] sm:$0xff] %v635
        %v637 = vld [vmem:[%s343 + $0x490] sm:$0xff]
        %638 = vst [vmem:[%s344 + $0x490] sm:$0xff] %v637
        %v639 = vld [vmem:[%s343 + $0x498] sm:$0xff]
        %640 = vst [vmem:[%s344 + $0x498] sm:$0xff] %v639
        %v641 = vld [vmem:[%s343 + $0x4a0] sm:$0xff]
        %642 = vst [vmem:[%s344 + $0x4a0] sm:$0xff] %v641
        %v643 = vld [vmem:[%s343 + $0x4a8] sm:$0xff]
        %644 = vst [vmem:[%s344 + $0x4a8] sm:$0xff] %v643
        %v645 = vld [vmem:[%s343 + $0x4b0] sm:$0xff]
        %646 = vst [vmem:[%s344 + $0x4b0] sm:$0xff] %v645
        %v647 = vld [vmem:[%s343 + $0x4b8] sm:$0xff]
        %648 = vst [vmem:[%s344 + $0x4b8] sm:$0xff] %v647
        %v649 = vld [vmem:[%s343 + $0x4c0] sm:$0xff]
        %650 = vst [vmem:[%s344 + $0x4c0] sm:$0xff] %v649
        %v651 = vld [vmem:[%s343 + $0x4c8] sm:$0xff]
        %652 = vst [vmem:[%s344 + $0x4c8] sm:$0xff] %v651
        %v653 = vld [vmem:[%s343 + $0x4d0] sm:$0xff]
        %654 = vst [vmem:[%s344 + $0x4d0] sm:$0xff] %v653
        %v655 = vld [vmem:[%s343 + $0x4d8] sm:$0xff]
        %656 = vst [vmem:[%s344 + $0x4d8] sm:$0xff] %v655
        %v657 = vld [vmem:[%s343 + $0x4e0] sm:$0xff]
        %658 = vst [vmem:[%s344 + $0x4e0] sm:$0xff] %v657
        %v659 = vld [vmem:[%s343 + $0x4e8] sm:$0xff]
        %660 = vst [vmem:[%s344 + $0x4e8] sm:$0xff] %v659
        %v661 = vld [vmem:[%s343 + $0x4f0] sm:$0xff]
        %662 = vst [vmem:[%s344 + $0x4f0] sm:$0xff] %v661
        %v663 = vld [vmem:[%s343 + $0x4f8] sm:$0xff]
        %664 = vst [vmem:[%s344 + $0x4f8] sm:$0xff] %v663
        %v665 = vld [vmem:[%s343 + $0x500] sm:$0xff]
        %666 = vst [vmem:[%s344 + $0x500] sm:$0xff] %v665
        %v667 = vld [vmem:[%s343 + $0x508] sm:$0xff]
        %668 = vst [vmem:[%s344 + $0x508] sm:$0xff] %v667
        %v669 = vld [vmem:[%s343 + $0x510] sm:$0xff]
        %670 = vst [vmem:[%s344 + $0x510] sm:$0xff] %v669
        %v671 = vld [vmem:[%s343 + $0x518] sm:$0xff]
        %672 = vst [vmem:[%s344 + $0x518] sm:$0xff] %v671
        %v673 = vld [vmem:[%s343 + $0x520] sm:$0xff]
        %674 = vst [vmem:[%s344 + $0x520] sm:$0xff] %v673
        %v675 = vld [vmem:[%s343 + $0x528] sm:$0xff]
        %676 = vst [vmem:[%s344 + $0x528] sm:$0xff] %v675
        %v677 = vld [vmem:[%s343 + $0x530] sm:$0xff]
        %678 = vst [vmem:[%s344 + $0x530] sm:$0xff] %v677
        %v679 = vld [vmem:[%s343 + $0x538] sm:$0xff]
        %680 = vst [vmem:[%s344 + $0x538] sm:$0xff] %v679
        %v681 = vld [vmem:[%s343 + $0x540] sm:$0xff]
        %682 = vst [vmem:[%s344 + $0x540] sm:$0xff] %v681
        %v683 = vld [vmem:[%s343 + $0x548] sm:$0xff]
        %684 = vst [vmem:[%s344 + $0x548] sm:$0xff] %v683
        %v685 = vld [vmem:[%s343 + $0x550] sm:$0xff]
        %686 = vst [vmem:[%s344 + $0x550] sm:$0xff] %v685
        %v687 = vld [vmem:[%s343 + $0x558] sm:$0xff]
        %688 = vst [vmem:[%s344 + $0x558] sm:$0xff] %v687
        %v689 = vld [vmem:[%s343 + $0x560] sm:$0xff]
        %690 = vst [vmem:[%s344 + $0x560] sm:$0xff] %v689
        %v691 = vld [vmem:[%s343 + $0x568] sm:$0xff]
        %692 = vst [vmem:[%s344 + $0x568] sm:$0xff] %v691
        %v693 = vld [vmem:[%s343 + $0x570] sm:$0xff]
        %694 = vst [vmem:[%s344 + $0x570] sm:$0xff] %v693
        %v695 = vld [vmem:[%s343 + $0x578] sm:$0xff]
        %696 = vst [vmem:[%s344 + $0x578] sm:$0xff] %v695
        %v697 = vld [vmem:[%s343 + $0x580] sm:$0xff]
        %698 = vst [vmem:[%s344 + $0x580] sm:$0xff] %v697
        %v699 = vld [vmem:[%s343 + $0x588] sm:$0xff]
        %700 = vst [vmem:[%s344 + $0x588] sm:$0xff] %v699
        %v701 = vld [vmem:[%s343 + $0x590] sm:$0xff]
        %702 = vst [vmem:[%s344 + $0x590] sm:$0xff] %v701
        %v703 = vld [vmem:[%s343 + $0x598] sm:$0xff]
        %704 = vst [vmem:[%s344 + $0x598] sm:$0xff] %v703
        %v705 = vld [vmem:[%s343 + $0x5a0] sm:$0xff]
        %706 = vst [vmem:[%s344 + $0x5a0] sm:$0xff] %v705
        %v707 = vld [vmem:[%s343 + $0x5a8] sm:$0xff]
        %708 = vst [vmem:[%s344 + $0x5a8] sm:$0xff] %v707
        %v709 = vld [vmem:[%s343 + $0x5b0] sm:$0xff]
        %710 = vst [vmem:[%s344 + $0x5b0] sm:$0xff] %v709
        %v711 = vld [vmem:[%s343 + $0x5b8] sm:$0xff]
        %712 = vst [vmem:[%s344 + $0x5b8] sm:$0xff] %v711
        %v713 = vld [vmem:[%s343 + $0x5c0] sm:$0xff]
        %714 = vst [vmem:[%s344 + $0x5c0] sm:$0xff] %v713
        %v715 = vld [vmem:[%s343 + $0x5c8] sm:$0xff]
        %716 = vst [vmem:[%s344 + $0x5c8] sm:$0xff] %v715
        %v717 = vld [vmem:[%s343 + $0x5d0] sm:$0xff]
        %718 = vst [vmem:[%s344 + $0x5d0] sm:$0xff] %v717
        %v719 = vld [vmem:[%s343 + $0x5d8] sm:$0xff]
        %720 = vst [vmem:[%s344 + $0x5d8] sm:$0xff] %v719
        %v721 = vld [vmem:[%s343 + $0x5e0] sm:$0xff]
        %722 = vst [vmem:[%s344 + $0x5e0] sm:$0xff] %v721
        %v723 = vld [vmem:[%s343 + $0x5e8] sm:$0xff]
        %724 = vst [vmem:[%s344 + $0x5e8] sm:$0xff] %v723
        %v725 = vld [vmem:[%s343 + $0x5f0] sm:$0xff]
        %726 = vst [vmem:[%s344 + $0x5f0] sm:$0xff] %v725
        %v727 = vld [vmem:[%s343 + $0x5f8] sm:$0xff]
        %728 = vst [vmem:[%s344 + $0x5f8] sm:$0xff] %v727
        %v729 = vld [vmem:[%s343 + $0x600] sm:$0xff]
        %730 = vst [vmem:[%s344 + $0x600] sm:$0xff] %v729
        %v731 = vld [vmem:[%s343 + $0x608] sm:$0xff]
        %732 = vst [vmem:[%s344 + $0x608] sm:$0xff] %v731
        %v733 = vld [vmem:[%s343 + $0x610] sm:$0xff]
        %734 = vst [vmem:[%s344 + $0x610] sm:$0xff] %v733
        %v735 = vld [vmem:[%s343 + $0x618] sm:$0xff]
        %736 = vst [vmem:[%s344 + $0x618] sm:$0xff] %v735
        %v737 = vld [vmem:[%s343 + $0x620] sm:$0xff]
        %738 = vst [vmem:[%s344 + $0x620] sm:$0xff] %v737
        %v739 = vld [vmem:[%s343 + $0x628] sm:$0xff]
        %740 = vst [vmem:[%s344 + $0x628] sm:$0xff] %v739
        %v741 = vld [vmem:[%s343 + $0x630] sm:$0xff]
        %742 = vst [vmem:[%s344 + $0x630] sm:$0xff] %v741
        %v743 = vld [vmem:[%s343 + $0x638] sm:$0xff]
        %744 = vst [vmem:[%s344 + $0x638] sm:$0xff] %v743
        %v745 = vld [vmem:[%s343 + $0x640] sm:$0xff]
        %746 = vst [vmem:[%s344 + $0x640] sm:$0xff] %v745
        %v747 = vld [vmem:[%s343 + $0x648] sm:$0xff]
        %748 = vst [vmem:[%s344 + $0x648] sm:$0xff] %v747
        %v749 = vld [vmem:[%s343 + $0x650] sm:$0xff]
        %750 = vst [vmem:[%s344 + $0x650] sm:$0xff] %v749
        %v751 = vld [vmem:[%s343 + $0x658] sm:$0xff]
        %752 = vst [vmem:[%s344 + $0x658] sm:$0xff] %v751
        %v753 = vld [vmem:[%s343 + $0x660] sm:$0xff]
        %754 = vst [vmem:[%s344 + $0x660] sm:$0xff] %v753
        %v755 = vld [vmem:[%s343 + $0x668] sm:$0xff]
        %756 = vst [vmem:[%s344 + $0x668] sm:$0xff] %v755
        %v757 = vld [vmem:[%s343 + $0x670] sm:$0xff]
        %758 = vst [vmem:[%s344 + $0x670] sm:$0xff] %v757
        %v759 = vld [vmem:[%s343 + $0x678] sm:$0xff]
        %760 = vst [vmem:[%s344 + $0x678] sm:$0xff] %v759
        %v761 = vld [vmem:[%s343 + $0x680] sm:$0xff]
        %762 = vst [vmem:[%s344 + $0x680] sm:$0xff] %v761
        %v763 = vld [vmem:[%s343 + $0x688] sm:$0xff]
        %764 = vst [vmem:[%s344 + $0x688] sm:$0xff] %v763
        %v765 = vld [vmem:[%s343 + $0x690] sm:$0xff]
        %766 = vst [vmem:[%s344 + $0x690] sm:$0xff] %v765
        %v767 = vld [vmem:[%s343 + $0x698] sm:$0xff]
        %768 = vst [vmem:[%s344 + $0x698] sm:$0xff] %v767
        %v769 = vld [vmem:[%s343 + $0x6a0] sm:$0xff]
        %770 = vst [vmem:[%s344 + $0x6a0] sm:$0xff] %v769
        %v771 = vld [vmem:[%s343 + $0x6a8] sm:$0xff]
        %772 = vst [vmem:[%s344 + $0x6a8] sm:$0xff] %v771
        %v773 = vld [vmem:[%s343 + $0x6b0] sm:$0xff]
        %774 = vst [vmem:[%s344 + $0x6b0] sm:$0xff] %v773
        %v775 = vld [vmem:[%s343 + $0x6b8] sm:$0xff]
        %776 = vst [vmem:[%s344 + $0x6b8] sm:$0xff] %v775
        %v777 = vld [vmem:[%s343 + $0x6c0] sm:$0xff]
        %778 = vst [vmem:[%s344 + $0x6c0] sm:$0xff] %v777
        %v779 = vld [vmem:[%s343 + $0x6c8] sm:$0xff]
        %780 = vst [vmem:[%s344 + $0x6c8] sm:$0xff] %v779
        %v781 = vld [vmem:[%s343 + $0x6d0] sm:$0xff]
        %782 = vst [vmem:[%s344 + $0x6d0] sm:$0xff] %v781
        %v783 = vld [vmem:[%s343 + $0x6d8] sm:$0xff]
        %784 = vst [vmem:[%s344 + $0x6d8] sm:$0xff] %v783
        %v785 = vld [vmem:[%s343 + $0x6e0] sm:$0xff]
        %786 = vst [vmem:[%s344 + $0x6e0] sm:$0xff] %v785
        %v787 = vld [vmem:[%s343 + $0x6e8] sm:$0xff]
        %788 = vst [vmem:[%s344 + $0x6e8] sm:$0xff] %v787
        %v789 = vld [vmem:[%s343 + $0x6f0] sm:$0xff]
        %790 = vst [vmem:[%s344 + $0x6f0] sm:$0xff] %v789
        %v791 = vld [vmem:[%s343 + $0x6f8] sm:$0xff]
        %792 = vst [vmem:[%s344 + $0x6f8] sm:$0xff] %v791
        %v793 = vld [vmem:[%s343 + $0x700] sm:$0xff]
        %794 = vst [vmem:[%s344 + $0x700] sm:$0xff] %v793
        %v795 = vld [vmem:[%s343 + $0x708] sm:$0xff]
        %796 = vst [vmem:[%s344 + $0x708] sm:$0xff] %v795
        %v797 = vld [vmem:[%s343 + $0x710] sm:$0xff]
        %798 = vst [vmem:[%s344 + $0x710] sm:$0xff] %v797
        %v799 = vld [vmem:[%s343 + $0x718] sm:$0xff]
        %800 = vst [vmem:[%s344 + $0x718] sm:$0xff] %v799
        %v801 = vld [vmem:[%s343 + $0x720] sm:$0xff]
        %802 = vst [vmem:[%s344 + $0x720] sm:$0xff] %v801
        %v803 = vld [vmem:[%s343 + $0x728] sm:$0xff]
        %804 = vst [vmem:[%s344 + $0x728] sm:$0xff] %v803
        %v805 = vld [vmem:[%s343 + $0x730] sm:$0xff]
        %806 = vst [vmem:[%s344 + $0x730] sm:$0xff] %v805
        %v807 = vld [vmem:[%s343 + $0x738] sm:$0xff]
        %808 = vst [vmem:[%s344 + $0x738] sm:$0xff] %v807
        %v809 = vld [vmem:[%s343 + $0x740] sm:$0xff]
        %810 = vst [vmem:[%s344 + $0x740] sm:$0xff] %v809
        %v811 = vld [vmem:[%s343 + $0x748] sm:$0xff]
        %812 = vst [vmem:[%s344 + $0x748] sm:$0xff] %v811
        %v813 = vld [vmem:[%s343 + $0x750] sm:$0xff]
        %814 = vst [vmem:[%s344 + $0x750] sm:$0xff] %v813
        %v815 = vld [vmem:[%s343 + $0x758] sm:$0xff]
        %816 = vst [vmem:[%s344 + $0x758] sm:$0xff] %v815
        %v817 = vld [vmem:[%s343 + $0x760] sm:$0xff]
        %818 = vst [vmem:[%s344 + $0x760] sm:$0xff] %v817
        %v819 = vld [vmem:[%s343 + $0x768] sm:$0xff]
        %820 = vst [vmem:[%s344 + $0x768] sm:$0xff] %v819
        %v821 = vld [vmem:[%s343 + $0x770] sm:$0xff]
        %822 = vst [vmem:[%s344 + $0x770] sm:$0xff] %v821
        %v823 = vld [vmem:[%s343 + $0x778] sm:$0xff]
        %824 = vst [vmem:[%s344 + $0x778] sm:$0xff] %v823
        %v825 = vld [vmem:[%s343 + $0x780] sm:$0xff]
        %826 = vst [vmem:[%s344 + $0x780] sm:$0xff] %v825
        %v827 = vld [vmem:[%s343 + $0x788] sm:$0xff]
        %828 = vst [vmem:[%s344 + $0x788] sm:$0xff] %v827
        %v829 = vld [vmem:[%s343 + $0x790] sm:$0xff]
        %830 = vst [vmem:[%s344 + $0x790] sm:$0xff] %v829
        %v831 = vld [vmem:[%s343 + $0x798] sm:$0xff]
        %832 = vst [vmem:[%s344 + $0x798] sm:$0xff] %v831
        %v833 = vld [vmem:[%s343 + $0x7a0] sm:$0xff]
        %834 = vst [vmem:[%s344 + $0x7a0] sm:$0xff] %v833
        %v835 = vld [vmem:[%s343 + $0x7a8] sm:$0xff]
        %836 = vst [vmem:[%s344 + $0x7a8] sm:$0xff] %v835
        %v837 = vld [vmem:[%s343 + $0x7b0] sm:$0xff]
        %838 = vst [vmem:[%s344 + $0x7b0] sm:$0xff] %v837
        %v839 = vld [vmem:[%s343 + $0x7b8] sm:$0xff]
        %840 = vst [vmem:[%s344 + $0x7b8] sm:$0xff] %v839
        %v841 = vld [vmem:[%s343 + $0x7c0] sm:$0xff]
        %842 = vst [vmem:[%s344 + $0x7c0] sm:$0xff] %v841
        %v843 = vld [vmem:[%s343 + $0x7c8] sm:$0xff]
        %844 = vst [vmem:[%s344 + $0x7c8] sm:$0xff] %v843
        %v845 = vld [vmem:[%s343 + $0x7d0] sm:$0xff]
        %846 = vst [vmem:[%s344 + $0x7d0] sm:$0xff] %v845
        %v847 = vld [vmem:[%s343 + $0x7d8] sm:$0xff]
        %848 = vst [vmem:[%s344 + $0x7d8] sm:$0xff] %v847
        %v849 = vld [vmem:[%s343 + $0x7e0] sm:$0xff]
        %850 = vst [vmem:[%s344 + $0x7e0] sm:$0xff] %v849
        %v851 = vld [vmem:[%s343 + $0x7e8] sm:$0xff]
        %852 = vst [vmem:[%s344 + $0x7e8] sm:$0xff] %v851
        %v853 = vld [vmem:[%s343 + $0x7f0] sm:$0xff]
        %854 = vst [vmem:[%s344 + $0x7f0] sm:$0xff] %v853
        %v855 = vld [vmem:[%s343 + $0x7f8] sm:$0xff]
        %856 = vst [vmem:[%s344 + $0x7f8] sm:$0xff] %v855
      $region71: #{value_model_forward.1} parent=65 // loop_footer
        %s342 = sadd.s32 1, %s338
      $region72: #{value_model_forward.1} parent=65 // loop_footer_branch
        %337 = sbr.rel target = $region68
      $region73: #{value_model_forward.1} parent=65 // loop_exit
        _
    $region66: #{value_model_forward.1} parent=50 // pred_fallthru
      _
    %p857 = pneg %p333
    // Predicated region
    $region74: #{value_model_forward.1} parent=50 // pred_check
      _
    $region75: #{value_model_forward.1} parent=50 // pred_check_branch
      %859 = sbr.rel (%p333) target = $region77
    $region76: #{value_model_forward.1} parent=50 // pred_region
      %s860 = sand.u32 2048, 7
    $region77: #{value_model_forward.1} parent=50 // pred_fallthru
      _
  $region51: #{value_model_forward.1} parent=0 // pred_fallthru
    _
  // Predicated region
  $region52: #{value_model_forward.1} parent=0 // pred_check
    %p318 = pneg %p314
  $region53: #{value_model_forward.1} parent=0 // pred_check_branch
    %320 = sbr.rel (%p318) target = $region55
  $region54: #{value_model_forward.1} parent=0 // pred_region
    %s321 = sshllo.u32 0, 2048
    loop: start=0, step=1, limit=1
    $region56: #{value_model_forward.1} parent=54 // loop_pre_header
      _
    $region57: #{value_model_forward.1} parent=54 // loop_header
      %s323 = sphi 0, %s327
      %p324 = scmp.ge.s32.totalorder %s323, 1
      %s328 = sphi %s4, %s4
      %s329 = sphi [#allocation3], [#allocation3]
    $region58: #{value_model_forward.1} parent=54 // loop_header_branch
      %326 = sbr.rel (%p324) target = $region62
    $region59: #{value_model_forward.1} parent=54 // loop_body
      %v330 = vld [vmem:[%s328] sm:%s321]
      %331 = vst [vmem:[%s329] sm:%s321] %v330
    $region60: #{value_model_forward.1} parent=54 // loop_footer
      %s327 = sadd.s32 1, %s323
    $region61: #{value_model_forward.1} parent=54 // loop_footer_branch
      %322 = sbr.rel target = $region57
    $region62: #{value_model_forward.1} parent=54 // loop_exit
      _
  $region55: #{value_model_forward.1} parent=0 // pred_fallthru
    _
  // Predicated region
  $region78: #{value_model_forward.1} parent=0 // pred_check
    _
  $region79: #{value_model_forward.1} parent=0 // pred_check_branch
    %863 = sbr.rel (0) target = $region81
  $region80: #{value_model_forward.1} parent=0 // pred_region
    %864 = vsyncadd %s312, 32768
  $region81: #{value_model_forward.1} parent=0 // pred_fallthru
    _
  %v865 = vld [vmem:[%s0] sm:$0xff]
  %v866 = vld [vmem:[%s0 + $0x8] sm:$0xff]
  %v867 = vlaneseq
  %v868 = vand.u32 %v867, 127
  %869 = vset.pattern.permute.xlu0 0
  %870 = vperm.xlu0 %869, %v865
  %v871 = vpop.permute.xlu0 %870
  %872 = vset.pattern.permute.xlu0 0
  %873 = vperm.xlu0 %872, %v866
  %v874 = vpop.permute.xlu0 %873
  %vm875 = vcmp.eq.s32.totalorder %v871, %v868
  %vm876 = vcmp.eq.s32.totalorder %v874, %v868
  %v877 = vsel %vm875, 1, 0
  %v878 = vsel %vm876, 1, 0
  %v879 = vcvt.s32.f32 %v877
  %v880 = vcvt.s32.f32 %v878
  %v881 = vld [vmem:[%s1] sm:$0xff]
  %v882 = vld [vmem:[%s1 + $0x8] sm:$0xff]
  %v883 = vld [vmem:[%s1 + $0x10] sm:$0xff]
  %v884 = vld [vmem:[%s1 + $0x18] sm:$0xff]
  %vm885 = vcmask 261120
  %v887 = vsel %vm885, %v879, 0
  %v890 = vsel %vm885, %v880, 0
  %892 = vmatprep.subr.mxu0 0.0
  %893 = vmatpush1.msra.mxu0 %v881
  %894 = vmatprep.subr.mxu0 0.0
  %895 = vmatpush1.msra.mxu0 %v882
  %896 = vmatprep.subr.mxu0 0.0
  %897 = vmatpush1.msra.mxu0 %v883
  %898 = vmatprep.subr.mxu0 0.0
  %899 = vmatpush1.msra.mxu0 %v884
  %900 = vmatprep.subr.mxu0 0.0
  %901 = vmatpush1.msra.mxu0 0.0
  %902 = vmatprep.subr.mxu0 0.0
  %903 = vmatpush1.msra.mxu0 0.0
  %904 = vmatprep.subr.mxu0 0.0
  %905 = vmatpush1.msra.mxu0 0.0
  %906 = vmatprep.subr.mxu0 0.0
  %907 = vmatpush1.msra.mxu0 0.0
  %908 = vmatprep.subr.mxu0 0.0
  %909 = vmatpush1.msra.mxu0 0.0
  %910 = vmatprep.subr.mxu0 0.0
  %911 = vmatpush1.msra.mxu0 0.0
  %912 = vmatprep.subr.mxu0 0.0
  %913 = vmatpush1.msra.mxu0 0.0
  %914 = vmatprep.subr.mxu0 0.0
  %915 = vmatpush1.msra.mxu0 0.0
  %916 = vmatprep.subr.mxu0 0.0
  %917 = vmatpush1.msra.mxu0 0.0
  %918 = vmatprep.subr.mxu0 0.0
  %919 = vmatpush1.msra.mxu0 0.0
  %920 = vmatprep.subr.mxu0 0.0
  %921 = vmatpush1.msra.mxu0 0.0
  %922 = vmatprep.subr.mxu0 0.0
  %923 = vmatpush1.msra.mxu0 0.0
  %924 = vmatprep.subr.mxu0 0.0
  %925 = vmatpush1.msra.mxu0 0.0
  %926 = vmatprep.subr.mxu0 0.0
  %927 = vmatpush1.msra.mxu0 0.0
  %928 = vmatprep.subr.mxu0 0.0
  %929 = vmatpush1.msra.mxu0 0.0
  %930 = vmatprep.subr.mxu0 0.0
  %931 = vmatpush1.msra.mxu0 0.0
  %932 = vmatprep.subr.mxu0 0.0
  %933 = vmatpush1.msra.mxu0 0.0
  %934 = vmatprep.subr.mxu0 0.0
  %935 = vmatpush1.msra.mxu0 0.0
  %936 = vmatprep.subr.mxu0 0.0
  %937 = vmatpush1.msra.mxu0 0.0
  %938 = vmatprep.subr.mxu0 0.0
  %939 = vmatpush1.msra.mxu0 0.0
  %940 = vmatprep.subr.mxu0 0.0
  %941 = vmatpush1.msra.mxu0 0.0
  %942 = vmatprep.subr.mxu0 0.0
  %943 = vmatpush1.msra.mxu0 0.0
  %944 = vmatprep.subr.mxu0 0.0
  %945 = vmatpush1.msra.mxu0 0.0
  %946 = vmatprep.subr.mxu0 0.0
  %947 = vmatpush1.msra.mxu0 0.0
  %948 = vmatprep.subr.mxu0 0.0
  %949 = vmatpush1.msra.mxu0 0.0
  %950 = vmatprep.subr.mxu0 0.0
  %951 = vmatpush1.msra.mxu0 0.0
  %952 = vmatprep.subr.mxu0 0.0
  %953 = vmatpush1.msra.mxu0 0.0
  %954 = vmatprep.subr.mxu0 0.0
  %955 = vmatpush1.msra.mxu0 0.0
  %956 = vmatprep.mubr.f32.mxu0 0.0
  %957 = vmatmul.mubr.f32.gmra.mrb[0].mxu0 %v887
  %v958 = vpop.f32.mrb[0].mxu0
  %v959 = vadd.f32 0.0, %v958
  %v960 = vpop.f32.mrb[0].mxu0
  %961 = vmatprep.mubr.f32.mxu0 0.0
  %962 = vmatmul.mubr.f32.gmra.mrb[0].mxu0 %v890
  %v963 = vpop.f32.mrb[0].mxu0
  %v964 = vadd.f32 0.0, %v963
  %v965 = vpop.f32.mrb[0].mxu0
  %966 = vdwg.mxu0
  %v967 = vld [vmem:[%s1 + $0x20] sm:$0xff]
  %v968 = vld [vmem:[%s1 + $0x28] sm:$0xff]
  %v969 = vld [vmem:[%s1 + $0x30] sm:$0xff]
  %v970 = vld [vmem:[%s1 + $0x38] sm:$0xff]
  %v971 = vld [vmem:[%s1 + $0x40] sm:$0xff]
  %v972 = vld [vmem:[%s1 + $0x48] sm:$0xff]
  %v973 = vld [vmem:[%s1 + $0x50] sm:$0xff]
  %v974 = vld [vmem:[%s1 + $0x58] sm:$0xff]
  %v975 = vld [vmem:[%s1 + $0x160] sm:$0x1]
  %v976 = vlaneseq
  %v977 = vshrl.u32 %v976, 7
  %v978 = vsub.s32 0, %v977
  %v979 = vrot.slane %v975, %v978
  %vm980 = vcmask 523264
  %v982 = vsel %vm980, %v959, 0
  %v985 = vsel %vm980, %v964, 0
  %987 = vmatprep.subr.mxu0 0.0
  %988 = vmatpush1.msra.mxu0 %v967
  %989 = vmatprep.subr.mxu0 0.0
  %990 = vmatpush1.msra.mxu0 %v968
  %991 = vmatprep.subr.mxu0 0.0
  %992 = vmatpush1.msra.mxu0 %v969
  %993 = vmatprep.subr.mxu0 0.0
  %994 = vmatpush1.msra.mxu0 %v970
  %995 = vmatprep.subr.mxu0 0.0
  %996 = vmatpush1.msra.mxu0 %v971
  %997 = vmatprep.subr.mxu0 0.0
  %998 = vmatpush1.msra.mxu0 %v972
  %999 = vmatprep.subr.mxu0 0.0
  %1000 = vmatpush1.msra.mxu0 %v973
  %1001 = vmatprep.subr.mxu0 0.0
  %1002 = vmatpush1.msra.mxu0 %v974
  %1003 = vmatprep.subr.mxu0 0.0
  %1004 = vmatpush1.msra.mxu0 0.0
  %1005 = vmatprep.subr.mxu0 0.0
  %1006 = vmatpush1.msra.mxu0 0.0
  %1007 = vmatprep.subr.mxu0 0.0
  %1008 = vmatpush1.msra.mxu0 0.0
  %1009 = vmatprep.subr.mxu0 0.0
  %1010 = vmatpush1.msra.mxu0 0.0
  %1011 = vmatprep.subr.mxu0 0.0
  %1012 = vmatpush1.msra.mxu0 0.0
  %1013 = vmatprep.subr.mxu0 0.0
  %1014 = vmatpush1.msra.mxu0 0.0
  %1015 = vmatprep.subr.mxu0 0.0
  %1016 = vmatpush1.msra.mxu0 0.0
  %1017 = vmatprep.subr.mxu0 0.0
  %1018 = vmatpush1.msra.mxu0 0.0
  %1019 = vmatprep.subr.mxu0 0.0
  %1020 = vmatpush1.msra.mxu0 0.0
  %1021 = vmatprep.subr.mxu0 0.0
  %1022 = vmatpush1.msra.mxu0 0.0
  %1023 = vmatprep.subr.mxu0 0.0
  %1024 = vmatpush1.msra.mxu0 0.0
  %1025 = vmatprep.subr.mxu0 0.0
  %1026 = vmatpush1.msra.mxu0 0.0
  %1027 = vmatprep.subr.mxu0 0.0
  %1028 = vmatpush1.msra.mxu0 0.0
  %1029 = vmatprep.subr.mxu0 0.0
  %1030 = vmatpush1.msra.mxu0 0.0
  %1031 = vmatprep.subr.mxu0 0.0
  %1032 = vmatpush1.msra.mxu0 0.0
  %1033 = vmatprep.subr.mxu0 0.0
  %1034 = vmatpush1.msra.mxu0 0.0
  %1035 = vmatprep.subr.mxu0 0.0
  %1036 = vmatpush1.msra.mxu0 0.0
  %1037 = vmatprep.subr.mxu0 0.0
  %1038 = vmatpush1.msra.mxu0 0.0
  %1039 = vmatprep.subr.mxu0 0.0
  %1040 = vmatpush1.msra.mxu0 0.0
  %1041 = vmatprep.subr.mxu0 0.0
  %1042 = vmatpush1.msra.mxu0 0.0
  %1043 = vmatprep.subr.mxu0 0.0
  %1044 = vmatpush1.msra.mxu0 0.0
  %1045 = vmatprep.subr.mxu0 0.0
  %1046 = vmatpush1.msra.mxu0 0.0
  %1047 = vmatprep.subr.mxu0 0.0
  %1048 = vmatpush1.msra.mxu0 0.0
  %1049 = vmatprep.subr.mxu0 0.0
  %1050 = vmatpush1.msra.mxu0 0.0
  %1051 = vmatprep.mubr.f32.mxu0 0.0
  %1052 = vmatmul.mubr.f32.gmra.mrb[0].mxu0 %v982
  %v1053 = vpop.f32.mrb[0].mxu0
  %v1054 = vadd.f32 %v979, %v1053
  %v1055 = vpop.f32.mrb[0].mxu0
  %1056 = vmatprep.mubr.f32.mxu0 0.0
  %1057 = vmatmul.mubr.f32.gmra.mrb[0].mxu0 %v985
  %v1058 = vpop.f32.mrb[0].mxu0
  %v1059 = vadd.f32 %v979, %v1058
  %v1060 = vpop.f32.mrb[0].mxu0
  %1061 = vdwg.mxu0
  %v1062 = vld [vmem:[%s1 + $0x60] sm:$0xff]
  %v1063 = vld [vmem:[%s1 + $0x68] sm:$0xff]
  %v1064 = vld [vmem:[%s1 + $0x70] sm:$0xff]
  %v1065 = vld [vmem:[%s1 + $0x78] sm:$0xff]
  %v1066 = vld [vmem:[%s1 + $0x80] sm:$0xff]
  %v1067 = vld [vmem:[%s1 + $0x88] sm:$0xff]
  %v1068 = vld [vmem:[%s1 + $0x90] sm:$0xff]
  %v1069 = vld [vmem:[%s1 + $0x98] sm:$0xff]
  %v1070 = vld [vmem:[%s1 + $0x161] sm:$0x1]
  %v1071 = vlaneseq
  %v1072 = vshrl.u32 %v1071, 7
  %v1073 = vsub.s32 0, %v1072
  %v1074 = vrot.slane %v1070, %v1073
  %1075 = vmatprep.subr.mxu0 0.0
  %1076 = vmatpush1.msra.mxu0 %v1062
  %1077 = vmatprep.subr.mxu0 0.0
  %1078 = vmatpush1.msra.mxu0 %v1063
  %1079 = vmatprep.subr.mxu0 0.0
  %1080 = vmatpush1.msra.mxu0 %v1064
  %1081 = vmatprep.subr.mxu0 0.0
  %1082 = vmatpush1.msra.mxu0 %v1065
  %1083 = vmatprep.subr.mxu0 0.0
  %1084 = vmatpush1.msra.mxu0 %v1066
  %1085 = vmatprep.subr.mxu0 0.0
  %1086 = vmatpush1.msra.mxu0 %v1067
  %1087 = vmatprep.subr.mxu0 0.0
  %1088 = vmatpush1.msra.mxu0 %v1068
  %1089 = vmatprep.subr.mxu0 0.0
  %1090 = vmatpush1.msra.mxu0 %v1069
  %1091 = vmatprep.subr.mxu0 0.0
  %1092 = vmatpush1.msra.mxu0 0.0
  %1093 = vmatprep.subr.mxu0 0.0
  %1094 = vmatpush1.msra.mxu0 0.0
  %1095 = vmatprep.subr.mxu0 0.0
  %1096 = vmatpush1.msra.mxu0 0.0
  %1097 = vmatprep.subr.mxu0 0.0
  %1098 = vmatpush1.msra.mxu0 0.0
  %1099 = vmatprep.subr.mxu0 0.0
  %1100 = vmatpush1.msra.mxu0 0.0
  %1101 = vmatprep.subr.mxu0 0.0
  %1102 = vmatpush1.msra.mxu0 0.0
  %1103 = vmatprep.subr.mxu0 0.0
  %1104 = vmatpush1.msra.mxu0 0.0
  %1105 = vmatprep.subr.mxu0 0.0
  %1106 = vmatpush1.msra.mxu0 0.0
  %1107 = vmatprep.subr.mxu0 0.0
  %1108 = vmatpush1.msra.mxu0 0.0
  %1109 = vmatprep.subr.mxu0 0.0
  %1110 = vmatpush1.msra.mxu0 0.0
  %1111 = vmatprep.subr.mxu0 0.0
  %1112 = vmatpush1.msra.mxu0 0.0
  %1113 = vmatprep.subr.mxu0 0.0
  %1114 = vmatpush1.msra.mxu0 0.0
  %1115 = vmatprep.subr.mxu0 0.0
  %1116 = vmatpush1.msra.mxu0 0.0
  %1117 = vmatprep.subr.mxu0 0.0
  %1118 = vmatpush1.msra.mxu0 0.0
  %1119 = vmatprep.subr.mxu0 0.0
  %1120 = vmatpush1.msra.mxu0 0.0
  %1121 = vmatprep.subr.mxu0 0.0
  %1122 = vmatpush1.msra.mxu0 0.0
  %1123 = vmatprep.subr.mxu0 0.0
  %1124 = vmatpush1.msra.mxu0 0.0
  %1125 = vmatprep.subr.mxu0 0.0
  %1126 = vmatpush1.msra.mxu0 0.0
  %1127 = vmatprep.subr.mxu0 0.0
  %1128 = vmatpush1.msra.mxu0 0.0
  %1129 = vmatprep.subr.mxu0 0.0
  %1130 = vmatpush1.msra.mxu0 0.0
  %1131 = vmatprep.subr.mxu0 0.0
  %1132 = vmatpush1.msra.mxu0 0.0
  %1133 = vmatprep.subr.mxu0 0.0
  %1134 = vmatpush1.msra.mxu0 0.0
  %1135 = vmatprep.subr.mxu0 0.0
  %1136 = vmatpush1.msra.mxu0 0.0
  %1137 = vmatprep.subr.mxu0 0.0
  %1138 = vmatpush1.msra.mxu0 0.0
  %1139 = vmatprep.mubr.f32.mxu0 0.0
  %1140 = vmatmul.mubr.f32.gmra.mrb[0].mxu0 %v982
  %v1141 = vpop.f32.mrb[0].mxu0
  %v1142 = vadd.f32 %v1074, %v1141
  %v1143 = vpop.f32.mrb[0].mxu0
  %1144 = vmatprep.mubr.f32.mxu0 0.0
  %1145 = vmatmul.mubr.f32.gmra.mrb[0].mxu0 %v985
  %v1146 = vpop.f32.mrb[0].mxu0
  %v1147 = vadd.f32 %v1074, %v1146
  %v1148 = vpop.f32.mrb[0].mxu0
  %1149 = vdwg.mxu0
  %v1150 = vld [vmem:[%s1 + $0xa0] sm:$0xff]
  %v1151 = vld [vmem:[%s1 + $0xa8] sm:$0xff]
  %v1152 = vld [vmem:[%s1 + $0xb0] sm:$0xff]
  %v1153 = vld [vmem:[%s1 + $0xb8] sm:$0xff]
  %v1154 = vld [vmem:[%s1 + $0xc0] sm:$0xff]
  %v1155 = vld [vmem:[%s1 + $0xc8] sm:$0xff]
  %v1156 = vld [vmem:[%s1 + $0xd0] sm:$0xff]
  %v1157 = vld [vmem:[%s1 + $0xd8] sm:$0xff]
  %v1158 = vld [vmem:[%s1 + $0x162] sm:$0x1]
  %v1159 = vlaneseq
  %v1160 = vshrl.u32 %v1159, 7
  %v1161 = vsub.s32 0, %v1160
  %v1162 = vrot.slane %v1158, %v1161
  %1163 = vmatprep.subr.mxu0 0.0
  %1164 = vmatpush1.msra.mxu0 %v1150
  %1165 = vmatprep.subr.mxu0 0.0
  %1166 = vmatpush1.msra.mxu0 %v1151
  %1167 = vmatprep.subr.mxu0 0.0
  %1168 = vmatpush1.msra.mxu0 %v1152
  %1169 = vmatprep.subr.mxu0 0.0
  %1170 = vmatpush1.msra.mxu0 %v1153
  %1171 = vmatprep.subr.mxu0 0.0
  %1172 = vmatpush1.msra.mxu0 %v1154
  %1173 = vmatprep.subr.mxu0 0.0
  %1174 = vmatpush1.msra.mxu0 %v1155
  %1175 = vmatprep.subr.mxu0 0.0
  %1176 = vmatpush1.msra.mxu0 %v1156
  %1177 = vmatprep.subr.mxu0 0.0
  %1178 = vmatpush1.msra.mxu0 %v1157
  %1179 = vmatprep.subr.mxu0 0.0
  %1180 = vmatpush1.msra.mxu0 0.0
  %1181 = vmatprep.subr.mxu0 0.0
  %1182 = vmatpush1.msra.mxu0 0.0
  %1183 = vmatprep.subr.mxu0 0.0
  %1184 = vmatpush1.msra.mxu0 0.0
  %1185 = vmatprep.subr.mxu0 0.0
  %1186 = vmatpush1.msra.mxu0 0.0
  %1187 = vmatprep.subr.mxu0 0.0
  %1188 = vmatpush1.msra.mxu0 0.0
  %1189 = vmatprep.subr.mxu0 0.0
  %1190 = vmatpush1.msra.mxu0 0.0
  %1191 = vmatprep.subr.mxu0 0.0
  %1192 = vmatpush1.msra.mxu0 0.0
  %1193 = vmatprep.subr.mxu0 0.0
  %1194 = vmatpush1.msra.mxu0 0.0
  %1195 = vmatprep.subr.mxu0 0.0
  %1196 = vmatpush1.msra.mxu0 0.0
  %1197 = vmatprep.subr.mxu0 0.0
  %1198 = vmatpush1.msra.mxu0 0.0
  %1199 = vmatprep.subr.mxu0 0.0
  %1200 = vmatpush1.msra.mxu0 0.0
  %1201 = vmatprep.subr.mxu0 0.0
  %1202 = vmatpush1.msra.mxu0 0.0
  %1203 = vmatprep.subr.mxu0 0.0
  %1204 = vmatpush1.msra.mxu0 0.0
  %1205 = vmatprep.subr.mxu0 0.0
  %1206 = vmatpush1.msra.mxu0 0.0
  %1207 = vmatprep.subr.mxu0 0.0
  %1208 = vmatpush1.msra.mxu0 0.0
  %1209 = vmatprep.subr.mxu0 0.0
  %1210 = vmatpush1.msra.mxu0 0.0
  %1211 = vmatprep.subr.mxu0 0.0
  %1212 = vmatpush1.msra.mxu0 0.0
  %1213 = vmatprep.subr.mxu0 0.0
  %1214 = vmatpush1.msra.mxu0 0.0
  %1215 = vmatprep.subr.mxu0 0.0
  %1216 = vmatpush1.msra.mxu0 0.0
  %1217 = vmatprep.subr.mxu0 0.0
  %1218 = vmatpush1.msra.mxu0 0.0
  %1219 = vmatprep.subr.mxu0 0.0
  %1220 = vmatpush1.msra.mxu0 0.0
  %1221 = vmatprep.subr.mxu0 0.0
  %1222 = vmatpush1.msra.mxu0 0.0
  %1223 = vmatprep.subr.mxu0 0.0
  %1224 = vmatpush1.msra.mxu0 0.0
  %1225 = vmatprep.subr.mxu0 0.0
  %1226 = vmatpush1.msra.mxu0 0.0
  %1227 = vmatprep.mubr.f32.mxu0 0.0
  %1228 = vmatmul.mubr.f32.gmra.mrb[0].mxu0 %v982
  %v1229 = vpop.f32.mrb[0].mxu0
  %v1230 = vadd.f32 %v1162, %v1229
  %v1231 = vpop.f32.mrb[0].mxu0
  %1232 = vmatprep.mubr.f32.mxu0 0.0
  %1233 = vmatmul.mubr.f32.gmra.mrb[0].mxu0 %v985
  %v1234 = vpop.f32.mrb[0].mxu0
  %v1235 = vadd.f32 %v1162, %v1234
  %v1236 = vpop.f32.mrb[0].mxu0
  %1237 = vdwg.mxu0
  %v1238 = vld [vmem:[%s1 + $0x120] sm:$0xff]
  %v1239 = vld [vmem:[%s1 + $0x128] sm:$0xff]
  %v1240 = vld [vmem:[%s1 + $0x130] sm:$0xff]
  %v1241 = vld [vmem:[%s1 + $0x138] sm:$0xff]
  %v1242 = vld [vmem:[%s1 + $0x140] sm:$0xff]
  %v1243 = vld [vmem:[%s1 + $0x148] sm:$0xff]
  %v1244 = vld [vmem:[%s1 + $0x150] sm:$0xff]
  %v1245 = vld [vmem:[%s1 + $0x158] sm:$0xff]
  %v1246 = vmul.f32 %v1054, %v1142
  %v1247 = vmul.f32 %v1059, %v1147
  %v1248 = vmul.f32 %v1054, %v1147
  %v1249 = vmul.f32 %v1059, %v1142
  %v1251 = vsel %vm980, %v1246, 0
  %v1254 = vsel %vm980, %v1247, 0
  %v1257 = vsel %vm980, %v1248, 0
  %v1260 = vsel %vm980, %v1249, 0
  %1262 = vmatprep.subr.mxu0 0.0
  %1263 = vmatpush1.msra.mxu0 %v1238
  %1264 = vmatprep.subr.mxu0 0.0
  %1265 = vmatpush1.msra.mxu0 %v1239
  %1266 = vmatprep.subr.mxu0 0.0
  %1267 = vmatpush1.msra.mxu0 %v1240
  %1268 = vmatprep.subr.mxu0 0.0
  %1269 = vmatpush1.msra.mxu0 %v1241
  %1270 = vmatprep.subr.mxu0 0.0
  %1271 = vmatpush1.msra.mxu0 %v1242
  %1272 = vmatprep.subr.mxu0 0.0
  %1273 = vmatpush1.msra.mxu0 %v1243
  %1274 = vmatprep.subr.mxu0 0.0
  %1275 = vmatpush1.msra.mxu0 %v1244
  %1276 = vmatprep.subr.mxu0 0.0
  %1277 = vmatpush1.msra.mxu0 %v1245
  %1278 = vmatprep.subr.mxu0 0.0
  %1279 = vmatpush1.msra.mxu0 0.0
  %1280 = vmatprep.subr.mxu0 0.0
  %1281 = vmatpush1.msra.mxu0 0.0
  %1282 = vmatprep.subr.mxu0 0.0
  %1283 = vmatpush1.msra.mxu0 0.0
  %1284 = vmatprep.subr.mxu0 0.0
  %1285 = vmatpush1.msra.mxu0 0.0
  %1286 = vmatprep.subr.mxu0 0.0
  %1287 = vmatpush1.msra.mxu0 0.0
  %1288 = vmatprep.subr.mxu0 0.0
  %1289 = vmatpush1.msra.mxu0 0.0
  %1290 = vmatprep.subr.mxu0 0.0
  %1291 = vmatpush1.msra.mxu0 0.0
  %1292 = vmatprep.subr.mxu0 0.0
  %1293 = vmatpush1.msra.mxu0 0.0
  %1294 = vmatprep.subr.mxu0 0.0
  %1295 = vmatpush1.msra.mxu0 0.0
  %1296 = vmatprep.subr.mxu0 0.0
  %1297 = vmatpush1.msra.mxu0 0.0
  %1298 = vmatprep.subr.mxu0 0.0
  %1299 = vmatpush1.msra.mxu0 0.0
  %1300 = vmatprep.subr.mxu0 0.0
  %1301 = vmatpush1.msra.mxu0 0.0
  %1302 = vmatprep.subr.mxu0 0.0
  %1303 = vmatpush1.msra.mxu0 0.0
  %1304 = vmatprep.subr.mxu0 0.0
  %1305 = vmatpush1.msra.mxu0 0.0
  %1306 = vmatprep.subr.mxu0 0.0
  %1307 = vmatpush1.msra.mxu0 0.0
  %1308 = vmatprep.subr.mxu0 0.0
  %1309 = vmatpush1.msra.mxu0 0.0
  %1310 = vmatprep.subr.mxu0 0.0
  %1311 = vmatpush1.msra.mxu0 0.0
  %1312 = vmatprep.subr.mxu0 0.0
  %1313 = vmatpush1.msra.mxu0 0.0
  %1314 = vmatprep.subr.mxu0 0.0
  %1315 = vmatpush1.msra.mxu0 0.0
  %1316 = vmatprep.subr.mxu0 0.0
  %1317 = vmatpush1.msra.mxu0 0.0
  %1318 = vmatprep.subr.mxu0 0.0
  %1319 = vmatpush1.msra.mxu0 0.0
  %1320 = vmatprep.subr.mxu0 0.0
  %1321 = vmatpush1.msra.mxu0 0.0
  %1322 = vmatprep.subr.mxu0 0.0
  %1323 = vmatpush1.msra.mxu0 0.0
  %1324 = vmatprep.subr.mxu0 0.0
  %1325 = vmatpush1.msra.mxu0 0.0
  %1326 = vmatprep.mubr.f32.mxu0 0.0
  %1327 = vmatmul.mubr.f32.gmra.mrb[0].mxu0 %v1251
  %v1328 = vpop.f32.mrb[0].mxu0
  %v1329 = vadd.f32 0.0, %v1328
  %v1330 = vpop.f32.mrb[0].mxu0
  %1331 = vmatprep.mubr.f32.mxu0 0.0
  %1332 = vmatmul.mubr.f32.gmra.mrb[0].mxu0 %v1254
  %v1333 = vpop.f32.mrb[0].mxu0
  %v1334 = vadd.f32 0.0, %v1333
  %v1335 = vpop.f32.mrb[0].mxu0
  %1336 = vmatprep.mubr.f32.mxu0 0.0
  %1337 = vmatmul.mubr.f32.gmra.mrb[0].mxu0 %v1257
  %v1338 = vpop.f32.mrb[0].mxu0
  %v1339 = vadd.f32 0.0, %v1338
  %v1340 = vpop.f32.mrb[0].mxu0
  %1341 = vmatprep.mubr.f32.mxu0 0.0
  %1342 = vmatmul.mubr.f32.gmra.mrb[0].mxu0 %v1260
  %v1343 = vpop.f32.mrb[0].mxu0
  %v1344 = vadd.f32 0.0, %v1343
  %v1345 = vpop.f32.mrb[0].mxu0
  %1346 = vdwg.mxu0
  %v1347 = vmax.f32 %v1329, %v1339
  %v1348 = vmax.f32 %v1334, %v1344
  %v1349 = vsub.f32 %v1329, %v1347
  %v1350 = vsub.f32 %v1334, %v1348
  %v1351 = vmul.f32 %v1349, 1.442695
  %v1352 = vpow.pop %v1351
  %v1353 = vmul.f32 %v1350, 1.442695
  %v1354 = vpow.pop %v1353
  %v1355 = vsub.f32 %v1339, %v1347
  %v1356 = vsub.f32 %v1344, %v1348
  %v1357 = vmul.f32 %v1355, 1.442695
  %v1358 = vpow.pop %v1357
  %v1359 = vmul.f32 %v1356, 1.442695
  %v1360 = vpow.pop %v1359
  %v1361 = vadd.f32 %v1352, %v1358
  %v1362 = vadd.f32 %v1354, %v1360
  %v1363 = vrcp.pop %v1361
  %v1364 = vrcp.pop %v1362
  %v1365 = vmul.f32 %v1352, %v1230
  %v1366 = vmul.f32 %v1354, %v1235
  %v1367 = vmul.f32 %v1358, %v1235
  %v1368 = vmul.f32 %v1360, %v1230
  %v1369 = vadd.f32 %v1365, %v1367
  %v1370 = vadd.f32 %v1366, %v1368
  %v1371 = vmul.f32 %v1369, %v1363
  %v1372 = vmul.f32 %v1370, %v1364
  %v1373 = vld [vmem:[%s1 + $0xe0] sm:$0xff]
  %v1374 = vld [vmem:[%s1 + $0xe8] sm:$0xff]
  %v1375 = vld [vmem:[%s1 + $0xf0] sm:$0xff]
  %v1376 = vld [vmem:[%s1 + $0xf8] sm:$0xff]
  %v1377 = vld [vmem:[%s1 + $0x100] sm:$0xff]
  %v1378 = vld [vmem:[%s1 + $0x108] sm:$0xff]
  %v1379 = vld [vmem:[%s1 + $0x110] sm:$0xff]
  %v1380 = vld [vmem:[%s1 + $0x118] sm:$0xff]
  %v1381 = vld [vmem:[%s1 + $0x163] sm:$0x1]
  %v1382 = vlaneseq
  %v1383 = vshrl.u32 %v1382, 7
  %v1384 = vsub.s32 0, %v1383
  %v1385 = vrot.slane %v1381, %v1384
  %v1387 = vsel %vm980, %v1371, 0
  %v1390 = vsel %vm980, %v1372, 0
  %1392 = vmatprep.subr.mxu0 0.0
  %1393 = vmatpush1.msra.mxu0 %v1373
  %1394 = vmatprep.subr.mxu0 0.0
  %1395 = vmatpush1.msra.mxu0 %v1374
  %1396 = vmatprep.subr.mxu0 0.0
  %1397 = vmatpush1.msra.mxu0 %v1375
  %1398 = vmatprep.subr.mxu0 0.0
  %1399 = vmatpush1.msra.mxu0 %v1376
  %1400 = vmatprep.subr.mxu0 0.0
  %1401 = vmatpush1.msra.mxu0 %v1377
  %1402 = vmatprep.subr.mxu0 0.0
  %1403 = vmatpush1.msra.mxu0 %v1378
  %1404 = vmatprep.subr.mxu0 0.0
  %1405 = vmatpush1.msra.mxu0 %v1379
  %1406 = vmatprep.subr.mxu0 0.0
  %1407 = vmatpush1.msra.mxu0 %v1380
  %1408 = vmatprep.subr.mxu0 0.0
  %1409 = vmatpush1.msra.mxu0 0.0
  %1410 = vmatprep.subr.mxu0 0.0
  %1411 = vmatpush1.msra.mxu0 0.0
  %1412 = vmatprep.subr.mxu0 0.0
  %1413 = vmatpush1.msra.mxu0 0.0
  %1414 = vmatprep.subr.mxu0 0.0
  %1415 = vmatpush1.msra.mxu0 0.0
  %1416 = vmatprep.subr.mxu0 0.0
  %1417 = vmatpush1.msra.mxu0 0.0
  %1418 = vmatprep.subr.mxu0 0.0
  %1419 = vmatpush1.msra.mxu0 0.0
  %1420 = vmatprep.subr.mxu0 0.0
  %1421 = vmatpush1.msra.mxu0 0.0
  %1422 = vmatprep.subr.mxu0 0.0
  %1423 = vmatpush1.msra.mxu0 0.0
  %1424 = vmatprep.subr.mxu0 0.0
  %1425 = vmatpush1.msra.mxu0 0.0
  %1426 = vmatprep.subr.mxu0 0.0
  %1427 = vmatpush1.msra.mxu0 0.0
  %1428 = vmatprep.subr.mxu0 0.0
  %1429 = vmatpush1.msra.mxu0 0.0
  %1430 = vmatprep.subr.mxu0 0.0
  %1431 = vmatpush1.msra.mxu0 0.0
  %1432 = vmatprep.subr.mxu0 0.0
  %1433 = vmatpush1.msra.mxu0 0.0
  %1434 = vmatprep.subr.mxu0 0.0
  %1435 = vmatpush1.msra.mxu0 0.0
  %1436 = vmatprep.subr.mxu0 0.0
  %1437 = vmatpush1.msra.mxu0 0.0
  %1438 = vmatprep.subr.mxu0 0.0
  %1439 = vmatpush1.msra.mxu0 0.0
  %1440 = vmatprep.subr.mxu0 0.0
  %1441 = vmatpush1.msra.mxu0 0.0
  %1442 = vmatprep.subr.mxu0 0.0
  %1443 = vmatpush1.msra.mxu0 0.0
  %1444 = vmatprep.subr.mxu0 0.0
  %1445 = vmatpush1.msra.mxu0 0.0
  %1446 = vmatprep.subr.mxu0 0.0
  %1447 = vmatpush1.msra.mxu0 0.0
  %1448 = vmatprep.subr.mxu0 0.0
  %1449 = vmatpush1.msra.mxu0 0.0
  %1450 = vmatprep.subr.mxu0 0.0
  %1451 = vmatpush1.msra.mxu0 0.0
  %1452 = vmatprep.subr.mxu0 0.0
  %1453 = vmatpush1.msra.mxu0 0.0
  %1454 = vmatprep.subr.mxu0 0.0
  %1455 = vmatpush1.msra.mxu0 0.0
  %1456 = vmatprep.mubr.f32.mxu0 0.0
  %1457 = vmatmul.mubr.f32.gmra.mrb[0].mxu0 %v1387
  %v1458 = vpop.f32.mrb[0].mxu0
  %v1459 = vadd.f32 %v1385, %v1458
  %v1460 = vpop.f32.mrb[0].mxu0
  %1461 = vmatprep.mubr.f32.mxu0 0.0
  %1462 = vmatmul.mubr.f32.gmra.mrb[0].mxu0 %v1390
  %v1463 = vpop.f32.mrb[0].mxu0
  %v1464 = vadd.f32 %v1385, %v1463
  %v1465 = vpop.f32.mrb[0].mxu0
  %1466 = vdwg.mxu0
  %v1467 = vadd.f32 %v959, %v1459
  %v1468 = vadd.f32 %v964, %v1464
  %v1469 = vsel %vm980, %v1467, 0.0
  %1470 = vadd.xlane.f32.xlu0 %v1469
  %v1471 = vpop.xlane.xlu0 %1470
  %v1472 = vsel %vm980, %v1468, 0.0
  %1473 = vadd.xlane.f32.xlu0 %v1472
  %v1474 = vpop.xlane.xlu0 %1473
  %v1475 = vrcp.pop 64.0
  %v1476 = vmul.f32 %v1471, %v1475
  %v1477 = vmul.f32 %v1474, %v1475
  %v1478 = vsub.f32 %v1467, %v1476
  %v1479 = vsub.f32 %v1468, %v1477
  %v1480 = vmul.f32 %v1478, %v1478
  %v1481 = vmul.f32 %v1479, %v1479
  %v1482 = vsel %vm980, %v1480, 0.0
  %1483 = vadd.xlane.f32.xlu0 %v1482
  %v1484 = vpop.xlane.xlu0 %1483
  %v1485 = vsel %vm980, %v1481, 0.0
  %1486 = vadd.xlane.f32.xlu0 %v1485
  %v1487 = vpop.xlane.xlu0 %1486
  %v1488 = vmul.f32 %v1484, %v1475
  %v1489 = vmul.f32 %v1487, %v1475
  %v1490 = vadd.f32 %v1488, 1e-05
  %v1491 = vadd.f32 %v1489, 1e-05
  %v1492 = vrsqrt.pop %v1490
  %v1493 = vrsqrt.pop %v1491
  %v1494 = vmul.f32 %v1478, %v1492
  %v1495 = vmul.f32 %v1479, %v1493
  %v1496 = vld [vmem:[%s1 + $0x164] sm:$0x1]
  %v1497 = vlaneseq
  %v1498 = vshrl.u32 %v1497, 7
  %v1499 = vsub.s32 0, %v1498
  %v1500 = vrot.slane %v1496, %v1499
  %v1501 = vmul.f32 %v1494, %v1500
  %v1502 = vmul.f32 %v1495, %v1500
  %v1503 = vld [vmem:[%s1 + $0x165] sm:$0x1]
  %v1504 = vlaneseq
  %v1505 = vshrl.u32 %v1504, 7
  %v1506 = vsub.s32 0, %v1505
  %v1507 = vrot.slane %v1503, %v1506
  %v1508 = vadd.f32 %v1501, %v1507
  %v1509 = vadd.f32 %v1502, %v1507
  %s1510 = smul.u32 8, 8
  %s1511 = smul.u32 %s1510, 16
  %s1512 = sshll.u32 %s1511, 4
  %1513 = dma.done [#allocation4], %s1512
  %v1514 = vld [vmem:[#allocation2] sm:$0xff]
  %v1515 = vld [vmem:[#allocation2 + $0x8] sm:$0xff]
  %v1516 = vld [vmem:[#allocation2 + $0x10] sm:$0xff]
  %v1517 = vld [vmem:[#allocation2 + $0x18] sm:$0xff]
  %v1518 = vld [vmem:[#allocation2 + $0x20] sm:$0xff]
  %v1519 = vld [vmem:[#allocation2 + $0x28] sm:$0xff]
  %v1520 = vld [vmem:[#allocation2 + $0x30] sm:$0xff]
  %v1521 = vld [vmem:[#allocation2 + $0x38] sm:$0xff]
  %v1522 = vld [vmem:[#allocation2 + $0x40] sm:$0xff]
  %v1523 = vld [vmem:[#allocation2 + $0x48] sm:$0xff]
  %v1524 = vld [vmem:[#allocation2 + $0x50] sm:$0xff]
  %v1525 = vld [vmem:[#allocation2 + $0x58] sm:$0xff]
  %v1526 = vld [vmem:[#allocation2 + $0x60] sm:$0xff]
  %v1527 = vld [vmem:[#allocation2 + $0x68] sm:$0xff]
  %v1528 = vld [vmem:[#allocation2 + $0x70] sm:$0xff]
  %v1529 = vld [vmem:[#allocation2 + $0x78] sm:$0xff]
  %v1530 = vld [vmem:[#allocation2 + $0x80] sm:$0xff]
  %v1531 = vld [vmem:[#allocation2 + $0x88] sm:$0xff]
  %v1532 = vld [vmem:[#allocation2 + $0x90] sm:$0xff]
  %v1533 = vld [vmem:[#allocation2 + $0x98] sm:$0xff]
  %v1534 = vld [vmem:[#allocation2 + $0xa0] sm:$0xff]
  %v1535 = vld [vmem:[#allocation2 + $0xa8] sm:$0xff]
  %v1536 = vld [vmem:[#allocation2 + $0xb0] sm:$0xff]
  %v1537 = vld [vmem:[#allocation2 + $0xb8] sm:$0xff]
  %v1538 = vld [vmem:[#allocation2 + $0xc0] sm:$0xff]
  %v1539 = vld [vmem:[#allocation2 + $0xc8] sm:$0xff]
  %v1540 = vld [vmem:[#allocation2 + $0xd0] sm:$0xff]
  %v1541 = vld [vmem:[#allocation2 + $0xd8] sm:$0xff]
  %v1542 = vld [vmem:[#allocation2 + $0xe0] sm:$0xff]
  %v1543 = vld [vmem:[#allocation2 + $0xe8] sm:$0xff]
  %v1544 = vld [vmem:[#allocation2 + $0xf0] sm:$0xff]
  %v1545 = vld [vmem:[#allocation2 + $0xf8] sm:$0xff]
  %v1546 = vld [vmem:[#allocation2 + $0x100] sm:$0xff]
  %v1547 = vld [vmem:[#allocation2 + $0x108] sm:$0xff]
  %v1548 = vld [vmem:[#allocation2 + $0x110] sm:$0xff]
  %v1549 = vld [vmem:[#allocation2 + $0x118] sm:$0xff]
  %v1550 = vld [vmem:[#allocation2 + $0x120] sm:$0xff]
  %v1551 = vld [vmem:[#allocation2 + $0x128] sm:$0xff]
  %v1552 = vld [vmem:[#allocation2 + $0x130] sm:$0xff]
  %v1553 = vld [vmem:[#allocation2 + $0x138] sm:$0xff]
  %v1554 = vld [vmem:[#allocation2 + $0x140] sm:$0xff]
  %v1555 = vld [vmem:[#allocation2 + $0x148] sm:$0xff]
  %v1556 = vld [vmem:[#allocation2 + $0x150] sm:$0xff]
  %v1557 = vld [vmem:[#allocation2 + $0x158] sm:$0xff]
  %v1558 = vld [vmem:[#allocation2 + $0x160] sm:$0xff]
  %v1559 = vld [vmem:[#allocation2 + $0x168] sm:$0xff]
  %v1560 = vld [vmem:[#allocation2 + $0x170] sm:$0xff]
  %v1561 = vld [vmem:[#allocation2 + $0x178] sm:$0xff]
  %v1562 = vld [vmem:[#allocation2 + $0x180] sm:$0xff]
  %v1563 = vld [vmem:[#allocation2 + $0x188] sm:$0xff]
  %v1564 = vld [vmem:[#allocation2 + $0x190] sm:$0xff]
  %v1565 = vld [vmem:[#allocation2 + $0x198] sm:$0xff]
  %v1566 = vld [vmem:[#allocation2 + $0x1a0] sm:$0xff]
  %v1567 = vld [vmem:[#allocation2 + $0x1a8] sm:$0xff]
  %v1568 = vld [vmem:[#allocation2 + $0x1b0] sm:$0xff]
  %v1569 = vld [vmem:[#allocation2 + $0x1b8] sm:$0xff]
  %v1570 = vld [vmem:[#allocation2 + $0x1c0] sm:$0xff]
  %v1571 = vld [vmem:[#allocation2 + $0x1c8] sm:$0xff]
  %v1572 = vld [vmem:[#allocation2 + $0x1d0] sm:$0xff]
  %v1573 = vld [vmem:[#allocation2 + $0x1d8] sm:$0xff]
  %v1574 = vld [vmem:[#allocation2 + $0x1e0] sm:$0xff]
  %v1575 = vld [vmem:[#allocation2 + $0x1e8] sm:$0xff]
  %v1576 = vld [vmem:[#allocation2 + $0x1f0] sm:$0xff]
  %v1577 = vld [vmem:[#allocation2 + $0x1f8] sm:$0xff]
  %v1578 = vld [vmem:[#allocation2 + $0x200] sm:$0xff]
  %v1579 = vld [vmem:[#allocation2 + $0x208] sm:$0xff]
  %v1580 = vld [vmem:[#allocation2 + $0x210] sm:$0xff]
  %v1581 = vld [vmem:[#allocation2 + $0x218] sm:$0xff]
  %v1582 = vld [vmem:[#allocation2 + $0x220] sm:$0xff]
  %v1583 = vld [vmem:[#allocation2 + $0x228] sm:$0xff]
  %v1584 = vld [vmem:[#allocation2 + $0x230] sm:$0xff]
  %v1585 = vld [vmem:[#allocation2 + $0x238] sm:$0xff]
  %v1586 = vld [vmem:[#allocation2 + $0x240] sm:$0xff]
  %v1587 = vld [vmem:[#allocation2 + $0x248] sm:$0xff]
  %v1588 = vld [vmem:[#allocation2 + $0x250] sm:$0xff]
  %v1589 = vld [vmem:[#allocation2 + $0x258] sm:$0xff]
  %v1590 = vld [vmem:[#allocation2 + $0x260] sm:$0xff]
  %v1591 = vld [vmem:[#allocation2 + $0x268] sm:$0xff]
  %v1592 = vld [vmem:[#allocation2 + $0x270] sm:$0xff]
  %v1593 = vld [vmem:[#allocation2 + $0x278] sm:$0xff]
  %v1594 = vld [vmem:[#allocation2 + $0x280] sm:$0xff]
  %v1595 = vld [vmem:[#allocation2 + $0x288] sm:$0xff]
  %v1596 = vld [vmem:[#allocation2 + $0x290] sm:$0xff]
  %v1597 = vld [vmem:[#allocation2 + $0x298] sm:$0xff]
  %v1598 = vld [vmem:[#allocation2 + $0x2a0] sm:$0xff]
  %v1599 = vld [vmem:[#allocation2 + $0x2a8] sm:$0xff]
  %v1600 = vld [vmem:[#allocation2 + $0x2b0] sm:$0xff]
  %v1601 = vld [vmem:[#allocation2 + $0x2b8] sm:$0xff]
  %v1602 = vld [vmem:[#allocation2 + $0x2c0] sm:$0xff]
  %v1603 = vld [vmem:[#allocation2 + $0x2c8] sm:$0xff]
  %v1604 = vld [vmem:[#allocation2 + $0x2d0] sm:$0xff]
  %v1605 = vld [vmem:[#allocation2 + $0x2d8] sm:$0xff]
  %v1606 = vld [vmem:[#allocation2 + $0x2e0] sm:$0xff]
  %v1607 = vld [vmem:[#allocation2 + $0x2e8] sm:$0xff]
  %v1608 = vld [vmem:[#allocation2 + $0x2f0] sm:$0xff]
  %v1609 = vld [vmem:[#allocation2 + $0x2f8] sm:$0xff]
  %v1610 = vld [vmem:[#allocation2 + $0x300] sm:$0xff]
  %v1611 = vld [vmem:[#allocation2 + $0x308] sm:$0xff]
  %v1612 = vld [vmem:[#allocation2 + $0x310] sm:$0xff]
  %v1613 = vld [vmem:[#allocation2 + $0x318] sm:$0xff]
  %v1614 = vld [vmem:[#allocation2 + $0x320] sm:$0xff]
  %v1615 = vld [vmem:[#allocation2 + $0x328] sm:$0xff]
  %v1616 = vld [vmem:[#allocation2 + $0x330] sm:$0xff]
  %v1617 = vld [vmem:[#allocation2 + $0x338] sm:$0xff]
  %v1618 = vld [vmem:[#allocation2 + $0x340] sm:$0xff]
  %v1619 = vld [vmem:[#allocation2 + $0x348] sm:$0xff]
  %v1620 = vld [vmem:[#allocation2 + $0x350] sm:$0xff]
  %v1621 = vld [vmem:[#allocation2 + $0x358] sm:$0xff]
  %v1622 = vld [vmem:[#allocation2 + $0x360] sm:$0xff]
  %v1623 = vld [vmem:[#allocation2 + $0x368] sm:$0xff]
  %v1624 = vld [vmem:[#allocation2 + $0x370] sm:$0xff]
  %v1625 = vld [vmem:[#allocation2 + $0x378] sm:$0xff]
  %v1626 = vld [vmem:[#allocation2 + $0x380] sm:$0xff]
  %v1627 = vld [vmem:[#allocation2 + $0x388] sm:$0xff]
  %v1628 = vld [vmem:[#allocation2 + $0x390] sm:$0xff]
  %v1629 = vld [vmem:[#allocation2 + $0x398] sm:$0xff]
  %v1630 = vld [vmem:[#allocation2 + $0x3a0] sm:$0xff]
  %v1631 = vld [vmem:[#allocation2 + $0x3a8] sm:$0xff]
  %v1632 = vld [vmem:[#allocation2 + $0x3b0] sm:$0xff]
  %v1633 = vld [vmem:[#allocation2 + $0x3b8] sm:$0xff]
  %v1634 = vld [vmem:[#allocation2 + $0x3c0] sm:$0xff]
  %v1635 = vld [vmem:[#allocation2 + $0x3c8] sm:$0xff]
  %v1636 = vld [vmem:[#allocation2 + $0x3d0] sm:$0xff]
  %v1637 = vld [vmem:[#allocation2 + $0x3d8] sm:$0xff]
  %v1638 = vld [vmem:[#allocation2 + $0x3e0] sm:$0xff]
  %v1639 = vld [vmem:[#allocation2 + $0x3e8] sm:$0xff]
  %v1640 = vld [vmem:[#allocation2 + $0x3f0] sm:$0xff]
  %v1641 = vld [vmem:[#allocation2 + $0x3f8] sm:$0xff]
  %v1642 = vld [vmem:[%s2] sm:$0xff]
  %v1643 = vld [vmem:[%s2 + $0x8] sm:$0xff]
  %v1646 = vlaneseq
  %v1647 = vshrl.u32 %v1646, 7
  %v1648 = vsub.s32 0, %v1647
  %v1649 = vrot.slane %v1642, %v1648
  %v1650 = vlaneseq
  %v1651 = vshrl.u32 %v1650, 7
  %v1652 = vsub.s32 1, %v1651
  %v1653 = vrot.slane %v1642, %v1652
  %v1654 = vlaneseq
  %v1655 = vshrl.u32 %v1654, 7
  %v1656 = vsub.s32 2, %v1655
  %v1657 = vrot.slane %v1642, %v1656
  %v1658 = vlaneseq
  %v1659 = vshrl.u32 %v1658, 7
  %v1660 = vsub.s32 3, %v1659
  %v1661 = vrot.slane %v1642, %v1660
  %v1662 = vlaneseq
  %v1663 = vshrl.u32 %v1662, 7
  %v1664 = vsub.s32 4, %v1663
  %v1665 = vrot.slane %v1642, %v1664
  %v1666 = vlaneseq
  %v1667 = vshrl.u32 %v1666, 7
  %v1668 = vsub.s32 5, %v1667
  %v1669 = vrot.slane %v1642, %v1668
  %v1670 = vlaneseq
  %v1671 = vshrl.u32 %v1670, 7
  %v1672 = vsub.s32 6, %v1671
  %v1673 = vrot.slane %v1642, %v1672
  %v1674 = vlaneseq
  %v1675 = vshrl.u32 %v1674, 7
  %v1676 = vsub.s32 7, %v1675
  %v1677 = vrot.slane %v1642, %v1676
  %v1678 = vlaneseq
  %v1679 = vshrl.u32 %v1678, 7
  %v1680 = vsub.s32 0, %v1679
  %v1681 = vrot.slane %v1643, %v1680
  %v1682 = vlaneseq
  %v1683 = vshrl.u32 %v1682, 7
  %v1684 = vsub.s32 1, %v1683
  %v1685 = vrot.slane %v1643, %v1684
  %v1686 = vlaneseq
  %v1687 = vshrl.u32 %v1686, 7
  %v1688 = vsub.s32 2, %v1687
  %v1689 = vrot.slane %v1643, %v1688
  %v1690 = vlaneseq
  %v1691 = vshrl.u32 %v1690, 7
  %v1692 = vsub.s32 3, %v1691
  %v1693 = vrot.slane %v1643, %v1692
  %v1694 = vlaneseq
  %v1695 = vshrl.u32 %v1694, 7
  %v1696 = vsub.s32 4, %v1695
  %v1697 = vrot.slane %v1643, %v1696
  %v1698 = vlaneseq
  %v1699 = vshrl.u32 %v1698, 7
  %v1700 = vsub.s32 5, %v1699
  %v1701 = vrot.slane %v1643, %v1700
  %v1702 = vlaneseq
  %v1703 = vshrl.u32 %v1702, 7
  %v1704 = vsub.s32 6, %v1703
  %v1705 = vrot.slane %v1643, %v1704
  %v1706 = vlaneseq
  %v1707 = vshrl.u32 %v1706, 7
  %v1708 = vsub.s32 7, %v1707
  %v1709 = vrot.slane %v1643, %v1708
  %v1727 = vsel %vm980, %v1508, 0
  %v1730 = vsel %vm980, %v1509, 0
  %1732 = vmatprep.subr.mxu0 %v1515
  %1733 = vmatpush1.msra.mxu0 %v1514
  %1734 = vmatprep.subr.mxu0 %v1531
  %1735 = vmatpush1.msra.mxu0 %v1530
  %1736 = vmatprep.subr.mxu0 %v1547
  %1737 = vmatpush1.msra.mxu0 %v1546
  %1738 = vmatprep.subr.mxu0 %v1563
  %1739 = vmatpush1.msra.mxu0 %v1562
  %1740 = vmatprep.subr.mxu0 %v1579
  %1741 = vmatpush1.msra.mxu0 %v1578
  %1742 = vmatprep.subr.mxu0 %v1595
  %1743 = vmatpush1.msra.mxu0 %v1594
  %1744 = vmatprep.subr.mxu0 %v1611
  %1745 = vmatpush1.msra.mxu0 %v1610
  %1746 = vmatprep.subr.mxu0 %v1627
  %1747 = vmatpush1.msra.mxu0 %v1626
  %1748 = vmatprep.subr.mxu0 0.0
  %1749 = vmatpush1.msra.mxu0 0.0
  %1750 = vmatprep.subr.mxu0 0.0
  %1751 = vmatpush1.msra.mxu0 0.0
  %1752 = vmatprep.subr.mxu0 0.0
  %1753 = vmatpush1.msra.mxu0 0.0
  %1754 = vmatprep.subr.mxu0 0.0
  %1755 = vmatpush1.msra.mxu0 0.0
  %1756 = vmatprep.subr.mxu0 0.0
  %1757 = vmatpush1.msra.mxu0 0.0
  %1758 = vmatprep.subr.mxu0 0.0
  %1759 = vmatpush1.msra.mxu0 0.0
  %1760 = vmatprep.subr.mxu0 0.0
  %1761 = vmatpush1.msra.mxu0 0.0
  %1762 = vmatprep.subr.mxu0 0.0
  %1763 = vmatpush1.msra.mxu0 0.0
  %1764 = vmatprep.subr.mxu0 0.0
  %1765 = vmatpush1.msra.mxu0 0.0
  %1766 = vmatprep.subr.mxu0 0.0
  %1767 = vmatpush1.msra.mxu0 0.0
  %1768 = vmatprep.subr.mxu0 0.0
  %1769 = vmatpush1.msra.mxu0 0.0
  %1770 = vmatprep.subr.mxu0 0.0
  %1771 = vmatpush1.msra.mxu0 0.0
  %1772 = vmatprep.subr.mxu0 0.0
  %1773 = vmatpush1.msra.mxu0 0.0
  %1774 = vmatprep.subr.mxu0 0.0
  %1775 = vmatpush1.msra.mxu0 0.0
  %1776 = vmatprep.subr.mxu0 0.0
  %1777 = vmatpush1.msra.mxu0 0.0
  %1778 = vmatprep.subr.mxu0 0.0
  %1779 = vmatpush1.msra.mxu0 0.0
  %1780 = vmatprep.subr.mxu0 0.0
  %1781 = vmatpush1.msra.mxu0 0.0
  %1782 = vmatprep.subr.mxu0 0.0
  %1783 = vmatpush1.msra.mxu0 0.0
  %1784 = vmatprep.subr.mxu0 0.0
  %1785 = vmatpush1.msra.mxu0 0.0
  %1786 = vmatprep.subr.mxu0 0.0
  %1787 = vmatpush1.msra.mxu0 0.0
  %1788 = vmatprep.subr.mxu0 0.0
  %1789 = vmatpush1.msra.mxu0 0.0
  %1790 = vmatprep.subr.mxu0 0.0
  %1791 = vmatpush1.msra.mxu0 0.0
  %1792 = vmatprep.subr.mxu0 0.0
  %1793 = vmatpush1.msra.mxu0 0.0
  %1794 = vmatprep.subr.mxu0 0.0
  %1795 = vmatpush1.msra.mxu0 0.0
  %1796 = vmatprep.mubr.f32.mxu0 0.0
  %1797 = vmatmul.mubr.f32.gmra.mrb[0].mxu0 %v1727
  %v1798 = vpop.f32.mrb[0].mxu0
  %v1799 = vadd.f32 %v1649, %v1798
  %v1800 = vpop.f32.mrb[0].mxu0
  %v1801 = vadd.f32 %v1653, %v1800
  %1802 = vmatprep.mubr.f32.mxu0 0.0
  %1803 = vmatmul.mubr.f32.gmra.mrb[0].mxu0 %v1730
  %v1804 = vpop.f32.mrb[0].mxu0
  %v1805 = vadd.f32 %v1649, %v1804
  %v1806 = vpop.f32.mrb[0].mxu0
  %v1807 = vadd.f32 %v1653, %v1806
  %1808 = vdwg.mxu0
  %1809 = vmatprep.subr.mxu0 %v1517
  %1810 = vmatpush1.msra.mxu0 %v1516
  %1811 = vmatprep.subr.mxu0 %v1533
  %1812 = vmatpush1.msra.mxu0 %v1532
  %1813 = vmatprep.subr.mxu0 %v1549
  %1814 = vmatpush1.msra.mxu0 %v1548
  %1815 = vmatprep.subr.mxu0 %v1565
  %1816 = vmatpush1.msra.mxu0 %v1564
  %1817 = vmatprep.subr.mxu0 %v1581
  %1818 = vmatpush1.msra.mxu0 %v1580
  %1819 = vmatprep.subr.mxu0 %v1597
  %1820 = vmatpush1.msra.mxu0 %v1596
  %1821 = vmatprep.subr.mxu0 %v1613
  %1822 = vmatpush1.msra.mxu0 %v1612
  %1823 = vmatprep.subr.mxu0 %v1629
  %1824 = vmatpush1.msra.mxu0 %v1628
  %1825 = vmatprep.subr.mxu0 0.0
  %1826 = vmatpush1.msra.mxu0 0.0
  %1827 = vmatprep.subr.mxu0 0.0
  %1828 = vmatpush1.msra.mxu0 0.0
  %1829 = vmatprep.subr.mxu0 0.0
  %1830 = vmatpush1.msra.mxu0 0.0
  %1831 = vmatprep.subr.mxu0 0.0
  %1832 = vmatpush1.msra.mxu0 0.0
  %1833 = vmatprep.subr.mxu0 0.0
  %1834 = vmatpush1.msra.mxu0 0.0
  %1835 = vmatprep.subr.mxu0 0.0
  %1836 = vmatpush1.msra.mxu0 0.0
  %1837 = vmatprep.subr.mxu0 0.0
  %1838 = vmatpush1.msra.mxu0 0.0
  %1839 = vmatprep.subr.mxu0 0.0
  %1840 = vmatpush1.msra.mxu0 0.0
  %1841 = vmatprep.subr.mxu0 0.0
  %1842 = vmatpush1.msra.mxu0 0.0
  %1843 = vmatprep.subr.mxu0 0.0
  %1844 = vmatpush1.msra.mxu0 0.0
  %1845 = vmatprep.subr.mxu0 0.0
  %1846 = vmatpush1.msra.mxu0 0.0
  %1847 = vmatprep.subr.mxu0 0.0
  %1848 = vmatpush1.msra.mxu0 0.0
  %1849 = vmatprep.subr.mxu0 0.0
  %1850 = vmatpush1.msra.mxu0 0.0
  %1851 = vmatprep.subr.mxu0 0.0
  %1852 = vmatpush1.msra.mxu0 0.0
  %1853 = vmatprep.subr.mxu0 0.0
  %1854 = vmatpush1.msra.mxu0 0.0
  %1855 = vmatprep.subr.mxu0 0.0
  %1856 = vmatpush1.msra.mxu0 0.0
  %1857 = vmatprep.subr.mxu0 0.0
  %1858 = vmatpush1.msra.mxu0 0.0
  %1859 = vmatprep.subr.mxu0 0.0
  %1860 = vmatpush1.msra.mxu0 0.0
  %1861 = vmatprep.subr.mxu0 0.0
  %1862 = vmatpush1.msra.mxu0 0.0
  %1863 = vmatprep.subr.mxu0 0.0
  %1864 = vmatpush1.msra.mxu0 0.0
  %1865 = vmatprep.subr.mxu0 0.0
  %1866 = vmatpush1.msra.mxu0 0.0
  %1867 = vmatprep.subr.mxu0 0.0
  %1868 = vmatpush1.msra.mxu0 0.0
  %1869 = vmatprep.subr.mxu0 0.0
  %1870 = vmatpush1.msra.mxu0 0.0
  %1871 = vmatprep.subr.mxu0 0.0
  %1872 = vmatpush1.msra.mxu0 0.0
  %1873 = vmatprep.mubr.f32.mxu0 0.0
  %1874 = vmatmul.mubr.f32.gmra.mrb[0].mxu0 %v1727
  %v1875 = vpop.f32.mrb[0].mxu0
  %v1876 = vadd.f32 %v1657, %v1875
  %v1877 = vpop.f32.mrb[0].mxu0
  %v1878 = vadd.f32 %v1661, %v1877
  %1879 = vmatprep.mubr.f32.mxu0 0.0
  %1880 = vmatmul.mubr.f32.gmra.mrb[0].mxu0 %v1730
  %v1881 = vpop.f32.mrb[0].mxu0
  %v1882 = vadd.f32 %v1657, %v1881
  %v1883 = vpop.f32.mrb[0].mxu0
  %v1884 = vadd.f32 %v1661, %v1883
  %1885 = vdwg.mxu0
  %1886 = vmatprep.subr.mxu0 %v1519
  %1887 = vmatpush1.msra.mxu0 %v1518
  %1888 = vmatprep.subr.mxu0 %v1535
  %1889 = vmatpush1.msra.mxu0 %v1534
  %1890 = vmatprep.subr.mxu0 %v1551
  %1891 = vmatpush1.msra.mxu0 %v1550
  %1892 = vmatprep.subr.mxu0 %v1567
  %1893 = vmatpush1.msra.mxu0 %v1566
  %1894 = vmatprep.subr.mxu0 %v1583
  %1895 = vmatpush1.msra.mxu0 %v1582
  %1896 = vmatprep.subr.mxu0 %v1599
  %1897 = vmatpush1.msra.mxu0 %v1598
  %1898 = vmatprep.subr.mxu0 %v1615
  %1899 = vmatpush1.msra.mxu0 %v1614
  %1900 = vmatprep.subr.mxu0 %v1631
  %1901 = vmatpush1.msra.mxu0 %v1630
  %1902 = vmatprep.subr.mxu0 0.0
  %1903 = vmatpush1.msra.mxu0 0.0
  %1904 = vmatprep.subr.mxu0 0.0
  %1905 = vmatpush1.msra.mxu0 0.0
  %1906 = vmatprep.subr.mxu0 0.0
  %1907 = vmatpush1.msra.mxu0 0.0
  %1908 = vmatprep.subr.mxu0 0.0
  %1909 = vmatpush1.msra.mxu0 0.0
  %1910 = vmatprep.subr.mxu0 0.0
  %1911 = vmatpush1.msra.mxu0 0.0
  %1912 = vmatprep.subr.mxu0 0.0
  %1913 = vmatpush1.msra.mxu0 0.0
  %1914 = vmatprep.subr.mxu0 0.0
  %1915 = vmatpush1.msra.mxu0 0.0
  %1916 = vmatprep.subr.mxu0 0.0
  %1917 = vmatpush1.msra.mxu0 0.0
  %1918 = vmatprep.subr.mxu0 0.0
  %1919 = vmatpush1.msra.mxu0 0.0
  %1920 = vmatprep.subr.mxu0 0.0
  %1921 = vmatpush1.msra.mxu0 0.0
  %1922 = vmatprep.subr.mxu0 0.0
  %1923 = vmatpush1.msra.mxu0 0.0
  %1924 = vmatprep.subr.mxu0 0.0
  %1925 = vmatpush1.msra.mxu0 0.0
  %1926 = vmatprep.subr.mxu0 0.0
  %1927 = vmatpush1.msra.mxu0 0.0
  %1928 = vmatprep.subr.mxu0 0.0
  %1929 = vmatpush1.msra.mxu0 0.0
  %1930 = vmatprep.subr.mxu0 0.0
  %1931 = vmatpush1.msra.mxu0 0.0
  %1932 = vmatprep.subr.mxu0 0.0
  %1933 = vmatpush1.msra.mxu0 0.0
  %1934 = vmatprep.subr.mxu0 0.0
  %1935 = vmatpush1.msra.mxu0 0.0
  %1936 = vmatprep.subr.mxu0 0.0
  %1937 = vmatpush1.msra.mxu0 0.0
  %1938 = vmatprep.subr.mxu0 0.0
  %1939 = vmatpush1.msra.mxu0 0.0
  %1940 = vmatprep.subr.mxu0 0.0
  %1941 = vmatpush1.msra.mxu0 0.0
  %1942 = vmatprep.subr.mxu0 0.0
  %1943 = vmatpush1.msra.mxu0 0.0
  %1944 = vmatprep.subr.mxu0 0.0
  %1945 = vmatpush1.msra.mxu0 0.0
  %1946 = vmatprep.subr.mxu0 0.0
  %1947 = vmatpush1.msra.mxu0 0.0
  %1948 = vmatprep.subr.mxu0 0.0
  %1949 = vmatpush1.msra.mxu0 0.0
  %1950 = vmatprep.mubr.f32.mxu0 0.0
  %1951 = vmatmul.mubr.f32.gmra.mrb[0].mxu0 %v1727
  %v1952 = vpop.f32.mrb[0].mxu0
  %v1953 = vadd.f32 %v1665, %v1952
  %v1954 = vpop.f32.mrb[0].mxu0
  %v1955 = vadd.f32 %v1669, %v1954
  %1956 = vmatprep.mubr.f32.mxu0 0.0
  %1957 = vmatmul.mubr.f32.gmra.mrb[0].mxu0 %v1730
  %v1958 = vpop.f32.mrb[0].mxu0
  %v1959 = vadd.f32 %v1665, %v1958
  %v1960 = vpop.f32.mrb[0].mxu0
  %v1961 = vadd.f32 %v1669, %v1960
  %1962 = vdwg.mxu0
  %1963 = vmatprep.subr.mxu0 %v1521
  %1964 = vmatpush1.msra.mxu0 %v1520
  %1965 = vmatprep.subr.mxu0 %v1537
  %1966 = vmatpush1.msra.mxu0 %v1536
  %1967 = vmatprep.subr.mxu0 %v1553
  %1968 = vmatpush1.msra.mxu0 %v1552
  %1969 = vmatprep.subr.mxu0 %v1569
  %1970 = vmatpush1.msra.mxu0 %v1568
  %1971 = vmatprep.subr.mxu0 %v1585
  %1972 = vmatpush1.msra.mxu0 %v1584
  %1973 = vmatprep.subr.mxu0 %v1601
  %1974 = vmatpush1.msra.mxu0 %v1600
  %1975 = vmatprep.subr.mxu0 %v1617
  %1976 = vmatpush1.msra.mxu0 %v1616
  %1977 = vmatprep.subr.mxu0 %v1633
  %1978 = vmatpush1.msra.mxu0 %v1632
  %1979 = vmatprep.subr.mxu0 0.0
  %1980 = vmatpush1.msra.mxu0 0.0
  %1981 = vmatprep.subr.mxu0 0.0
  %1982 = vmatpush1.msra.mxu0 0.0
  %1983 = vmatprep.subr.mxu0 0.0
  %1984 = vmatpush1.msra.mxu0 0.0
  %1985 = vmatprep.subr.mxu0 0.0
  %1986 = vmatpush1.msra.mxu0 0.0
  %1987 = vmatprep.subr.mxu0 0.0
  %1988 = vmatpush1.msra.mxu0 0.0
  %1989 = vmatprep.subr.mxu0 0.0
  %1990 = vmatpush1.msra.mxu0 0.0
  %1991 = vmatprep.subr.mxu0 0.0
  %1992 = vmatpush1.msra.mxu0 0.0
  %1993 = vmatprep.subr.mxu0 0.0
  %1994 = vmatpush1.msra.mxu0 0.0
  %1995 = vmatprep.subr.mxu0 0.0
  %1996 = vmatpush1.msra.mxu0 0.0
  %1997 = vmatprep.subr.mxu0 0.0
  %1998 = vmatpush1.msra.mxu0 0.0
  %1999 = vmatprep.subr.mxu0 0.0
  %2000 = vmatpush1.msra.mxu0 0.0
  %2001 = vmatprep.subr.mxu0 0.0
  %2002 = vmatpush1.msra.mxu0 0.0
  %2003 = vmatprep.subr.mxu0 0.0
  %2004 = vmatpush1.msra.mxu0 0.0
  %2005 = vmatprep.subr.mxu0 0.0
  %2006 = vmatpush1.msra.mxu0 0.0
  %2007 = vmatprep.subr.mxu0 0.0
  %2008 = vmatpush1.msra.mxu0 0.0
  %2009 = vmatprep.subr.mxu0 0.0
  %2010 = vmatpush1.msra.mxu0 0.0
  %2011 = vmatprep.subr.mxu0 0.0
  %2012 = vmatpush1.msra.mxu0 0.0
  %2013 = vmatprep.subr.mxu0 0.0
  %2014 = vmatpush1.msra.mxu0 0.0
  %2015 = vmatprep.subr.mxu0 0.0
  %2016 = vmatpush1.msra.mxu0 0.0
  %2017 = vmatprep.subr.mxu0 0.0
  %2018 = vmatpush1.msra.mxu0 0.0
  %2019 = vmatprep.subr.mxu0 0.0
  %2020 = vmatpush1.msra.mxu0 0.0
  %2021 = vmatprep.subr.mxu0 0.0
  %2022 = vmatpush1.msra.mxu0 0.0
  %2023 = vmatprep.subr.mxu0 0.0
  %2024 = vmatpush1.msra.mxu0 0.0
  %2025 = vmatprep.subr.mxu0 0.0
  %2026 = vmatpush1.msra.mxu0 0.0
  %2027 = vmatprep.mubr.f32.mxu0 0.0
  %2028 = vmatmul.mubr.f32.gmra.mrb[0].mxu0 %v1727
  %v2029 = vpop.f32.mrb[0].mxu0
  %v2030 = vadd.f32 %v1673, %v2029
  %v2031 = vpop.f32.mrb[0].mxu0
  %v2032 = vadd.f32 %v1677, %v2031
  %2033 = vmatprep.mubr.f32.mxu0 0.0
  %2034 = vmatmul.mubr.f32.gmra.mrb[0].mxu0 %v1730
  %v2035 = vpop.f32.mrb[0].mxu0
  %v2036 = vadd.f32 %v1673, %v2035
  %v2037 = vpop.f32.mrb[0].mxu0
  %v2038 = vadd.f32 %v1677, %v2037
  %2039 = vdwg.mxu0
  %2040 = vmatprep.subr.mxu0 %v1523
  %2041 = vmatpush1.msra.mxu0 %v1522
  %2042 = vmatprep.subr.mxu0 %v1539
  %2043 = vmatpush1.msra.mxu0 %v1538
  %2044 = vmatprep.subr.mxu0 %v1555
  %2045 = vmatpush1.msra.mxu0 %v1554
  %2046 = vmatprep.subr.mxu0 %v1571
  %2047 = vmatpush1.msra.mxu0 %v1570
  %2048 = vmatprep.subr.mxu0 %v1587
  %2049 = vmatpush1.msra.mxu0 %v1586
  %2050 = vmatprep.subr.mxu0 %v1603
  %2051 = vmatpush1.msra.mxu0 %v1602
  %2052 = vmatprep.subr.mxu0 %v1619
  %2053 = vmatpush1.msra.mxu0 %v1618
  %2054 = vmatprep.subr.mxu0 %v1635
  %2055 = vmatpush1.msra.mxu0 %v1634
  %2056 = vmatprep.subr.mxu0 0.0
  %2057 = vmatpush1.msra.mxu0 0.0
  %2058 = vmatprep.subr.mxu0 0.0
  %2059 = vmatpush1.msra.mxu0 0.0
  %2060 = vmatprep.subr.mxu0 0.0
  %2061 = vmatpush1.msra.mxu0 0.0
  %2062 = vmatprep.subr.mxu0 0.0
  %2063 = vmatpush1.msra.mxu0 0.0
  %2064 = vmatprep.subr.mxu0 0.0
  %2065 = vmatpush1.msra.mxu0 0.0
  %2066 = vmatprep.subr.mxu0 0.0
  %2067 = vmatpush1.msra.mxu0 0.0
  %2068 = vmatprep.subr.mxu0 0.0
  %2069 = vmatpush1.msra.mxu0 0.0
  %2070 = vmatprep.subr.mxu0 0.0
  %2071 = vmatpush1.msra.mxu0 0.0
  %2072 = vmatprep.subr.mxu0 0.0
  %2073 = vmatpush1.msra.mxu0 0.0
  %2074 = vmatprep.subr.mxu0 0.0
  %2075 = vmatpush1.msra.mxu0 0.0
  %2076 = vmatprep.subr.mxu0 0.0
  %2077 = vmatpush1.msra.mxu0 0.0
  %2078 = vmatprep.subr.mxu0 0.0
  %2079 = vmatpush1.msra.mxu0 0.0
  %2080 = vmatprep.subr.mxu0 0.0
  %2081 = vmatpush1.msra.mxu0 0.0
  %2082 = vmatprep.subr.mxu0 0.0
  %2083 = vmatpush1.msra.mxu0 0.0
  %2084 = vmatprep.subr.mxu0 0.0
  %2085 = vmatpush1.msra.mxu0 0.0
  %2086 = vmatprep.subr.mxu0 0.0
  %2087 = vmatpush1.msra.mxu0 0.0
  %2088 = vmatprep.subr.mxu0 0.0
  %2089 = vmatpush1.msra.mxu0 0.0
  %2090 = vmatprep.subr.mxu0 0.0
  %2091 = vmatpush1.msra.mxu0 0.0
  %2092 = vmatprep.subr.mxu0 0.0
  %2093 = vmatpush1.msra.mxu0 0.0
  %2094 = vmatprep.subr.mxu0 0.0
  %2095 = vmatpush1.msra.mxu0 0.0
  %2096 = vmatprep.subr.mxu0 0.0
  %2097 = vmatpush1.msra.mxu0 0.0
  %2098 = vmatprep.subr.mxu0 0.0
  %2099 = vmatpush1.msra.mxu0 0.0
  %2100 = vmatprep.subr.mxu0 0.0
  %2101 = vmatpush1.msra.mxu0 0.0
  %2102 = vmatprep.subr.mxu0 0.0
  %2103 = vmatpush1.msra.mxu0 0.0
  %2104 = vmatprep.mubr.f32.mxu0 0.0
  %2105 = vmatmul.mubr.f32.gmra.mrb[0].mxu0 %v1727
  %v2106 = vpop.f32.mrb[0].mxu0
  %v2107 = vadd.f32 %v1681, %v2106
  %v2108 = vpop.f32.mrb[0].mxu0
  %v2109 = vadd.f32 %v1685, %v2108
  %2110 = vmatprep.mubr.f32.mxu0 0.0
  %2111 = vmatmul.mubr.f32.gmra.mrb[0].mxu0 %v1730
  %v2112 = vpop.f32.mrb[0].mxu0
  %v2113 = vadd.f32 %v1681, %v2112
  %v2114 = vpop.f32.mrb[0].mxu0
  %v2115 = vadd.f32 %v1685, %v2114
  %2116 = vdwg.mxu0
  %2117 = vmatprep.subr.mxu0 %v1525
  %2118 = vmatpush1.msra.mxu0 %v1524
  %2119 = vmatprep.subr.mxu0 %v1541
  %2120 = vmatpush1.msra.mxu0 %v1540
  %2121 = vmatprep.subr.mxu0 %v1557
  %2122 = vmatpush1.msra.mxu0 %v1556
  %2123 = vmatprep.subr.mxu0 %v1573
  %2124 = vmatpush1.msra.mxu0 %v1572
  %2125 = vmatprep.subr.mxu0 %v1589
  %2126 = vmatpush1.msra.mxu0 %v1588
  %2127 = vmatprep.subr.mxu0 %v1605
  %2128 = vmatpush1.msra.mxu0 %v1604
  %2129 = vmatprep.subr.mxu0 %v1621
  %2130 = vmatpush1.msra.mxu0 %v1620
  %2131 = vmatprep.subr.mxu0 %v1637
  %2132 = vmatpush1.msra.mxu0 %v1636
  %2133 = vmatprep.subr.mxu0 0.0
  %2134 = vmatpush1.msra.mxu0 0.0
  %2135 = vmatprep.subr.mxu0 0.0
  %2136 = vmatpush1.msra.mxu0 0.0
  %2137 = vmatprep.subr.mxu0 0.0
  %2138 = vmatpush1.msra.mxu0 0.0
  %2139 = vmatprep.subr.mxu0 0.0
  %2140 = vmatpush1.msra.mxu0 0.0
  %2141 = vmatprep.subr.mxu0 0.0
  %2142 = vmatpush1.msra.mxu0 0.0
  %2143 = vmatprep.subr.mxu0 0.0
  %2144 = vmatpush1.msra.mxu0 0.0
  %2145 = vmatprep.subr.mxu0 0.0
  %2146 = vmatpush1.msra.mxu0 0.0
  %2147 = vmatprep.subr.mxu0 0.0
  %2148 = vmatpush1.msra.mxu0 0.0
  %2149 = vmatprep.subr.mxu0 0.0
  %2150 = vmatpush1.msra.mxu0 0.0
  %2151 = vmatprep.subr.mxu0 0.0
  %2152 = vmatpush1.msra.mxu0 0.0
  %2153 = vmatprep.subr.mxu0 0.0
  %2154 = vmatpush1.msra.mxu0 0.0
  %2155 = vmatprep.subr.mxu0 0.0
  %2156 = vmatpush1.msra.mxu0 0.0
  %2157 = vmatprep.subr.mxu0 0.0
  %2158 = vmatpush1.msra.mxu0 0.0
  %2159 = vmatprep.subr.mxu0 0.0
  %2160 = vmatpush1.msra.mxu0 0.0
  %2161 = vmatprep.subr.mxu0 0.0
  %2162 = vmatpush1.msra.mxu0 0.0
  %2163 = vmatprep.subr.mxu0 0.0
  %2164 = vmatpush1.msra.mxu0 0.0
  %2165 = vmatprep.subr.mxu0 0.0
  %2166 = vmatpush1.msra.mxu0 0.0
  %2167 = vmatprep.subr.mxu0 0.0
  %2168 = vmatpush1.msra.mxu0 0.0
  %2169 = vmatprep.subr.mxu0 0.0
  %2170 = vmatpush1.msra.mxu0 0.0
  %2171 = vmatprep.subr.mxu0 0.0
  %2172 = vmatpush1.msra.mxu0 0.0
  %2173 = vmatprep.subr.mxu0 0.0
  %2174 = vmatpush1.msra.mxu0 0.0
  %2175 = vmatprep.subr.mxu0 0.0
  %2176 = vmatpush1.msra.mxu0 0.0
  %2177 = vmatprep.subr.mxu0 0.0
  %2178 = vmatpush1.msra.mxu0 0.0
  %2179 = vmatprep.subr.mxu0 0.0
  %2180 = vmatpush1.msra.mxu0 0.0
  %2181 = vmatprep.mubr.f32.mxu0 0.0
  %2182 = vmatmul.mubr.f32.gmra.mrb[0].mxu0 %v1727
  %v2183 = vpop.f32.mrb[0].mxu0
  %v2184 = vadd.f32 %v1689, %v2183
  %v2185 = vpop.f32.mrb[0].mxu0
  %v2186 = vadd.f32 %v1693, %v2185
  %2187 = vmatprep.mubr.f32.mxu0 0.0
  %2188 = vmatmul.mubr.f32.gmra.mrb[0].mxu0 %v1730
  %v2189 = vpop.f32.mrb[0].mxu0
  %v2190 = vadd.f32 %v1689, %v2189
  %v2191 = vpop.f32.mrb[0].mxu0
  %v2192 = vadd.f32 %v1693, %v2191
  %2193 = vdwg.mxu0
  %2194 = vmatprep.subr.mxu0 %v1527
  %2195 = vmatpush1.msra.mxu0 %v1526
  %2196 = vmatprep.subr.mxu0 %v1543
  %2197 = vmatpush1.msra.mxu0 %v1542
  %2198 = vmatprep.subr.mxu0 %v1559
  %2199 = vmatpush1.msra.mxu0 %v1558
  %2200 = vmatprep.subr.mxu0 %v1575
  %2201 = vmatpush1.msra.mxu0 %v1574
  %2202 = vmatprep.subr.mxu0 %v1591
  %2203 = vmatpush1.msra.mxu0 %v1590
  %2204 = vmatprep.subr.mxu0 %v1607
  %2205 = vmatpush1.msra.mxu0 %v1606
  %2206 = vmatprep.subr.mxu0 %v1623
  %2207 = vmatpush1.msra.mxu0 %v1622
  %2208 = vmatprep.subr.mxu0 %v1639
  %2209 = vmatpush1.msra.mxu0 %v1638
  %2210 = vmatprep.subr.mxu0 0.0
  %2211 = vmatpush1.msra.mxu0 0.0
  %2212 = vmatprep.subr.mxu0 0.0
  %2213 = vmatpush1.msra.mxu0 0.0
  %2214 = vmatprep.subr.mxu0 0.0
  %2215 = vmatpush1.msra.mxu0 0.0
  %2216 = vmatprep.subr.mxu0 0.0
  %2217 = vmatpush1.msra.mxu0 0.0
  %2218 = vmatprep.subr.mxu0 0.0
  %2219 = vmatpush1.msra.mxu0 0.0
  %2220 = vmatprep.subr.mxu0 0.0
  %2221 = vmatpush1.msra.mxu0 0.0
  %2222 = vmatprep.subr.mxu0 0.0
  %2223 = vmatpush1.msra.mxu0 0.0
  %2224 = vmatprep.subr.mxu0 0.0
  %2225 = vmatpush1.msra.mxu0 0.0
  %2226 = vmatprep.subr.mxu0 0.0
  %2227 = vmatpush1.msra.mxu0 0.0
  %2228 = vmatprep.subr.mxu0 0.0
  %2229 = vmatpush1.msra.mxu0 0.0
  %2230 = vmatprep.subr.mxu0 0.0
  %2231 = vmatpush1.msra.mxu0 0.0
  %2232 = vmatprep.subr.mxu0 0.0
  %2233 = vmatpush1.msra.mxu0 0.0
  %2234 = vmatprep.subr.mxu0 0.0
  %2235 = vmatpush1.msra.mxu0 0.0
  %2236 = vmatprep.subr.mxu0 0.0
  %2237 = vmatpush1.msra.mxu0 0.0
  %2238 = vmatprep.subr.mxu0 0.0
  %2239 = vmatpush1.msra.mxu0 0.0
  %2240 = vmatprep.subr.mxu0 0.0
  %2241 = vmatpush1.msra.mxu0 0.0
  %2242 = vmatprep.subr.mxu0 0.0
  %2243 = vmatpush1.msra.mxu0 0.0
  %2244 = vmatprep.subr.mxu0 0.0
  %2245 = vmatpush1.msra.mxu0 0.0
  %2246 = vmatprep.subr.mxu0 0.0
  %2247 = vmatpush1.msra.mxu0 0.0
  %2248 = vmatprep.subr.mxu0 0.0
  %2249 = vmatpush1.msra.mxu0 0.0
  %2250 = vmatprep.subr.mxu0 0.0
  %2251 = vmatpush1.msra.mxu0 0.0
  %2252 = vmatprep.subr.mxu0 0.0
  %2253 = vmatpush1.msra.mxu0 0.0
  %2254 = vmatprep.subr.mxu0 0.0
  %2255 = vmatpush1.msra.mxu0 0.0
  %2256 = vmatprep.subr.mxu0 0.0
  %2257 = vmatpush1.msra.mxu0 0.0
  %2258 = vmatprep.mubr.f32.mxu0 0.0
  %2259 = vmatmul.mubr.f32.gmra.mrb[0].mxu0 %v1727
  %v2260 = vpop.f32.mrb[0].mxu0
  %v2261 = vadd.f32 %v1697, %v2260
  %v2262 = vpop.f32.mrb[0].mxu0
  %v2263 = vadd.f32 %v1701, %v2262
  %2264 = vmatprep.mubr.f32.mxu0 0.0
  %2265 = vmatmul.mubr.f32.gmra.mrb[0].mxu0 %v1730
  %v2266 = vpop.f32.mrb[0].mxu0
  %v2267 = vadd.f32 %v1697, %v2266
  %v2268 = vpop.f32.mrb[0].mxu0
  %v2269 = vadd.f32 %v1701, %v2268
  %2270 = vdwg.mxu0
  %2271 = vmatprep.subr.mxu0 %v1529
  %2272 = vmatpush1.msra.mxu0 %v1528
  %2273 = vmatprep.subr.mxu0 %v1545
  %2274 = vmatpush1.msra.mxu0 %v1544
  %2275 = vmatprep.subr.mxu0 %v1561
  %2276 = vmatpush1.msra.mxu0 %v1560
  %2277 = vmatprep.subr.mxu0 %v1577
  %2278 = vmatpush1.msra.mxu0 %v1576
  %2279 = vmatprep.subr.mxu0 %v1593
  %2280 = vmatpush1.msra.mxu0 %v1592
  %2281 = vmatprep.subr.mxu0 %v1609
  %2282 = vmatpush1.msra.mxu0 %v1608
  %2283 = vmatprep.subr.mxu0 %v1625
  %2284 = vmatpush1.msra.mxu0 %v1624
  %2285 = vmatprep.subr.mxu0 %v1641
  %2286 = vmatpush1.msra.mxu0 %v1640
  %2287 = vmatprep.subr.mxu0 0.0
  %2288 = vmatpush1.msra.mxu0 0.0
  %2289 = vmatprep.subr.mxu0 0.0
  %2290 = vmatpush1.msra.mxu0 0.0
  %2291 = vmatprep.subr.mxu0 0.0
  %2292 = vmatpush1.msra.mxu0 0.0
  %2293 = vmatprep.subr.mxu0 0.0
  %2294 = vmatpush1.msra.mxu0 0.0
  %2295 = vmatprep.subr.mxu0 0.0
  %2296 = vmatpush1.msra.mxu0 0.0
  %2297 = vmatprep.subr.mxu0 0.0
  %2298 = vmatpush1.msra.mxu0 0.0
  %2299 = vmatprep.subr.mxu0 0.0
  %2300 = vmatpush1.msra.mxu0 0.0
  %2301 = vmatprep.subr.mxu0 0.0
  %2302 = vmatpush1.msra.mxu0 0.0
  %2303 = vmatprep.subr.mxu0 0.0
  %2304 = vmatpush1.msra.mxu0 0.0
  %2305 = vmatprep.subr.mxu0 0.0
  %2306 = vmatpush1.msra.mxu0 0.0
  %2307 = vmatprep.subr.mxu0 0.0
  %2308 = vmatpush1.msra.mxu0 0.0
  %2309 = vmatprep.subr.mxu0 0.0
  %2310 = vmatpush1.msra.mxu0 0.0
  %2311 = vmatprep.subr.mxu0 0.0
  %2312 = vmatpush1.msra.mxu0 0.0
  %2313 = vmatprep.subr.mxu0 0.0
  %2314 = vmatpush1.msra.mxu0 0.0
  %2315 = vmatprep.subr.mxu0 0.0
  %2316 = vmatpush1.msra.mxu0 0.0
  %2317 = vmatprep.subr.mxu0 0.0
  %2318 = vmatpush1.msra.mxu0 0.0
  %2319 = vmatprep.subr.mxu0 0.0
  %2320 = vmatpush1.msra.mxu0 0.0
  %2321 = vmatprep.subr.mxu0 0.0
  %2322 = vmatpush1.msra.mxu0 0.0
  %2323 = vmatprep.subr.mxu0 0.0
  %2324 = vmatpush1.msra.mxu0 0.0
  %2325 = vmatprep.subr.mxu0 0.0
  %2326 = vmatpush1.msra.mxu0 0.0
  %2327 = vmatprep.subr.mxu0 0.0
  %2328 = vmatpush1.msra.mxu0 0.0
  %2329 = vmatprep.subr.mxu0 0.0
  %2330 = vmatpush1.msra.mxu0 0.0
  %2331 = vmatprep.subr.mxu0 0.0
  %2332 = vmatpush1.msra.mxu0 0.0
  %2333 = vmatprep.subr.mxu0 0.0
  %2334 = vmatpush1.msra.mxu0 0.0
  %2335 = vmatprep.mubr.f32.mxu0 0.0
  %2336 = vmatmul.mubr.f32.gmra.mrb[0].mxu0 %v1727
  %v2337 = vpop.f32.mrb[0].mxu0
  %v2338 = vadd.f32 %v1705, %v2337
  %v2339 = vpop.f32.mrb[0].mxu0
  %v2340 = vadd.f32 %v1709, %v2339
  %2341 = vmatprep.mubr.f32.mxu0 0.0
  %2342 = vmatmul.mubr.f32.gmra.mrb[0].mxu0 %v1730
  %v2343 = vpop.f32.mrb[0].mxu0
  %v2344 = vadd.f32 %v1705, %v2343
  %v2345 = vpop.f32.mrb[0].mxu0
  %v2346 = vadd.f32 %v1709, %v2345
  %2347 = vdwg.mxu0
  %v2348 = vmax.f32 %v1799, 0.0
  %v2349 = vmax.f32 %v1801, 0.0
  %v2350 = vmax.f32 %v1876, 0.0
  %v2351 = vmax.f32 %v1878, 0.0
  %v2352 = vmax.f32 %v1953, 0.0
  %v2353 = vmax.f32 %v1955, 0.0
  %v2354 = vmax.f32 %v2030, 0.0
  %v2355 = vmax.f32 %v2032, 0.0
  %v2356 = vmax.f32 %v2107, 0.0
  %v2357 = vmax.f32 %v2109, 0.0
  %v2358 = vmax.f32 %v2184, 0.0
  %v2359 = vmax.f32 %v2186, 0.0
  %v2360 = vmax.f32 %v2261, 0.0
  %v2361 = vmax.f32 %v2263, 0.0
  %v2362 = vmax.f32 %v2338, 0.0
  %v2363 = vmax.f32 %v2340, 0.0
  %v2364 = vmax.f32 %v1805, 0.0
  %v2365 = vmax.f32 %v1807, 0.0
  %v2366 = vmax.f32 %v1882, 0.0
  %v2367 = vmax.f32 %v1884, 0.0
  %v2368 = vmax.f32 %v1959, 0.0
  %v2369 = vmax.f32 %v1961, 0.0
  %v2370 = vmax.f32 %v2036, 0.0
  %v2371 = vmax.f32 %v2038, 0.0
  %v2372 = vmax.f32 %v2113, 0.0
  %v2373 = vmax.f32 %v2115, 0.0
  %v2374 = vmax.f32 %v2190, 0.0
  %v2375 = vmax.f32 %v2192, 0.0
  %v2376 = vmax.f32 %v2267, 0.0
  %v2377 = vmax.f32 %v2269, 0.0
  %v2378 = vmax.f32 %v2344, 0.0
  %v2379 = vmax.f32 %v2346, 0.0
  %s2380 = smul.u32 2048, 1
  %s2381 = sshll.u32 %s2380, 4
  %2382 = dma.done %s312, %s2381
  %v2383 = vld [vmem:[#allocation3] sm:$0xff]
  %v2384 = vld [vmem:[#allocation3 + $0x8] sm:$0xff]
  %v2385 = vld [vmem:[#allocation3 + $0x10] sm:$0xff]
  %v2386 = vld [vmem:[#allocation3 + $0x18] sm:$0xff]
  %v2387 = vld [vmem:[#allocation3 + $0x20] sm:$0xff]
  %v2388 = vld [vmem:[#allocation3 + $0x28] sm:$0xff]
  %v2389 = vld [vmem:[#allocation3 + $0x30] sm:$0xff]
  %v2390 = vld [vmem:[#allocation3 + $0x38] sm:$0xff]
  %v2391 = vld [vmem:[#allocation3 + $0x40] sm:$0xff]
  %v2392 = vld [vmem:[#allocation3 + $0x48] sm:$0xff]
  %v2393 = vld [vmem:[#allocation3 + $0x50] sm:$0xff]
  %v2394 = vld [vmem:[#allocation3 + $0x58] sm:$0xff]
  %v2395 = vld [vmem:[#allocation3 + $0x60] sm:$0xff]
  %v2396 = vld [vmem:[#allocation3 + $0x68] sm:$0xff]
  %v2397 = vld [vmem:[#allocation3 + $0x70] sm:$0xff]
  %v2398 = vld [vmem:[#allocation3 + $0x78] sm:$0xff]
  %v2399 = vld [vmem:[#allocation3 + $0x80] sm:$0xff]
  %v2400 = vld [vmem:[#allocation3 + $0x88] sm:$0xff]
  %v2401 = vld [vmem:[#allocation3 + $0x90] sm:$0xff]
  %v2402 = vld [vmem:[#allocation3 + $0x98] sm:$0xff]
  %v2403 = vld [vmem:[#allocation3 + $0xa0] sm:$0xff]
  %v2404 = vld [vmem:[#allocation3 + $0xa8] sm:$0xff]
  %v2405 = vld [vmem:[#allocation3 + $0xb0] sm:$0xff]
  %v2406 = vld [vmem:[#allocation3 + $0xb8] sm:$0xff]
  %v2407 = vld [vmem:[#allocation3 + $0xc0] sm:$0xff]
  %v2408 = vld [vmem:[#allocation3 + $0xc8] sm:$0xff]
  %v2409 = vld [vmem:[#allocation3 + $0xd0] sm:$0xff]
  %v2410 = vld [vmem:[#allocation3 + $0xd8] sm:$0xff]
  %v2411 = vld [vmem:[#allocation3 + $0xe0] sm:$0xff]
  %v2412 = vld [vmem:[#allocation3 + $0xe8] sm:$0xff]
  %v2413 = vld [vmem:[#allocation3 + $0xf0] sm:$0xff]
  %v2414 = vld [vmem:[#allocation3 + $0xf8] sm:$0xff]
  %v2415 = vld [vmem:[#allocation3 + $0x100] sm:$0xff]
  %v2416 = vld [vmem:[#allocation3 + $0x108] sm:$0xff]
  %v2417 = vld [vmem:[#allocation3 + $0x110] sm:$0xff]
  %v2418 = vld [vmem:[#allocation3 + $0x118] sm:$0xff]
  %v2419 = vld [vmem:[#allocation3 + $0x120] sm:$0xff]
  %v2420 = vld [vmem:[#allocation3 + $0x128] sm:$0xff]
  %v2421 = vld [vmem:[#allocation3 + $0x130] sm:$0xff]
  %v2422 = vld [vmem:[#allocation3 + $0x138] sm:$0xff]
  %v2423 = vld [vmem:[#allocation3 + $0x140] sm:$0xff]
  %v2424 = vld [vmem:[#allocation3 + $0x148] sm:$0xff]
  %v2425 = vld [vmem:[#allocation3 + $0x150] sm:$0xff]
  %v2426 = vld [vmem:[#allocation3 + $0x158] sm:$0xff]
  %v2427 = vld [vmem:[#allocation3 + $0x160] sm:$0xff]
  %v2428 = vld [vmem:[#allocation3 + $0x168] sm:$0xff]
  %v2429 = vld [vmem:[#allocation3 + $0x170] sm:$0xff]
  %v2430 = vld [vmem:[#allocation3 + $0x178] sm:$0xff]
  %v2431 = vld [vmem:[#allocation3 + $0x180] sm:$0xff]
  %v2432 = vld [vmem:[#allocation3 + $0x188] sm:$0xff]
  %v2433 = vld [vmem:[#allocation3 + $0x190] sm:$0xff]
  %v2434 = vld [vmem:[#allocation3 + $0x198] sm:$0xff]
  %v2435 = vld [vmem:[#allocation3 + $0x1a0] sm:$0xff]
  %v2436 = vld [vmem:[#allocation3 + $0x1a8] sm:$0xff]
  %v2437 = vld [vmem:[#allocation3 + $0x1b0] sm:$0xff]
  %v2438 = vld [vmem:[#allocation3 + $0x1b8] sm:$0xff]
  %v2439 = vld [vmem:[#allocation3 + $0x1c0] sm:$0xff]
  %v2440 = vld [vmem:[#allocation3 + $0x1c8] sm:$0xff]
  %v2441 = vld [vmem:[#allocation3 + $0x1d0] sm:$0xff]
  %v2442 = vld [vmem:[#allocation3 + $0x1d8] sm:$0xff]
  %v2443 = vld [vmem:[#allocation3 + $0x1e0] sm:$0xff]
  %v2444 = vld [vmem:[#allocation3 + $0x1e8] sm:$0xff]
  %v2445 = vld [vmem:[#allocation3 + $0x1f0] sm:$0xff]
  %v2446 = vld [vmem:[#allocation3 + $0x1f8] sm:$0xff]
  %v2447 = vld [vmem:[#allocation3 + $0x200] sm:$0xff]
  %v2448 = vld [vmem:[#allocation3 + $0x208] sm:$0xff]
  %v2449 = vld [vmem:[#allocation3 + $0x210] sm:$0xff]
  %v2450 = vld [vmem:[#allocation3 + $0x218] sm:$0xff]
  %v2451 = vld [vmem:[#allocation3 + $0x220] sm:$0xff]
  %v2452 = vld [vmem:[#allocation3 + $0x228] sm:$0xff]
  %v2453 = vld [vmem:[#allocation3 + $0x230] sm:$0xff]
  %v2454 = vld [vmem:[#allocation3 + $0x238] sm:$0xff]
  %v2455 = vld [vmem:[#allocation3 + $0x240] sm:$0xff]
  %v2456 = vld [vmem:[#allocation3 + $0x248] sm:$0xff]
  %v2457 = vld [vmem:[#allocation3 + $0x250] sm:$0xff]
  %v2458 = vld [vmem:[#allocation3 + $0x258] sm:$0xff]
  %v2459 = vld [vmem:[#allocation3 + $0x260] sm:$0xff]
  %v2460 = vld [vmem:[#allocation3 + $0x268] sm:$0xff]
  %v2461 = vld [vmem:[#allocation3 + $0x270] sm:$0xff]
  %v2462 = vld [vmem:[#allocation3 + $0x278] sm:$0xff]
  %v2463 = vld [vmem:[#allocation3 + $0x280] sm:$0xff]
  %v2464 = vld [vmem:[#allocation3 + $0x288] sm:$0xff]
  %v2465 = vld [vmem:[#allocation3 + $0x290] sm:$0xff]
  %v2466 = vld [vmem:[#allocation3 + $0x298] sm:$0xff]
  %v2467 = vld [vmem:[#allocation3 + $0x2a0] sm:$0xff]
  %v2468 = vld [vmem:[#allocation3 + $0x2a8] sm:$0xff]
  %v2469 = vld [vmem:[#allocation3 + $0x2b0] sm:$0xff]
  %v2470 = vld [vmem:[#allocation3 + $0x2b8] sm:$0xff]
  %v2471 = vld [vmem:[#allocation3 + $0x2c0] sm:$0xff]
  %v2472 = vld [vmem:[#allocation3 + $0x2c8] sm:$0xff]
  %v2473 = vld [vmem:[#allocation3 + $0x2d0] sm:$0xff]
  %v2474 = vld [vmem:[#allocation3 + $0x2d8] sm:$0xff]
  %v2475 = vld [vmem:[#allocation3 + $0x2e0] sm:$0xff]
  %v2476 = vld [vmem:[#allocation3 + $0x2e8] sm:$0xff]
  %v2477 = vld [vmem:[#allocation3 + $0x2f0] sm:$0xff]
  %v2478 = vld [vmem:[#allocation3 + $0x2f8] sm:$0xff]
  %v2479 = vld [vmem:[#allocation3 + $0x300] sm:$0xff]
  %v2480 = vld [vmem:[#allocation3 + $0x308] sm:$0xff]
  %v2481 = vld [vmem:[#allocation3 + $0x310] sm:$0xff]
  %v2482 = vld [vmem:[#allocation3 + $0x318] sm:$0xff]
  %v2483 = vld [vmem:[#allocation3 + $0x320] sm:$0xff]
  %v2484 = vld [vmem:[#allocation3 + $0x328] sm:$0xff]
  %v2485 = vld [vmem:[#allocation3 + $0x330] sm:$0xff]
  %v2486 = vld [vmem:[#allocation3 + $0x338] sm:$0xff]
  %v2487 = vld [vmem:[#allocation3 + $0x340] sm:$0xff]
  %v2488 = vld [vmem:[#allocation3 + $0x348] sm:$0xff]
  %v2489 = vld [vmem:[#allocation3 + $0x350] sm:$0xff]
  %v2490 = vld [vmem:[#allocation3 + $0x358] sm:$0xff]
  %v2491 = vld [vmem:[#allocation3 + $0x360] sm:$0xff]
  %v2492 = vld [vmem:[#allocation3 + $0x368] sm:$0xff]
  %v2493 = vld [vmem:[#allocation3 + $0x370] sm:$0xff]
  %v2494 = vld [vmem:[#allocation3 + $0x378] sm:$0xff]
  %v2495 = vld [vmem:[#allocation3 + $0x380] sm:$0xff]
  %v2496 = vld [vmem:[#allocation3 + $0x388] sm:$0xff]
  %v2497 = vld [vmem:[#allocation3 + $0x390] sm:$0xff]
  %v2498 = vld [vmem:[#allocation3 + $0x398] sm:$0xff]
  %v2499 = vld [vmem:[#allocation3 + $0x3a0] sm:$0xff]
  %v2500 = vld [vmem:[#allocation3 + $0x3a8] sm:$0xff]
  %v2501 = vld [vmem:[#allocation3 + $0x3b0] sm:$0xff]
  %v2502 = vld [vmem:[#allocation3 + $0x3b8] sm:$0xff]
  %v2503 = vld [vmem:[#allocation3 + $0x3c0] sm:$0xff]
  %v2504 = vld [vmem:[#allocation3 + $0x3c8] sm:$0xff]
  %v2505 = vld [vmem:[#allocation3 + $0x3d0] sm:$0xff]
  %v2506 = vld [vmem:[#allocation3 + $0x3d8] sm:$0xff]
  %v2507 = vld [vmem:[#allocation3 + $0x3e0] sm:$0xff]
  %v2508 = vld [vmem:[#allocation3 + $0x3e8] sm:$0xff]
  %v2509 = vld [vmem:[#allocation3 + $0x3f0] sm:$0xff]
  %v2510 = vld [vmem:[#allocation3 + $0x3f8] sm:$0xff]
  %v2511 = vld [vmem:[#allocation3 + $0x400] sm:$0xff]
  %v2512 = vld [vmem:[#allocation3 + $0x408] sm:$0xff]
  %v2513 = vld [vmem:[#allocation3 + $0x410] sm:$0xff]
  %v2514 = vld [vmem:[#allocation3 + $0x418] sm:$0xff]
  %v2515 = vld [vmem:[#allocation3 + $0x420] sm:$0xff]
  %v2516 = vld [vmem:[#allocation3 + $0x428] sm:$0xff]
  %v2517 = vld [vmem:[#allocation3 + $0x430] sm:$0xff]
  %v2518 = vld [vmem:[#allocation3 + $0x438] sm:$0xff]
  %v2519 = vld [vmem:[#allocation3 + $0x440] sm:$0xff]
  %v2520 = vld [vmem:[#allocation3 + $0x448] sm:$0xff]
  %v2521 = vld [vmem:[#allocation3 + $0x450] sm:$0xff]
  %v2522 = vld [vmem:[#allocation3 + $0x458] sm:$0xff]
  %v2523 = vld [vmem:[#allocation3 + $0x460] sm:$0xff]
  %v2524 = vld [vmem:[#allocation3 + $0x468] sm:$0xff]
  %v2525 = vld [vmem:[#allocation3 + $0x470] sm:$0xff]
  %v2526 = vld [vmem:[#allocation3 + $0x478] sm:$0xff]
  %v2527 = vld [vmem:[#allocation3 + $0x480] sm:$0xff]
  %v2528 = vld [vmem:[#allocation3 + $0x488] sm:$0xff]
  %v2529 = vld [vmem:[#allocation3 + $0x490] sm:$0xff]
  %v2530 = vld [vmem:[#allocation3 + $0x498] sm:$0xff]
  %v2531 = vld [vmem:[#allocation3 + $0x4a0] sm:$0xff]
  %v2532 = vld [vmem:[#allocation3 + $0x4a8] sm:$0xff]
  %v2533 = vld [vmem:[#allocation3 + $0x4b0] sm:$0xff]
  %v2534 = vld [vmem:[#allocation3 + $0x4b8] sm:$0xff]
  %v2535 = vld [vmem:[#allocation3 + $0x4c0] sm:$0xff]
  %v2536 = vld [vmem:[#allocation3 + $0x4c8] sm:$0xff]
  %v2537 = vld [vmem:[#allocation3 + $0x4d0] sm:$0xff]
  %v2538 = vld [vmem:[#allocation3 + $0x4d8] sm:$0xff]
  %v2539 = vld [vmem:[#allocation3 + $0x4e0] sm:$0xff]
  %v2540 = vld [vmem:[#allocation3 + $0x4e8] sm:$0xff]
  %v2541 = vld [vmem:[#allocation3 + $0x4f0] sm:$0xff]
  %v2542 = vld [vmem:[#allocation3 + $0x4f8] sm:$0xff]
  %v2543 = vld [vmem:[#allocation3 + $0x500] sm:$0xff]
  %v2544 = vld [vmem:[#allocation3 + $0x508] sm:$0xff]
  %v2545 = vld [vmem:[#allocation3 + $0x510] sm:$0xff]
  %v2546 = vld [vmem:[#allocation3 + $0x518] sm:$0xff]
  %v2547 = vld [vmem:[#allocation3 + $0x520] sm:$0xff]
  %v2548 = vld [vmem:[#allocation3 + $0x528] sm:$0xff]
  %v2549 = vld [vmem:[#allocation3 + $0x530] sm:$0xff]
  %v2550 = vld [vmem:[#allocation3 + $0x538] sm:$0xff]
  %v2551 = vld [vmem:[#allocation3 + $0x540] sm:$0xff]
  %v2552 = vld [vmem:[#allocation3 + $0x548] sm:$0xff]
  %v2553 = vld [vmem:[#allocation3 + $0x550] sm:$0xff]
  %v2554 = vld [vmem:[#allocation3 + $0x558] sm:$0xff]
  %v2555 = vld [vmem:[#allocation3 + $0x560] sm:$0xff]
  %v2556 = vld [vmem:[#allocation3 + $0x568] sm:$0xff]
  %v2557 = vld [vmem:[#allocation3 + $0x570] sm:$0xff]
  %v2558 = vld [vmem:[#allocation3 + $0x578] sm:$0xff]
  %v2559 = vld [vmem:[#allocation3 + $0x580] sm:$0xff]
  %v2560 = vld [vmem:[#allocation3 + $0x588] sm:$0xff]
  %v2561 = vld [vmem:[#allocation3 + $0x590] sm:$0xff]
  %v2562 = vld [vmem:[#allocation3 + $0x598] sm:$0xff]
  %v2563 = vld [vmem:[#allocation3 + $0x5a0] sm:$0xff]
  %v2564 = vld [vmem:[#allocation3 + $0x5a8] sm:$0xff]
  %v2565 = vld [vmem:[#allocation3 + $0x5b0] sm:$0xff]
  %v2566 = vld [vmem:[#allocation3 + $0x5b8] sm:$0xff]
  %v2567 = vld [vmem:[#allocation3 + $0x5c0] sm:$0xff]
  %v2568 = vld [vmem:[#allocation3 + $0x5c8] sm:$0xff]
  %v2569 = vld [vmem:[#allocation3 + $0x5d0] sm:$0xff]
  %v2570 = vld [vmem:[#allocation3 + $0x5d8] sm:$0xff]
  %v2571 = vld [vmem:[#allocation3 + $0x5e0] sm:$0xff]
  %v2572 = vld [vmem:[#allocation3 + $0x5e8] sm:$0xff]
  %v2573 = vld [vmem:[#allocation3 + $0x5f0] sm:$0xff]
  %v2574 = vld [vmem:[#allocation3 + $0x5f8] sm:$0xff]
  %v2575 = vld [vmem:[#allocation3 + $0x600] sm:$0xff]
  %v2576 = vld [vmem:[#allocation3 + $0x608] sm:$0xff]
  %v2577 = vld [vmem:[#allocation3 + $0x610] sm:$0xff]
  %v2578 = vld [vmem:[#allocation3 + $0x618] sm:$0xff]
  %v2579 = vld [vmem:[#allocation3 + $0x620] sm:$0xff]
  %v2580 = vld [vmem:[#allocation3 + $0x628] sm:$0xff]
  %v2581 = vld [vmem:[#allocation3 + $0x630] sm:$0xff]
  %v2582 = vld [vmem:[#allocation3 + $0x638] sm:$0xff]
  %v2583 = vld [vmem:[#allocation3 + $0x640] sm:$0xff]
  %v2584 = vld [vmem:[#allocation3 + $0x648] sm:$0xff]
  %v2585 = vld [vmem:[#allocation3 + $0x650] sm:$0xff]
  %v2586 = vld [vmem:[#allocation3 + $0x658] sm:$0xff]
  %v2587 = vld [vmem:[#allocation3 + $0x660] sm:$0xff]
  %v2588 = vld [vmem:[#allocation3 + $0x668] sm:$0xff]
  %v2589 = vld [vmem:[#allocation3 + $0x670] sm:$0xff]
  %v2590 = vld [vmem:[#allocation3 + $0x678] sm:$0xff]
  %v2591 = vld [vmem:[#allocation3 + $0x680] sm:$0xff]
  %v2592 = vld [vmem:[#allocation3 + $0x688] sm:$0xff]
  %v2593 = vld [vmem:[#allocation3 + $0x690] sm:$0xff]
  %v2594 = vld [vmem:[#allocation3 + $0x698] sm:$0xff]
  %v2595 = vld [vmem:[#allocation3 + $0x6a0] sm:$0xff]
  %v2596 = vld [vmem:[#allocation3 + $0x6a8] sm:$0xff]
  %v2597 = vld [vmem:[#allocation3 + $0x6b0] sm:$0xff]
  %v2598 = vld [vmem:[#allocation3 + $0x6b8] sm:$0xff]
  %v2599 = vld [vmem:[#allocation3 + $0x6c0] sm:$0xff]
  %v2600 = vld [vmem:[#allocation3 + $0x6c8] sm:$0xff]
  %v2601 = vld [vmem:[#allocation3 + $0x6d0] sm:$0xff]
  %v2602 = vld [vmem:[#allocation3 + $0x6d8] sm:$0xff]
  %v2603 = vld [vmem:[#allocation3 + $0x6e0] sm:$0xff]
  %v2604 = vld [vmem:[#allocation3 + $0x6e8] sm:$0xff]
  %v2605 = vld [vmem:[#allocation3 + $0x6f0] sm:$0xff]
  %v2606 = vld [vmem:[#allocation3 + $0x6f8] sm:$0xff]
  %v2607 = vld [vmem:[#allocation3 + $0x700] sm:$0xff]
  %v2608 = vld [vmem:[#allocation3 + $0x708] sm:$0xff]
  %v2609 = vld [vmem:[#allocation3 + $0x710] sm:$0xff]
  %v2610 = vld [vmem:[#allocation3 + $0x718] sm:$0xff]
  %v2611 = vld [vmem:[#allocation3 + $0x720] sm:$0xff]
  %v2612 = vld [vmem:[#allocation3 + $0x728] sm:$0xff]
  %v2613 = vld [vmem:[#allocation3 + $0x730] sm:$0xff]
  %v2614 = vld [vmem:[#allocation3 + $0x738] sm:$0xff]
  %v2615 = vld [vmem:[#allocation3 + $0x740] sm:$0xff]
  %v2616 = vld [vmem:[#allocation3 + $0x748] sm:$0xff]
  %v2617 = vld [vmem:[#allocation3 + $0x750] sm:$0xff]
  %v2618 = vld [vmem:[#allocation3 + $0x758] sm:$0xff]
  %v2619 = vld [vmem:[#allocation3 + $0x760] sm:$0xff]
  %v2620 = vld [vmem:[#allocation3 + $0x768] sm:$0xff]
  %v2621 = vld [vmem:[#allocation3 + $0x770] sm:$0xff]
  %v2622 = vld [vmem:[#allocation3 + $0x778] sm:$0xff]
  %v2623 = vld [vmem:[#allocation3 + $0x780] sm:$0xff]
  %v2624 = vld [vmem:[#allocation3 + $0x788] sm:$0xff]
  %v2625 = vld [vmem:[#allocation3 + $0x790] sm:$0xff]
  %v2626 = vld [vmem:[#allocation3 + $0x798] sm:$0xff]
  %v2627 = vld [vmem:[#allocation3 + $0x7a0] sm:$0xff]
  %v2628 = vld [vmem:[#allocation3 + $0x7a8] sm:$0xff]
  %v2629 = vld [vmem:[#allocation3 + $0x7b0] sm:$0xff]
  %v2630 = vld [vmem:[#allocation3 + $0x7b8] sm:$0xff]
  %v2631 = vld [vmem:[#allocation3 + $0x7c0] sm:$0xff]
  %v2632 = vld [vmem:[#allocation3 + $0x7c8] sm:$0xff]
  %v2633 = vld [vmem:[#allocation3 + $0x7d0] sm:$0xff]
  %v2634 = vld [vmem:[#allocation3 + $0x7d8] sm:$0xff]
  %v2635 = vld [vmem:[#allocation3 + $0x7e0] sm:$0xff]
  %v2636 = vld [vmem:[#allocation3 + $0x7e8] sm:$0xff]
  %v2637 = vld [vmem:[#allocation3 + $0x7f0] sm:$0xff]
  %v2638 = vld [vmem:[#allocation3 + $0x7f8] sm:$0xff]
  %v2639 = vld [vmem:[%s1 + $0x166] sm:$0x1]
  %v2640 = vlaneseq
  %v2641 = vshrl.u32 %v2640, 7
  %v2642 = vsub.s32 0, %v2641
  %v2643 = vrot.slane %v2639, %v2642
  %2644 = vmatprep.subr.mxu0 0.0
  %2645 = vmatpush1.msra.mxu0 %v2383
  %2646 = vmatprep.subr.mxu0 0.0
  %2647 = vmatpush1.msra.mxu0 %v2384
  %2648 = vmatprep.subr.mxu0 0.0
  %2649 = vmatpush1.msra.mxu0 %v2385
  %2650 = vmatprep.subr.mxu0 0.0
  %2651 = vmatpush1.msra.mxu0 %v2386
  %2652 = vmatprep.subr.mxu0 0.0
  %2653 = vmatpush1.msra.mxu0 %v2387
  %2654 = vmatprep.subr.mxu0 0.0
  %2655 = vmatpush1.msra.mxu0 %v2388
  %2656 = vmatprep.subr.mxu0 0.0
  %2657 = vmatpush1.msra.mxu0 %v2389
  %2658 = vmatprep.subr.mxu0 0.0
  %2659 = vmatpush1.msra.mxu0 %v2390
  %2660 = vmatprep.subr.mxu0 0.0
  %2661 = vmatpush1.msra.mxu0 %v2391
  %2662 = vmatprep.subr.mxu0 0.0
  %2663 = vmatpush1.msra.mxu0 %v2392
  %2664 = vmatprep.subr.mxu0 0.0
  %2665 = vmatpush1.msra.mxu0 %v2393
  %2666 = vmatprep.subr.mxu0 0.0
  %2667 = vmatpush1.msra.mxu0 %v2394
  %2668 = vmatprep.subr.mxu0 0.0
  %2669 = vmatpush1.msra.mxu0 %v2395
  %2670 = vmatprep.subr.mxu0 0.0
  %2671 = vmatpush1.msra.mxu0 %v2396
  %2672 = vmatprep.subr.mxu0 0.0
  %2673 = vmatpush1.msra.mxu0 %v2397
  %2674 = vmatprep.subr.mxu0 0.0
  %2675 = vmatpush1.msra.mxu0 %v2398
  %2676 = vmatprep.subr.mxu0 0.0
  %2677 = vmatpush1.msra.mxu0 %v2399
  %2678 = vmatprep.subr.mxu0 0.0
  %2679 = vmatpush1.msra.mxu0 %v2400
  %2680 = vmatprep.subr.mxu0 0.0
  %2681 = vmatpush1.msra.mxu0 %v2401
  %2682 = vmatprep.subr.mxu0 0.0
  %2683 = vmatpush1.msra.mxu0 %v2402
  %2684 = vmatprep.subr.mxu0 0.0
  %2685 = vmatpush1.msra.mxu0 %v2403
  %2686 = vmatprep.subr.mxu0 0.0
  %2687 = vmatpush1.msra.mxu0 %v2404
  %2688 = vmatprep.subr.mxu0 0.0
  %2689 = vmatpush1.msra.mxu0 %v2405
  %2690 = vmatprep.subr.mxu0 0.0
  %2691 = vmatpush1.msra.mxu0 %v2406
  %2692 = vmatprep.subr.mxu0 0.0
  %2693 = vmatpush1.msra.mxu0 %v2407
  %2694 = vmatprep.subr.mxu0 0.0
  %2695 = vmatpush1.msra.mxu0 %v2408
  %2696 = vmatprep.subr.mxu0 0.0
  %2697 = vmatpush1.msra.mxu0 %v2409
  %2698 = vmatprep.subr.mxu0 0.0
  %2699 = vmatpush1.msra.mxu0 %v2410
  %2700 = vmatprep.subr.mxu0 0.0
  %2701 = vmatpush1.msra.mxu0 %v2411
  %2702 = vmatprep.subr.mxu0 0.0
  %2703 = vmatpush1.msra.mxu0 %v2412
  %2704 = vmatprep.subr.mxu0 0.0
  %2705 = vmatpush1.msra.mxu0 %v2413
  %2706 = vmatprep.subr.mxu0 0.0
  %2707 = vmatpush1.msra.mxu0 %v2414
  %2708 = vmatprep.mubr.f32.mxu0 %v2349
  %2709 = vmatmul.mubr.f32.gmra.mrb[0].mxu0 %v2348
  %v2710 = vpop.f32.mrb[0].mxu0
  %v2711 = vadd.f32 %v2643, %v2710
  %v2712 = vpop.f32.mrb[0].mxu0
  %2713 = vmatprep.mubr.f32.mxu0 %v2365
  %2714 = vmatmul.mubr.f32.gmra.mrb[0].mxu0 %v2364
  %v2715 = vpop.f32.mrb[0].mxu0
  %v2716 = vadd.f32 %v2643, %v2715
  %v2717 = vpop.f32.mrb[0].mxu0
  %2718 = vdwg.mxu0
  %2719 = vmatprep.subr.mxu0 0.0
  %2720 = vmatpush1.msra.mxu0 %v2415
  %2721 = vmatprep.subr.mxu0 0.0
  %2722 = vmatpush1.msra.mxu0 %v2416
  %2723 = vmatprep.subr.mxu0 0.0
  %2724 = vmatpush1.msra.mxu0 %v2417
  %2725 = vmatprep.subr.mxu0 0.0
  %2726 = vmatpush1.msra.mxu0 %v2418
  %2727 = vmatprep.subr.mxu0 0.0
  %2728 = vmatpush1.msra.mxu0 %v2419
  %2729 = vmatprep.subr.mxu0 0.0
  %2730 = vmatpush1.msra.mxu0 %v2420
  %2731 = vmatprep.subr.mxu0 0.0
  %2732 = vmatpush1.msra.mxu0 %v2421
  %2733 = vmatprep.subr.mxu0 0.0
  %2734 = vmatpush1.msra.mxu0 %v2422
  %2735 = vmatprep.subr.mxu0 0.0
  %2736 = vmatpush1.msra.mxu0 %v2423
  %2737 = vmatprep.subr.mxu0 0.0
  %2738 = vmatpush1.msra.mxu0 %v2424
  %2739 = vmatprep.subr.mxu0 0.0
  %2740 = vmatpush1.msra.mxu0 %v2425
  %2741 = vmatprep.subr.mxu0 0.0
  %2742 = vmatpush1.msra.mxu0 %v2426
  %2743 = vmatprep.subr.mxu0 0.0
  %2744 = vmatpush1.msra.mxu0 %v2427
  %2745 = vmatprep.subr.mxu0 0.0
  %2746 = vmatpush1.msra.mxu0 %v2428
  %2747 = vmatprep.subr.mxu0 0.0
  %2748 = vmatpush1.msra.mxu0 %v2429
  %2749 = vmatprep.subr.mxu0 0.0
  %2750 = vmatpush1.msra.mxu0 %v2430
  %2751 = vmatprep.subr.mxu0 0.0
  %2752 = vmatpush1.msra.mxu0 %v2431
  %2753 = vmatprep.subr.mxu0 0.0
  %2754 = vmatpush1.msra.mxu0 %v2432
  %2755 = vmatprep.subr.mxu0 0.0
  %2756 = vmatpush1.msra.mxu0 %v2433
  %2757 = vmatprep.subr.mxu0 0.0
  %2758 = vmatpush1.msra.mxu0 %v2434
  %2759 = vmatprep.subr.mxu0 0.0
  %2760 = vmatpush1.msra.mxu0 %v2435
  %2761 = vmatprep.subr.mxu0 0.0
  %2762 = vmatpush1.msra.mxu0 %v2436
  %2763 = vmatprep.subr.mxu0 0.0
  %2764 = vmatpush1.msra.mxu0 %v2437
  %2765 = vmatprep.subr.mxu0 0.0
  %2766 = vmatpush1.msra.mxu0 %v2438
  %2767 = vmatprep.subr.mxu0 0.0
  %2768 = vmatpush1.msra.mxu0 %v2439
  %2769 = vmatprep.subr.mxu0 0.0
  %2770 = vmatpush1.msra.mxu0 %v2440
  %2771 = vmatprep.subr.mxu0 0.0
  %2772 = vmatpush1.msra.mxu0 %v2441
  %2773 = vmatprep.subr.mxu0 0.0
  %2774 = vmatpush1.msra.mxu0 %v2442
  %2775 = vmatprep.subr.mxu0 0.0
  %2776 = vmatpush1.msra.mxu0 %v2443
  %2777 = vmatprep.subr.mxu0 0.0
  %2778 = vmatpush1.msra.mxu0 %v2444
  %2779 = vmatprep.subr.mxu0 0.0
  %2780 = vmatpush1.msra.mxu0 %v2445
  %2781 = vmatprep.subr.mxu0 0.0
  %2782 = vmatpush1.msra.mxu0 %v2446
  %2783 = vmatprep.mubr.f32.mxu0 %v2351
  %2784 = vmatmul.mubr.f32.gmra.mrb[0].mxu0 %v2350
  %v2785 = vpop.f32.mrb[0].mxu0
  %v2786 = vadd.f32 %v2711, %v2785
  %v2787 = vpop.f32.mrb[0].mxu0
  %2788 = vmatprep.mubr.f32.mxu0 %v2367
  %2789 = vmatmul.mubr.f32.gmra.mrb[0].mxu0 %v2366
  %v2790 = vpop.f32.mrb[0].mxu0
  %v2791 = vadd.f32 %v2716, %v2790
  %v2792 = vpop.f32.mrb[0].mxu0
  %2793 = vdwg.mxu0
  %2794 = vmatprep.subr.mxu0 0.0
  %2795 = vmatpush1.msra.mxu0 %v2447
  %2796 = vmatprep.subr.mxu0 0.0
  %2797 = vmatpush1.msra.mxu0 %v2448
  %2798 = vmatprep.subr.mxu0 0.0
  %2799 = vmatpush1.msra.mxu0 %v2449
  %2800 = vmatprep.subr.mxu0 0.0
  %2801 = vmatpush1.msra.mxu0 %v2450
  %2802 = vmatprep.subr.mxu0 0.0
  %2803 = vmatpush1.msra.mxu0 %v2451
  %2804 = vmatprep.subr.mxu0 0.0
  %2805 = vmatpush1.msra.mxu0 %v2452
  %2806 = vmatprep.subr.mxu0 0.0
  %2807 = vmatpush1.msra.mxu0 %v2453
  %2808 = vmatprep.subr.mxu0 0.0
  %2809 = vmatpush1.msra.mxu0 %v2454
  %2810 = vmatprep.subr.mxu0 0.0
  %2811 = vmatpush1.msra.mxu0 %v2455
  %2812 = vmatprep.subr.mxu0 0.0
  %2813 = vmatpush1.msra.mxu0 %v2456
  %2814 = vmatprep.subr.mxu0 0.0
  %2815 = vmatpush1.msra.mxu0 %v2457
  %2816 = vmatprep.subr.mxu0 0.0
  %2817 = vmatpush1.msra.mxu0 %v2458
  %2818 = vmatprep.subr.mxu0 0.0
  %2819 = vmatpush1.msra.mxu0 %v2459
  %2820 = vmatprep.subr.mxu0 0.0
  %2821 = vmatpush1.msra.mxu0 %v2460
  %2822 = vmatprep.subr.mxu0 0.0
  %2823 = vmatpush1.msra.mxu0 %v2461
  %2824 = vmatprep.subr.mxu0 0.0
  %2825 = vmatpush1.msra.mxu0 %v2462
  %2826 = vmatprep.subr.mxu0 0.0
  %2827 = vmatpush1.msra.mxu0 %v2463
  %2828 = vmatprep.subr.mxu0 0.0
  %2829 = vmatpush1.msra.mxu0 %v2464
  %2830 = vmatprep.subr.mxu0 0.0
  %2831 = vmatpush1.msra.mxu0 %v2465
  %2832 = vmatprep.subr.mxu0 0.0
  %2833 = vmatpush1.msra.mxu0 %v2466
  %2834 = vmatprep.subr.mxu0 0.0
  %2835 = vmatpush1.msra.mxu0 %v2467
  %2836 = vmatprep.subr.mxu0 0.0
  %2837 = vmatpush1.msra.mxu0 %v2468
  %2838 = vmatprep.subr.mxu0 0.0
  %2839 = vmatpush1.msra.mxu0 %v2469
  %2840 = vmatprep.subr.mxu0 0.0
  %2841 = vmatpush1.msra.mxu0 %v2470
  %2842 = vmatprep.subr.mxu0 0.0
  %2843 = vmatpush1.msra.mxu0 %v2471
  %2844 = vmatprep.subr.mxu0 0.0
  %2845 = vmatpush1.msra.mxu0 %v2472
  %2846 = vmatprep.subr.mxu0 0.0
  %2847 = vmatpush1.msra.mxu0 %v2473
  %2848 = vmatprep.subr.mxu0 0.0
  %2849 = vmatpush1.msra.mxu0 %v2474
  %2850 = vmatprep.subr.mxu0 0.0
  %2851 = vmatpush1.msra.mxu0 %v2475
  %2852 = vmatprep.subr.mxu0 0.0
  %2853 = vmatpush1.msra.mxu0 %v2476
  %2854 = vmatprep.subr.mxu0 0.0
  %2855 = vmatpush1.msra.mxu0 %v2477
  %2856 = vmatprep.subr.mxu0 0.0
  %2857 = vmatpush1.msra.mxu0 %v2478
  %2858 = vmatprep.mubr.f32.mxu0 %v2353
  %2859 = vmatmul.mubr.f32.gmra.mrb[0].mxu0 %v2352
  %v2860 = vpop.f32.mrb[0].mxu0
  %v2861 = vadd.f32 %v2786, %v2860
  %v2862 = vpop.f32.mrb[0].mxu0
  %2863 = vmatprep.mubr.f32.mxu0 %v2369
  %2864 = vmatmul.mubr.f32.gmra.mrb[0].mxu0 %v2368
  %v2865 = vpop.f32.mrb[0].mxu0
  %v2866 = vadd.f32 %v2791, %v2865
  %v2867 = vpop.f32.mrb[0].mxu0
  %2868 = vdwg.mxu0
  %2869 = vmatprep.subr.mxu0 0.0
  %2870 = vmatpush1.msra.mxu0 %v2479
  %2871 = vmatprep.subr.mxu0 0.0
  %2872 = vmatpush1.msra.mxu0 %v2480
  %2873 = vmatprep.subr.mxu0 0.0
  %2874 = vmatpush1.msra.mxu0 %v2481
  %2875 = vmatprep.subr.mxu0 0.0
  %2876 = vmatpush1.msra.mxu0 %v2482
  %2877 = vmatprep.subr.mxu0 0.0
  %2878 = vmatpush1.msra.mxu0 %v2483
  %2879 = vmatprep.subr.mxu0 0.0
  %2880 = vmatpush1.msra.mxu0 %v2484
  %2881 = vmatprep.subr.mxu0 0.0
  %2882 = vmatpush1.msra.mxu0 %v2485
  %2883 = vmatprep.subr.mxu0 0.0
  %2884 = vmatpush1.msra.mxu0 %v2486
  %2885 = vmatprep.subr.mxu0 0.0
  %2886 = vmatpush1.msra.mxu0 %v2487
  %2887 = vmatprep.subr.mxu0 0.0
  %2888 = vmatpush1.msra.mxu0 %v2488
  %2889 = vmatprep.subr.mxu0 0.0
  %2890 = vmatpush1.msra.mxu0 %v2489
  %2891 = vmatprep.subr.mxu0 0.0
  %2892 = vmatpush1.msra.mxu0 %v2490
  %2893 = vmatprep.subr.mxu0 0.0
  %2894 = vmatpush1.msra.mxu0 %v2491
  %2895 = vmatprep.subr.mxu0 0.0
  %2896 = vmatpush1.msra.mxu0 %v2492
  %2897 = vmatprep.subr.mxu0 0.0
  %2898 = vmatpush1.msra.mxu0 %v2493
  %2899 = vmatprep.subr.mxu0 0.0
  %2900 = vmatpush1.msra.mxu0 %v2494
  %2901 = vmatprep.subr.mxu0 0.0
  %2902 = vmatpush1.msra.mxu0 %v2495
  %2903 = vmatprep.subr.mxu0 0.0
  %2904 = vmatpush1.msra.mxu0 %v2496
  %2905 = vmatprep.subr.mxu0 0.0
  %2906 = vmatpush1.msra.mxu0 %v2497
  %2907 = vmatprep.subr.mxu0 0.0
  %2908 = vmatpush1.msra.mxu0 %v2498
  %2909 = vmatprep.subr.mxu0 0.0
  %2910 = vmatpush1.msra.mxu0 %v2499
  %2911 = vmatprep.subr.mxu0 0.0
  %2912 = vmatpush1.msra.mxu0 %v2500
  %2913 = vmatprep.subr.mxu0 0.0
  %2914 = vmatpush1.msra.mxu0 %v2501
  %2915 = vmatprep.subr.mxu0 0.0
  %2916 = vmatpush1.msra.mxu0 %v2502
  %2917 = vmatprep.subr.mxu0 0.0
  %2918 = vmatpush1.msra.mxu0 %v2503
  %2919 = vmatprep.subr.mxu0 0.0
  %2920 = vmatpush1.msra.mxu0 %v2504
  %2921 = vmatprep.subr.mxu0 0.0
  %2922 = vmatpush1.msra.mxu0 %v2505
  %2923 = vmatprep.subr.mxu0 0.0
  %2924 = vmatpush1.msra.mxu0 %v2506
  %2925 = vmatprep.subr.mxu0 0.0
  %2926 = vmatpush1.msra.mxu0 %v2507
  %2927 = vmatprep.subr.mxu0 0.0
  %2928 = vmatpush1.msra.mxu0 %v2508
  %2929 = vmatprep.subr.mxu0 0.0
  %2930 = vmatpush1.msra.mxu0 %v2509
  %2931 = vmatprep.subr.mxu0 0.0
  %2932 = vmatpush1.msra.mxu0 %v2510
  %2933 = vmatprep.mubr.f32.mxu0 %v2355
  %2934 = vmatmul.mubr.f32.gmra.mrb[0].mxu0 %v2354
  %v2935 = vpop.f32.mrb[0].mxu0
  %v2936 = vadd.f32 %v2861, %v2935
  %v2937 = vpop.f32.mrb[0].mxu0
  %2938 = vmatprep.mubr.f32.mxu0 %v2371
  %2939 = vmatmul.mubr.f32.gmra.mrb[0].mxu0 %v2370
  %v2940 = vpop.f32.mrb[0].mxu0
  %v2941 = vadd.f32 %v2866, %v2940
  %v2942 = vpop.f32.mrb[0].mxu0
  %2943 = vdwg.mxu0
  %2944 = vmatprep.subr.mxu0 0.0
  %2945 = vmatpush1.msra.mxu0 %v2511
  %2946 = vmatprep.subr.mxu0 0.0
  %2947 = vmatpush1.msra.mxu0 %v2512
  %2948 = vmatprep.subr.mxu0 0.0
  %2949 = vmatpush1.msra.mxu0 %v2513
  %2950 = vmatprep.subr.mxu0 0.0
  %2951 = vmatpush1.msra.mxu0 %v2514
  %2952 = vmatprep.subr.mxu0 0.0
  %2953 = vmatpush1.msra.mxu0 %v2515
  %2954 = vmatprep.subr.mxu0 0.0
  %2955 = vmatpush1.msra.mxu0 %v2516
  %2956 = vmatprep.subr.mxu0 0.0
  %2957 = vmatpush1.msra.mxu0 %v2517
  %2958 = vmatprep.subr.mxu0 0.0
  %2959 = vmatpush1.msra.mxu0 %v2518
  %2960 = vmatprep.subr.mxu0 0.0
  %2961 = vmatpush1.msra.mxu0 %v2519
  %2962 = vmatprep.subr.mxu0 0.0
  %2963 = vmatpush1.msra.mxu0 %v2520
  %2964 = vmatprep.subr.mxu0 0.0
  %2965 = vmatpush1.msra.mxu0 %v2521
  %2966 = vmatprep.subr.mxu0 0.0
  %2967 = vmatpush1.msra.mxu0 %v2522
  %2968 = vmatprep.subr.mxu0 0.0
  %2969 = vmatpush1.msra.mxu0 %v2523
  %2970 = vmatprep.subr.mxu0 0.0
  %2971 = vmatpush1.msra.mxu0 %v2524
  %2972 = vmatprep.subr.mxu0 0.0
  %2973 = vmatpush1.msra.mxu0 %v2525
  %2974 = vmatprep.subr.mxu0 0.0
  %2975 = vmatpush1.msra.mxu0 %v2526
  %2976 = vmatprep.subr.mxu0 0.0
  %2977 = vmatpush1.msra.mxu0 %v2527
  %2978 = vmatprep.subr.mxu0 0.0
  %2979 = vmatpush1.msra.mxu0 %v2528
  %2980 = vmatprep.subr.mxu0 0.0
  %2981 = vmatpush1.msra.mxu0 %v2529
  %2982 = vmatprep.subr.mxu0 0.0
  %2983 = vmatpush1.msra.mxu0 %v2530
  %2984 = vmatprep.subr.mxu0 0.0
  %2985 = vmatpush1.msra.mxu0 %v2531
  %2986 = vmatprep.subr.mxu0 0.0
  %2987 = vmatpush1.msra.mxu0 %v2532
  %2988 = vmatprep.subr.mxu0 0.0
  %2989 = vmatpush1.msra.mxu0 %v2533
  %2990 = vmatprep.subr.mxu0 0.0
  %2991 = vmatpush1.msra.mxu0 %v2534
  %2992 = vmatprep.subr.mxu0 0.0
  %2993 = vmatpush1.msra.mxu0 %v2535
  %2994 = vmatprep.subr.mxu0 0.0
  %2995 = vmatpush1.msra.mxu0 %v2536
  %2996 = vmatprep.subr.mxu0 0.0
  %2997 = vmatpush1.msra.mxu0 %v2537
  %2998 = vmatprep.subr.mxu0 0.0
  %2999 = vmatpush1.msra.mxu0 %v2538
  %3000 = vmatprep.subr.mxu0 0.0
  %3001 = vmatpush1.msra.mxu0 %v2539
  %3002 = vmatprep.subr.mxu0 0.0
  %3003 = vmatpush1.msra.mxu0 %v2540
  %3004 = vmatprep.subr.mxu0 0.0
  %3005 = vmatpush1.msra.mxu0 %v2541
  %3006 = vmatprep.subr.mxu0 0.0
  %3007 = vmatpush1.msra.mxu0 %v2542
  %3008 = vmatprep.mubr.f32.mxu0 %v2357
  %3009 = vmatmul.mubr.f32.gmra.mrb[0].mxu0 %v2356
  %v3010 = vpop.f32.mrb[0].mxu0
  %v3011 = vadd.f32 %v2936, %v3010
  %v3012 = vpop.f32.mrb[0].mxu0
  %3013 = vmatprep.mubr.f32.mxu0 %v2373
  %3014 = vmatmul.mubr.f32.gmra.mrb[0].mxu0 %v2372
  %v3015 = vpop.f32.mrb[0].mxu0
  %v3016 = vadd.f32 %v2941, %v3015
  %v3017 = vpop.f32.mrb[0].mxu0
  %3018 = vdwg.mxu0
  %3019 = vmatprep.subr.mxu0 0.0
  %3020 = vmatpush1.msra.mxu0 %v2543
  %3021 = vmatprep.subr.mxu0 0.0
  %3022 = vmatpush1.msra.mxu0 %v2544
  %3023 = vmatprep.subr.mxu0 0.0
  %3024 = vmatpush1.msra.mxu0 %v2545
  %3025 = vmatprep.subr.mxu0 0.0
  %3026 = vmatpush1.msra.mxu0 %v2546
  %3027 = vmatprep.subr.mxu0 0.0
  %3028 = vmatpush1.msra.mxu0 %v2547
  %3029 = vmatprep.subr.mxu0 0.0
  %3030 = vmatpush1.msra.mxu0 %v2548
  %3031 = vmatprep.subr.mxu0 0.0
  %3032 = vmatpush1.msra.mxu0 %v2549
  %3033 = vmatprep.subr.mxu0 0.0
  %3034 = vmatpush1.msra.mxu0 %v2550
  %3035 = vmatprep.subr.mxu0 0.0
  %3036 = vmatpush1.msra.mxu0 %v2551
  %3037 = vmatprep.subr.mxu0 0.0
  %3038 = vmatpush1.msra.mxu0 %v2552
  %3039 = vmatprep.subr.mxu0 0.0
  %3040 = vmatpush1.msra.mxu0 %v2553
  %3041 = vmatprep.subr.mxu0 0.0
  %3042 = vmatpush1.msra.mxu0 %v2554
  %3043 = vmatprep.subr.mxu0 0.0
  %3044 = vmatpush1.msra.mxu0 %v2555
  %3045 = vmatprep.subr.mxu0 0.0
  %3046 = vmatpush1.msra.mxu0 %v2556
  %3047 = vmatprep.subr.mxu0 0.0
  %3048 = vmatpush1.msra.mxu0 %v2557
  %3049 = vmatprep.subr.mxu0 0.0
  %3050 = vmatpush1.msra.mxu0 %v2558
  %3051 = vmatprep.subr.mxu0 0.0
  %3052 = vmatpush1.msra.mxu0 %v2559
  %3053 = vmatprep.subr.mxu0 0.0
  %3054 = vmatpush1.msra.mxu0 %v2560
  %3055 = vmatprep.subr.mxu0 0.0
  %3056 = vmatpush1.msra.mxu0 %v2561
  %3057 = vmatprep.subr.mxu0 0.0
  %3058 = vmatpush1.msra.mxu0 %v2562
  %3059 = vmatprep.subr.mxu0 0.0
  %3060 = vmatpush1.msra.mxu0 %v2563
  %3061 = vmatprep.subr.mxu0 0.0
  %3062 = vmatpush1.msra.mxu0 %v2564
  %3063 = vmatprep.subr.mxu0 0.0
  %3064 = vmatpush1.msra.mxu0 %v2565
  %3065 = vmatprep.subr.mxu0 0.0
  %3066 = vmatpush1.msra.mxu0 %v2566
  %3067 = vmatprep.subr.mxu0 0.0
  %3068 = vmatpush1.msra.mxu0 %v2567
  %3069 = vmatprep.subr.mxu0 0.0
  %3070 = vmatpush1.msra.mxu0 %v2568
  %3071 = vmatprep.subr.mxu0 0.0
  %3072 = vmatpush1.msra.mxu0 %v2569
  %3073 = vmatprep.subr.mxu0 0.0
  %3074 = vmatpush1.msra.mxu0 %v2570
  %3075 = vmatprep.subr.mxu0 0.0
  %3076 = vmatpush1.msra.mxu0 %v2571
  %3077 = vmatprep.subr.mxu0 0.0
  %3078 = vmatpush1.msra.mxu0 %v2572
  %3079 = vmatprep.subr.mxu0 0.0
  %3080 = vmatpush1.msra.mxu0 %v2573
  %3081 = vmatprep.subr.mxu0 0.0
  %3082 = vmatpush1.msra.mxu0 %v2574
  %3083 = vmatprep.mubr.f32.mxu0 %v2359
  %3084 = vmatmul.mubr.f32.gmra.mrb[0].mxu0 %v2358
  %v3085 = vpop.f32.mrb[0].mxu0
  %v3086 = vadd.f32 %v3011, %v3085
  %v3087 = vpop.f32.mrb[0].mxu0
  %3088 = vmatprep.mubr.f32.mxu0 %v2375
  %3089 = vmatmul.mubr.f32.gmra.mrb[0].mxu0 %v2374
  %v3090 = vpop.f32.mrb[0].mxu0
  %v3091 = vadd.f32 %v3016, %v3090
  %v3092 = vpop.f32.mrb[0].mxu0
  %3093 = vdwg.mxu0
  %3094 = vmatprep.subr.mxu0 0.0
  %3095 = vmatpush1.msra.mxu0 %v2575
  %3096 = vmatprep.subr.mxu0 0.0
  %3097 = vmatpush1.msra.mxu0 %v2576
  %3098 = vmatprep.subr.mxu0 0.0
  %3099 = vmatpush1.msra.mxu0 %v2577
  %3100 = vmatprep.subr.mxu0 0.0
  %3101 = vmatpush1.msra.mxu0 %v2578
  %3102 = vmatprep.subr.mxu0 0.0
  %3103 = vmatpush1.msra.mxu0 %v2579
  %3104 = vmatprep.subr.mxu0 0.0
  %3105 = vmatpush1.msra.mxu0 %v2580
  %3106 = vmatprep.subr.mxu0 0.0
  %3107 = vmatpush1.msra.mxu0 %v2581
  %3108 = vmatprep.subr.mxu0 0.0
  %3109 = vmatpush1.msra.mxu0 %v2582
  %3110 = vmatprep.subr.mxu0 0.0
  %3111 = vmatpush1.msra.mxu0 %v2583
  %3112 = vmatprep.subr.mxu0 0.0
  %3113 = vmatpush1.msra.mxu0 %v2584
  %3114 = vmatprep.subr.mxu0 0.0
  %3115 = vmatpush1.msra.mxu0 %v2585
  %3116 = vmatprep.subr.mxu0 0.0
  %3117 = vmatpush1.msra.mxu0 %v2586
  %3118 = vmatprep.subr.mxu0 0.0
  %3119 = vmatpush1.msra.mxu0 %v2587
  %3120 = vmatprep.subr.mxu0 0.0
  %3121 = vmatpush1.msra.mxu0 %v2588
  %3122 = vmatprep.subr.mxu0 0.0
  %3123 = vmatpush1.msra.mxu0 %v2589
  %3124 = vmatprep.subr.mxu0 0.0
  %3125 = vmatpush1.msra.mxu0 %v2590
  %3126 = vmatprep.subr.mxu0 0.0
  %3127 = vmatpush1.msra.mxu0 %v2591
  %3128 = vmatprep.subr.mxu0 0.0
  %3129 = vmatpush1.msra.mxu0 %v2592
  %3130 = vmatprep.subr.mxu0 0.0
  %3131 = vmatpush1.msra.mxu0 %v2593
  %3132 = vmatprep.subr.mxu0 0.0
  %3133 = vmatpush1.msra.mxu0 %v2594
  %3134 = vmatprep.subr.mxu0 0.0
  %3135 = vmatpush1.msra.mxu0 %v2595
  %3136 = vmatprep.subr.mxu0 0.0
  %3137 = vmatpush1.msra.mxu0 %v2596
  %3138 = vmatprep.subr.mxu0 0.0
  %3139 = vmatpush1.msra.mxu0 %v2597
  %3140 = vmatprep.subr.mxu0 0.0
  %3141 = vmatpush1.msra.mxu0 %v2598
  %3142 = vmatprep.subr.mxu0 0.0
  %3143 = vmatpush1.msra.mxu0 %v2599
  %3144 = vmatprep.subr.mxu0 0.0
  %3145 = vmatpush1.msra.mxu0 %v2600
  %3146 = vmatprep.subr.mxu0 0.0
  %3147 = vmatpush1.msra.mxu0 %v2601
  %3148 = vmatprep.subr.mxu0 0.0
  %3149 = vmatpush1.msra.mxu0 %v2602
  %3150 = vmatprep.subr.mxu0 0.0
  %3151 = vmatpush1.msra.mxu0 %v2603
  %3152 = vmatprep.subr.mxu0 0.0
  %3153 = vmatpush1.msra.mxu0 %v2604
  %3154 = vmatprep.subr.mxu0 0.0
  %3155 = vmatpush1.msra.mxu0 %v2605
  %3156 = vmatprep.subr.mxu0 0.0
  %3157 = vmatpush1.msra.mxu0 %v2606
  %3158 = vmatprep.mubr.f32.mxu0 %v2361
  %3159 = vmatmul.mubr.f32.gmra.mrb[0].mxu0 %v2360
  %v3160 = vpop.f32.mrb[0].mxu0
  %v3161 = vadd.f32 %v3086, %v3160
  %v3162 = vpop.f32.mrb[0].mxu0
  %3163 = vmatprep.mubr.f32.mxu0 %v2377
  %3164 = vmatmul.mubr.f32.gmra.mrb[0].mxu0 %v2376
  %v3165 = vpop.f32.mrb[0].mxu0
  %v3166 = vadd.f32 %v3091, %v3165
  %v3167 = vpop.f32.mrb[0].mxu0
  %3168 = vdwg.mxu0
  %3169 = vmatprep.subr.mxu0 0.0
  %3170 = vmatpush1.msra.mxu0 %v2607
  %3171 = vmatprep.subr.mxu0 0.0
  %3172 = vmatpush1.msra.mxu0 %v2608
  %3173 = vmatprep.subr.mxu0 0.0
  %3174 = vmatpush1.msra.mxu0 %v2609
  %3175 = vmatprep.subr.mxu0 0.0
  %3176 = vmatpush1.msra.mxu0 %v2610
  %3177 = vmatprep.subr.mxu0 0.0
  %3178 = vmatpush1.msra.mxu0 %v2611
  %3179 = vmatprep.subr.mxu0 0.0
  %3180 = vmatpush1.msra.mxu0 %v2612
  %3181 = vmatprep.subr.mxu0 0.0
  %3182 = vmatpush1.msra.mxu0 %v2613
  %3183 = vmatprep.subr.mxu0 0.0
  %3184 = vmatpush1.msra.mxu0 %v2614
  %3185 = vmatprep.subr.mxu0 0.0
  %3186 = vmatpush1.msra.mxu0 %v2615
  %3187 = vmatprep.subr.mxu0 0.0
  %3188 = vmatpush1.msra.mxu0 %v2616
  %3189 = vmatprep.subr.mxu0 0.0
  %3190 = vmatpush1.msra.mxu0 %v2617
  %3191 = vmatprep.subr.mxu0 0.0
  %3192 = vmatpush1.msra.mxu0 %v2618
  %3193 = vmatprep.subr.mxu0 0.0
  %3194 = vmatpush1.msra.mxu0 %v2619
  %3195 = vmatprep.subr.mxu0 0.0
  %3196 = vmatpush1.msra.mxu0 %v2620
  %3197 = vmatprep.subr.mxu0 0.0
  %3198 = vmatpush1.msra.mxu0 %v2621
  %3199 = vmatprep.subr.mxu0 0.0
  %3200 = vmatpush1.msra.mxu0 %v2622
  %3201 = vmatprep.subr.mxu0 0.0
  %3202 = vmatpush1.msra.mxu0 %v2623
  %3203 = vmatprep.subr.mxu0 0.0
  %3204 = vmatpush1.msra.mxu0 %v2624
  %3205 = vmatprep.subr.mxu0 0.0
  %3206 = vmatpush1.msra.mxu0 %v2625
  %3207 = vmatprep.subr.mxu0 0.0
  %3208 = vmatpush1.msra.mxu0 %v2626
  %3209 = vmatprep.subr.mxu0 0.0
  %3210 = vmatpush1.msra.mxu0 %v2627
  %3211 = vmatprep.subr.mxu0 0.0
  %3212 = vmatpush1.msra.mxu0 %v2628
  %3213 = vmatprep.subr.mxu0 0.0
  %3214 = vmatpush1.msra.mxu0 %v2629
  %3215 = vmatprep.subr.mxu0 0.0
  %3216 = vmatpush1.msra.mxu0 %v2630
  %3217 = vmatprep.subr.mxu0 0.0
  %3218 = vmatpush1.msra.mxu0 %v2631
  %3219 = vmatprep.subr.mxu0 0.0
  %3220 = vmatpush1.msra.mxu0 %v2632
  %3221 = vmatprep.subr.mxu0 0.0
  %3222 = vmatpush1.msra.mxu0 %v2633
  %3223 = vmatprep.subr.mxu0 0.0
  %3224 = vmatpush1.msra.mxu0 %v2634
  %3225 = vmatprep.subr.mxu0 0.0
  %3226 = vmatpush1.msra.mxu0 %v2635
  %3227 = vmatprep.subr.mxu0 0.0
  %3228 = vmatpush1.msra.mxu0 %v2636
  %3229 = vmatprep.subr.mxu0 0.0
  %3230 = vmatpush1.msra.mxu0 %v2637
  %3231 = vmatprep.subr.mxu0 0.0
  %3232 = vmatpush1.msra.mxu0 %v2638
  %3233 = vmatprep.mubr.f32.mxu0 %v2363
  %3234 = vmatmul.mubr.f32.gmra.mrb[0].mxu0 %v2362
  %v3235 = vpop.f32.mrb[0].mxu0
  %v3236 = vadd.f32 %v3161, %v3235
  %v3237 = vpop.f32.mrb[0].mxu0
  %3238 = vmatprep.mubr.f32.mxu0 %v2379
  %3239 = vmatmul.mubr.f32.gmra.mrb[0].mxu0 %v2378
  %v3240 = vpop.f32.mrb[0].mxu0
  %v3241 = vadd.f32 %v3166, %v3240
  %v3242 = vpop.f32.mrb[0].mxu0
  %3243 = vdwg.mxu0
  %v3244 = vadd.f32 %v1508, %v3236
  %v3245 = vadd.f32 %v1509, %v3241
  %v3246 = vsel %vm980, %v3244, 0.0
  %3247 = vadd.xlane.f32.xlu0 %v3246
  %v3248 = vpop.xlane.xlu0 %3247
  %v3249 = vsel %vm980, %v3245, 0.0
  %3250 = vadd.xlane.f32.xlu0 %v3249
  %v3251 = vpop.xlane.xlu0 %3250
  %v3252 = vmul.f32 %v3248, %v1475
  %v3253 = vmul.f32 %v3251, %v1475
  %v3254 = vsub.f32 %v3244, %v3252
  %v3255 = vsub.f32 %v3245, %v3253
  %v3256 = vmul.f32 %v3254, %v3254
  %v3257 = vmul.f32 %v3255, %v3255
  %v3258 = vsel %vm980, %v3256, 0.0
  %3259 = vadd.xlane.f32.xlu0 %v3258
  %v3260 = vpop.xlane.xlu0 %3259
  %v3261 = vsel %vm980, %v3257, 0.0
  %3262 = vadd.xlane.f32.xlu0 %v3261
  %v3263 = vpop.xlane.xlu0 %3262
  %v3264 = vmul.f32 %v3260, %v1475
  %v3265 = vmul.f32 %v3263, %v1475
  %v3266 = vadd.f32 %v3264, 1e-05
  %v3267 = vadd.f32 %v3265, 1e-05
  %v3268 = vrsqrt.pop %v3266
  %v3269 = vrsqrt.pop %v3267
  %v3270 = vmul.f32 %v3254, %v3268
  %v3271 = vmul.f32 %v3255, %v3269
  %v3272 = vld [vmem:[%s1 + $0x167] sm:$0x1]
  %v3273 = vlaneseq
  %v3274 = vshrl.u32 %v3273, 7
  %v3275 = vsub.s32 0, %v3274
  %v3276 = vrot.slane %v3272, %v3275
  %v3277 = vmul.f32 %v3270, %v3276
  %v3278 = vmul.f32 %v3271, %v3276
  %v3279 = vld [vmem:[%s1 + $0x168] sm:$0x1]
  %v3280 = vlaneseq
  %v3281 = vshrl.u32 %v3280, 7
  %v3282 = vsub.s32 0, %v3281
  %v3283 = vrot.slane %v3279, %v3282
  %v3284 = vadd.f32 %v3277, %v3283
  %v3285 = vadd.f32 %v3278, %v3283
  %v3286 = vsel %vm980, %v3284, 0.0
  %v3287 = vrot.slane %v3286, 4
  %v3288 = vadd.f32 %v3286, %v3287
  %v3289 = vrot.slane %v3288, 2
  %v3290 = vadd.f32 %v3288, %v3289
  %v3291 = vrot.slane %v3290, 1
  %v3292 = vadd.f32 %v3290, %v3291
  %v3293 = vsel %vm980, %v3285, 0.0
  %v3294 = vrot.slane %v3293, 4
  %v3295 = vadd.f32 %v3293, %v3294
  %v3296 = vrot.slane %v3295, 2
  %v3297 = vadd.f32 %v3295, %v3296
  %v3298 = vrot.slane %v3297, 1
  %v3299 = vadd.f32 %v3297, %v3298
  %vm3300 = vcmask 1040384
  %v3301 = vsel %vm3300, %v3292, %v3299
  %v3302 = vmul.f32 %v3301, 0.125
  %v3303 = vld [vmem:[%s1 + $0x169] sm:$0x1]
  %v3304 = vld [vmem:[%s1 + $0x16a] sm:$0x1]
  %v3305 = vlaneseq
  %v3306 = vshrl.u32 %v3305, 7
  %v3307 = vsub.s32 0, %v3306
  %v3308 = vrot.slane %v3303, %v3307
  %v3309 = vmul.f32 %v3302, %v3308
  %vm3310 = vcmask 517120
  %v3311 = vsel %vm3310, %v3309, 0.0
  %3312 = vadd.xlane.f32.xlu0 %v3311
  %v3313 = vpop.xlane.xlu0 %3312
  %v3314 = vlaneseq
  %v3315 = vshrl.u32 %v3314, 7
  %v3316 = vsub.s32 0, %v3315
  %v3317 = vrot.slane %v3304, %v3316
  %v3318 = vadd.f32 %v3313, %v3317
  %vm3319 = vcmask 1024
  %3320 = vst.msk [vmem:[%s5] sm:$0x3] %vm3319, %v3318
  // Predicated region
  $region82: #{value_model_forward.1} parent=0 // pred_check
    _
  $region83: #{value_model_forward.1} parent=0 // pred_check_branch
    %3322 = sbr.rel (0) target = $region85
  $region84: #{value_model_forward.1} parent=0 // pred_region
    _
  $region85: #{value_model_forward.1} parent=0 // pred_fallthru
    _
  // Predicated region
  $region86: #{value_model_forward.1} parent=0 // pred_check
    _
  $region87: #{value_model_forward.1} parent=0 // pred_check_branch
    %3324 = sbr.rel (0) target = $region89
  $region88: #{value_model_forward.1} parent=0 // pred_region
    _
  $region89: #{value_model_forward.1} parent=0 // pred_fallthru
    _
  %3325 = vsyncmov [#allocation4]
  %s3326 = vpop.sfrf %3325
  %p3327 = scmp.eq.s32.totalorder %s3326, 0
  %p3328 = pneg %p3327
  %3330 = shalt.err (%p3328)
  %s3331 = scalar_lea.sflag [#allocation4], 1
  %3332 = vsyncmov %s3331
  %s3333 = vpop.sfrf %3332
  %p3334 = scmp.eq.s32.totalorder %s3333, 0
  %p3335 = pneg %p3334
  %3337 = shalt.err (%p3335)

</llo_original>
